<compile_context>
chip_gen: v5e
topology: v5e:2x2
jax: 0.10.0
libtpu: 0.0.40
codegen_flags: <defaults>
</compile_context>

<pallas_src>
import math

import jax
import jax.numpy as jnp
from jax.experimental import pallas as pl
from jax.experimental.pallas import tpu as pltpu

_LANE = 128
_SUBLANE = 8


def _round_up(n, m):
    return ((n + m - 1) // m) * m


# ---------------------------------------------------------------------------
# Kernel
# ---------------------------------------------------------------------------
def _lstm_layer_kernel(x_ref, w_ih_ref, w_hh_ref, b_ref, o_ref, h_sc, c_sc, gx_sc):
    """One (batch_tile, time_chunk) grid point of a single LSTM layer."""
    Tc, tb, Ip = x_ref.shape
    Hp = h_sc.shape[1]
    ti = pl.program_id(1)

    @pl.when(ti == 0)
    def _():
        h_sc[...] = jnp.zeros_like(h_sc)
        c_sc[...] = jnp.zeros_like(c_sc)

    # ---- hoisted input projection: one big bf16 MXU matmul for the chunk ----
    x_chunk = x_ref[...].reshape(Tc * tb, Ip)                       # bf16
    gx = jnp.dot(x_chunk, w_ih_ref[...], preferred_element_type=jnp.float32)
    gx = gx + b_ref[...]                                            # fused bias, once
    gx_sc[...] = gx.reshape(Tc, tb, 4 * Hp)

    # ---- sequential recurrence over the chunk (fully unrolled) --------------
    def step(t, carry):
        h, c = carry
        gates = gx_sc[t] + jnp.dot(h.astype(w_hh_ref.dtype), w_hh_ref[...],
                                   preferred_element_type=jnp.float32)
        # gate layout [i | f | o | g]: one contiguous sigmoid slab + one tanh slab
        sig = 0.5 * (jnp.tanh(0.5 * gates[:, : 3 * Hp]) + 1.0)
        i_g = sig[:, 0 * Hp:1 * Hp]
        f_g = sig[:, 1 * Hp:2 * Hp]
        o_g = sig[:, 2 * Hp:3 * Hp]
        g_g = jnp.tanh(gates[:, 3 * Hp:])
        c = f_g * c + i_g * g_g
        h = o_g * jnp.tanh(c)
        o_ref[t] = h.astype(o_ref.dtype)
        return h, c

    h, c = jax.lax.fori_loop(0, Tc, step, (h_sc[...], c_sc[...]), unroll=True)
    h_sc[...] = h
    c_sc[...] = c


# ---------------------------------------------------------------------------
# Tiling heuristics
# ---------------------------------------------------------------------------
def _batch_tile(Bp):
    # Whole-batch tiles keep the recurrent matmul's M dim as large as possible.
    # Split only when the batch is large & cleanly tileable: tb=256 fills the
    # 256-wide MXU on v6e/v7x and gives the "parallel" axis >=2 tiles to shard
    # across v7x's 2 TensorCores; 128 suits v5e's 128-wide MXU.
    for tb in (256, 128):
        if Bp >= 2 * tb and Bp % tb == 0:
            return tb
    return Bp


def _time_chunk(T, tb, Hp):
    # Largest divisor of T up to 8, bounded so the f32 gate slab (Tc, tb, 4Hp)
    # held in VMEM scratch stays within ~4 MiB.
    budget = 4 << 20
    cap = max(1, min(8, budget // max(1, tb * 4 * Hp * 4)))
    best = 1
    for d in range(1, min(T, cap) + 1):
        if T % d == 0:
            best = d
    return best


# ---------------------------------------------------------------------------
# One layer wrapper
# ---------------------------------------------------------------------------
def lstm_layer_forward(x, w_ih_t, w_hh_t, b, *, out_dtype=None):
    """Single LSTM layer.  x: (T, Bp, Ip) lane-padded bf16 -> (T, Bp, Hp)."""
    T, Bp, Ip = x.shape
    Hp, four_hp = w_hh_t.shape
    assert four_hp == 4 * Hp
    assert w_ih_t.shape == (Ip, 4 * Hp)
    assert b.shape == (1, 4 * Hp)
    out_dtype = x.dtype if out_dtype is None else out_dtype

    tb = _batch_tile(Bp)
    nb = Bp // tb
    Tc = _time_chunk(T, tb, Hp)
    nT = T // Tc

    # VMEM budget: single-buffered weights + double-buffered x/out streams +
    # f32 state & gate-slab scratch, with 2x headroom, clamped to v7x's 64 MiB.
    isz = lambda dt: jnp.dtype(dt).itemsize
    weight_bytes = (w_ih_t.size * isz(w_ih_t.dtype)
                    + w_hh_t.size * isz(w_hh_t.dtype)
                    + b.size * isz(b.dtype))
    stream_bytes = 2 * Tc * tb * (Ip * isz(x.dtype) + Hp * isz(out_dtype))
    scratch_bytes = 2 * tb * Hp * 4 + Tc * tb * 4 * Hp * 4
    vmem_limit = int(min(max(2 * (weight_bytes + stream_bytes + scratch_bytes)
                             + (8 << 20), 32 << 20), 64 << 20))

    return pl.pallas_call(
        _lstm_layer_kernel,
        out_shape=jax.ShapeDtypeStruct((T, Bp, Hp), out_dtype),
        grid_spec=pltpu.PrefetchScalarGridSpec(
            num_scalar_prefetch=0,
            grid=(nb, nT),
            in_specs=[
                # One time chunk of one batch tile per grid point.
                pl.BlockSpec((Tc, tb, Ip), lambda bi, ti: (ti, bi, 0)),
                # Weights / bias: constant index map, single-buffered -> one
                # VMEM-resident copy for the whole kernel.
                pl.BlockSpec((Ip, 4 * Hp), lambda bi, ti: (0, 0),
                             pipeline_mode=pl.Buffered(1)),
                pl.BlockSpec((Hp, 4 * Hp), lambda bi, ti: (0, 0),
                             pipeline_mode=pl.Buffered(1)),
                pl.BlockSpec((1, 4 * Hp), lambda bi, ti: (0, 0),
                             pipeline_mode=pl.Buffered(1)),
            ],
            out_specs=pl.BlockSpec((Tc, tb, Hp), lambda bi, ti: (ti, bi, 0)),
            scratch_shapes=[
                pltpu.VMEM((tb, Hp), jnp.float32),           # h_t
                pltpu.VMEM((tb, Hp), jnp.float32),           # c_t
                pltpu.VMEM((Tc, tb, 4 * Hp), jnp.float32),   # hoisted input-proj gates
            ],
        ),
        compiler_params=pltpu.CompilerParams(
            dimension_semantics=("parallel", "arbitrary"),
            vmem_limit_bytes=vmem_limit,
        ),
    )(x, w_ih_t, w_hh_t, b)


# ---------------------------------------------------------------------------
# Parameter packing (PyTorch layout -> kernel layout)
# ---------------------------------------------------------------------------
def _pack_lstm_params(w_ih, w_hh, b_ih, b_hh):
    """PyTorch-layout params -> (w_ih_t, w_hh_t, bias) kernel layout.

    PyTorch: w_ih (4H, I), w_hh (4H, H), b_* (4H,), gate order [i, f, g, o].
    Kernel:  w_ih_t (Ip, 4Hp) bf16, w_hh_t (Hp, 4Hp) bf16, bias (1, 4Hp) f32,
             gate order [i, f, o, g], I/H zero-padded to 128 lanes.
    """
    four_h, in_sz = w_ih.shape
    H = four_h // 4
    Ip = _round_up(in_sz, _LANE)
    Hp = _round_up(H, _LANE)

    def reorder_pad(m, cols=None):
        i, f, g, o = jnp.split(m, 4, axis=0)
        out = []
        for blk in (i, f, o, g):                 # [i | f | o | g]
            pad = [(0, Hp - blk.shape[0])]
            if cols is not None:
                pad.append((0, cols - blk.shape[1]))
            out.append(jnp.pad(blk, pad))
        return jnp.concatenate(out, axis=0)

    w_ih_t = reorder_pad(w_ih, Ip).T.astype(jnp.bfloat16)               # (Ip, 4Hp)
    w_hh_t = reorder_pad(w_hh, Hp).T.astype(jnp.bfloat16)               # (Hp, 4Hp)
    bias = reorder_pad(b_ih + b_hh)[None, :].astype(jnp.float32)        # (1, 4Hp)
    return w_ih_t, w_hh_t, bias


# ---------------------------------------------------------------------------
# Module
# ---------------------------------------------------------------------------
class LSTM:
    """Pallas mirror of torchmore.layers.LSTM: returns outputs only (no state)."""
    # TODO(synk): bidirectional=True, dropout>0, bias=False, proj_size, and
    # caller-provided (h0, c0) initial states are not implemented.

    def __init__(self, input_size, hidden_size, num_layers=1, bias=True,
                 batch_first=False, dropout=0.0, bidirectional=False, *, key):
        assert bias, "bias=False not implemented"
        assert not bidirectional, "bidirectional not implemented"
        assert dropout == 0.0, "dropout not implemented"
        self.input_size = input_size
        self.hidden_size = hidden_size
        self.num_layers = num_layers
        self.batch_first = batch_first

        k = 1.0 / math.sqrt(hidden_size)
        self.pt_layers = []   # raw PyTorch-layout f32 params (reference)
        self.layers = []      # packed kernel params
        for layer in range(num_layers):
            in_sz = input_size if layer == 0 else hidden_size
            key, k1, k2, k3, k4 = jax.random.split(key, 5)
            w_ih = jax.random.uniform(k1, (4 * hidden_size, in_sz), jnp.float32, -k, k)
            w_hh = jax.random.uniform(k2, (4 * hidden_size, hidden_size), jnp.float32, -k, k)
            b_ih = jax.random.uniform(k3, (4 * hidden_size,), jnp.float32, -k, k)
            b_hh = jax.random.uniform(k4, (4 * hidden_size,), jnp.float32, -k, k)
            self.pt_layers.append((w_ih, w_hh, b_ih, b_hh))
            self.layers.append(_pack_lstm_params(w_ih, w_hh, b_ih, b_hh))

    def __call__(self, x):
        if self.batch_first:
            x = jnp.transpose(x, (1, 0, 2))
        out_dtype = x.dtype
        T, B, I = x.shape
        H = self.hidden_size
        Bp = _round_up(B, _SUBLANE)
        Ip0 = self.layers[0][0].shape[0]

        # Layer-0 input: zero-pad batch to a sublane multiple and features to a
        # lane multiple; stream in bf16 (halves HBM bytes, bf16 MXU operands).
        h = jnp.pad(x, ((0, 0), (0, Bp - B), (0, Ip0 - I))).astype(jnp.bfloat16)

        n = len(self.layers)
        for idx, (w_ih_t, w_hh_t, b) in enumerate(self.layers):
            layer_dtype = out_dtype if idx == n - 1 else jnp.bfloat16
            h = lstm_layer_forward(h, w_ih_t, w_hh_t, b, out_dtype=layer_dtype)

        y = h[:, :B, :H]                       # drop batch / hidden padding
        if self.batch_first:
            y = jnp.transpose(y, (1, 0, 2))
        return y                               # state discarded, = nn.LSTM(...)[0]


# ---------------------------------------------------------------------------
# Pure-JAX reference (f32, PyTorch gate order) and self-test
# ---------------------------------------------------------------------------
def _lstm_ref(x, pt_layers):
    def one_layer(x, w_ih, w_hh, b_ih, b_hh):
        T, B, _ = x.shape
        H = w_hh.shape[1]
        bias = b_ih + b_hh

        def step(carry, x_t):
            h, c = carry
            g = x_t @ w_ih.T + h @ w_hh.T + bias
            i = jax.nn.sigmoid(g[:, 0 * H:1 * H])
            f = jax.nn.sigmoid(g[:, 1 * H:2 * H])
            gg = jnp.tanh(g[:, 2 * H:3 * H])
            o = jax.nn.sigmoid(g[:, 3 * H:4 * H])
            c = f * c + i * gg
            h = o * jnp.tanh(c)
            return (h, c), h

        init = (jnp.zeros((B, H), jnp.float32), jnp.zeros((B, H), jnp.float32))
        _, ys = jax.lax.scan(step, init, x)
        return ys

    for params in pt_layers:
        x = one_layer(x, *params)
    return x


if __name__ == "__main__":
    key = jax.random.PRNGKey(0)
    k_w, k_w2, k_x = jax.random.split(key, 3)

    T, B, I, H = 16, 2, 32, 32  # (seq, batch, input_size, hidden_size)
    x = jax.random.normal(k_x, (T, B, I), dtype=jnp.float32)

    # Two stacked layers, seq-first (PyTorch default batch_first=False).
    # T=16 with T_CHUNK=8 exercises state carry across time chunks.
    mod = LSTM(I, H, num_layers=2, key=k_w)
    y = mod(x)
    jax.block_until_ready(y)
    assert y.shape == (T, B, H), y.shape
    assert y.dtype == x.dtype

    ref = _lstm_ref(x, mod.pt_layers)
    err = float(jnp.max(jnp.abs(y - ref)))
    assert err < 5e-2, f"max abs err {err}"   # bf16 matmul operands vs f32 ref

    # batch_first path.
    mod_bf = LSTM(I, H, num_layers=1, batch_first=True, key=k_w2)
    xb = jnp.transpose(x, (1, 0, 2))
    yb = mod_bf(xb)
    jax.block_until_ready(yb)
    assert yb.shape == (B, T, H), yb.shape
    ref_bf = jnp.transpose(_lstm_ref(x, mod_bf.pt_layers), (1, 0, 2))
    err_bf = float(jnp.max(jnp.abs(yb - ref_bf)))
    assert err_bf < 5e-2, f"max abs err {err_bf}"

    print("KERNEL_OK")
</pallas_src>

<mosaic_0001>
module attributes {stable_mosaic.version = 11 : i64} {
  func.func @_lstm_layer_kernel(%arg0: i32, %arg1: i32, %arg2: memref<8x8x128xbf16, #tpu.memory_space<vmem>>, %arg3: memref<128x512xbf16, #tpu.memory_space<vmem>>, %arg4: memref<128x512xbf16, #tpu.memory_space<vmem>>, %arg5: memref<1x512xf32, #tpu.memory_space<vmem>>, %arg6: memref<8x8x128xbf16, #tpu.memory_space<vmem>>, %arg7: memref<8x128xf32, #tpu.memory_space<vmem>>, %arg8: memref<8x128xf32, #tpu.memory_space<vmem>>, %arg9: memref<8x8x512xf32, #tpu.memory_space<vmem>>) attributes {dimension_semantics = [#tpu.dimension_semantics<parallel>, #tpu.dimension_semantics<arbitrary>], iteration_bounds = array<i64: 1, 2>, scalar_prefetch = 0 : i64, scratch_operands = 3 : i64, tpu.core_type = #tpu.core_type<tc>, window_params = [{transform_indices = @transform_0, window_bounds = array<i64: 8, 8, 128>}, {pipeline_mode = #tpu.pipeline_mode<synchronous>, transform_indices = @transform_1, window_bounds = array<i64: 128, 512>}, {pipeline_mode = #tpu.pipeline_mode<synchronous>, transform_indices = @transform_2, window_bounds = array<i64: 128, 512>}, {pipeline_mode = #tpu.pipeline_mode<synchronous>, transform_indices = @transform_3, window_bounds = array<i64: 1, 512>}, {transform_indices = @transform_4, window_bounds = array<i64: 8, 8, 128>}]} {
    %c0_i32 = arith.constant 0 : i32
    %0 = arith.cmpi eq, %arg1, %c0_i32 : i32
    %1 = arith.extui %0 : i1 to i32
    %c0_i32_0 = arith.constant 0 : i32
    %2 = arith.cmpi ne, %1, %c0_i32_0 : i32
    scf.if %2 {
      %cst_99 = arith.constant 0.000000e+00 : f32
      %256 = vector.broadcast %cst_99 : f32 to vector<8x128xf32>
      %c0_100 = arith.constant 0 : index
      %c0_101 = arith.constant 0 : index
      %257 = vector.load %arg7[%c0_100, %c0_101] : memref<8x128xf32, #tpu.memory_space<vmem>>, vector<8x128xf32>
      tpu.vector_store %arg7[%c0_100, %c0_101], %256 {strides = array<i32>} : memref<8x128xf32, #tpu.memory_space<vmem>>, vector<8x128xf32>,
      %cst_102 = arith.constant 0.000000e+00 : f32
      %258 = vector.broadcast %cst_102 : f32 to vector<8x128xf32>
      %c0_103 = arith.constant 0 : index
      %c0_104 = arith.constant 0 : index
      %259 = vector.load %arg8[%c0_103, %c0_104] : memref<8x128xf32, #tpu.memory_space<vmem>>, vector<8x128xf32>
      tpu.vector_store %arg8[%c0_103, %c0_104], %258 {strides = array<i32>} : memref<8x128xf32, #tpu.memory_space<vmem>>, vector<8x128xf32>,
    } else {
    }
    %c0 = arith.constant 0 : index
    %c0_1 = arith.constant 0 : index
    %c0_2 = arith.constant 0 : index
    %3 = vector.load %arg2[%c0, %c0_1, %c0_2] : memref<8x8x128xbf16, #tpu.memory_space<vmem>>, vector<8x8x128xbf16>
    %4 = vector.shape_cast %3 : vector<8x8x128xbf16> to vector<64x128xbf16>
    %c0_3 = arith.constant 0 : index
    %c0_4 = arith.constant 0 : index
    %5 = vector.load %arg3[%c0_3, %c0_4] : memref<128x512xbf16, #tpu.memory_space<vmem>>, vector<128x512xbf16>
    %cst = arith.constant dense<0.000000e+00> : vector<64x512xf32>
    %6 = tpu.matmul %4, %5, %cst {dimension_numbers = #tpu.dot_dimension_numbers<[1], [0], [0], [1], [0, 0, 1, 1], [], []>} : vector<64x128xbf16>, vector<128x512xbf16>, vector<64x512xf32> -> vector<64x512xf32>
    %c0_5 = arith.constant 0 : index
    %c0_6 = arith.constant 0 : index
    %7 = vector.load %arg5[%c0_5, %c0_6] : memref<1x512xf32, #tpu.memory_space<vmem>>, vector<1x512xf32>
    %8 = vector.broadcast %7 : vector<1x512xf32> to vector<64x512xf32>
    %9 = arith.addf %6, %8 : vector<64x512xf32>
    %10 = vector.shape_cast %9 : vector<64x512xf32> to vector<8x8x512xf32>
    %c0_7 = arith.constant 0 : index
    %c0_8 = arith.constant 0 : index
    %c0_9 = arith.constant 0 : index
    %11 = vector.load %arg9[%c0_7, %c0_8, %c0_9] : memref<8x8x512xf32, #tpu.memory_space<vmem>>, vector<8x8x512xf32>
    tpu.vector_store %arg9[%c0_7, %c0_8, %c0_9], %10 {strides = array<i32>} : memref<8x8x512xf32, #tpu.memory_space<vmem>>, vector<8x8x512xf32>,
    %c0_10 = arith.constant 0 : index
    %c0_11 = arith.constant 0 : index
    %12 = vector.load %arg7[%c0_10, %c0_11] : memref<8x128xf32, #tpu.memory_space<vmem>>, vector<8x128xf32>
    %c0_12 = arith.constant 0 : index
    %c0_13 = arith.constant 0 : index
    %13 = vector.load %arg8[%c0_12, %c0_13] : memref<8x128xf32, #tpu.memory_space<vmem>>, vector<8x128xf32>
    %c0_i32_14 = arith.constant 0 : i32
    %14 = arith.index_cast %c0_i32_14 : i32 to index
    %c0_15 = arith.constant 0 : index
    %c0_16 = arith.constant 0 : index
    %15 = vector.load %arg9[%14, %c0_15, %c0_16] : memref<8x8x512xf32, #tpu.memory_space<vmem>>, vector<1x8x512xf32>
    %16 = vector.shape_cast %15 : vector<1x8x512xf32> to vector<8x512xf32>
    %17 = arith.truncf %12 : vector<8x128xf32> to vector<8x128xbf16>
    %c0_17 = arith.constant 0 : index
    %c0_18 = arith.constant 0 : index
    %18 = vector.load %arg4[%c0_17, %c0_18] : memref<128x512xbf16, #tpu.memory_space<vmem>>, vector<128x512xbf16>
    %cst_19 = arith.constant dense<0.000000e+00> : vector<8x512xf32>
    %19 = tpu.matmul %17, %18, %cst_19 {dimension_numbers = #tpu.dot_dimension_numbers<[1], [0], [0], [1], [0, 0, 1, 1], [], []>} : vector<8x128xbf16>, vector<128x512xbf16>, vector<8x512xf32> -> vector<8x512xf32>
    %20 = arith.addf %16, %19 : vector<8x512xf32>
    %21 = vector.extract_strided_slice %20 {offsets = [0, 0], sizes = [8, 384], strides = [1, 1]} : vector<8x512xf32> to vector<8x384xf32>
    %cst_20 = arith.constant 5.000000e-01 : f32
    %22 = vector.broadcast %cst_20 : f32 to vector<8x384xf32>
    %23 = arith.mulf %22, %21 : vector<8x384xf32>
    %24 = math.tanh %23 : vector<8x384xf32>
    %cst_21 = arith.constant 1.000000e+00 : f32
    %25 = vector.broadcast %cst_21 : f32 to vector<8x384xf32>
    %26 = arith.addf %24, %25 : vector<8x384xf32>
    %cst_22 = arith.constant 5.000000e-01 : f32
    %27 = vector.broadcast %cst_22 : f32 to vector<8x384xf32>
    %28 = arith.mulf %27, %26 : vector<8x384xf32>
    %29 = vector.extract_strided_slice %28 {offsets = [0, 0], sizes = [8, 128], strides = [1, 1]} : vector<8x384xf32> to vector<8x128xf32>
    %30 = vector.extract_strided_slice %28 {offsets = [0, 128], sizes = [8, 128], strides = [1, 1]} : vector<8x384xf32> to vector<8x128xf32>
    %31 = vector.extract_strided_slice %28 {offsets = [0, 256], sizes = [8, 128], strides = [1, 1]} : vector<8x384xf32> to vector<8x128xf32>
    %32 = vector.extract_strided_slice %20 {offsets = [0, 384], sizes = [8, 128], strides = [1, 1]} : vector<8x512xf32> to vector<8x128xf32>
    %33 = math.tanh %32 : vector<8x128xf32>
    %34 = arith.mulf %30, %13 : vector<8x128xf32>
    %35 = arith.mulf %29, %33 : vector<8x128xf32>
    %36 = arith.addf %34, %35 : vector<8x128xf32>
    %37 = math.tanh %36 : vector<8x128xf32>
    %38 = arith.mulf %31, %37 : vector<8x128xf32>
    %39 = arith.truncf %38 : vector<8x128xf32> to vector<8x128xbf16>
    %40 = arith.index_cast %c0_i32_14 : i32 to index
    %c0_23 = arith.constant 0 : index
    %c0_24 = arith.constant 0 : index
    %41 = vector.load %arg6[%40, %c0_23, %c0_24] : memref<8x8x128xbf16, #tpu.memory_space<vmem>>, vector<1x8x128xbf16>
    %42 = vector.shape_cast %41 : vector<1x8x128xbf16> to vector<8x128xbf16>
    %43 = vector.shape_cast %39 : vector<8x128xbf16> to vector<1x8x128xbf16>
    tpu.vector_store %arg6[%40, %c0_23, %c0_24], %43 {strides = array<i32>} : memref<8x8x128xbf16, #tpu.memory_space<vmem>>, vector<1x8x128xbf16>,
    %c1_i32 = arith.constant 1 : i32
    %44 = arith.index_cast %c1_i32 : i32 to index
    %c0_25 = arith.constant 0 : index
    %c0_26 = arith.constant 0 : index
    %45 = vector.load %arg9[%44, %c0_25, %c0_26] : memref<8x8x512xf32, #tpu.memory_space<vmem>>, vector<1x8x512xf32>
    %46 = vector.shape_cast %45 : vector<1x8x512xf32> to vector<8x512xf32>
    %47 = arith.truncf %38 : vector<8x128xf32> to vector<8x128xbf16>
    %c0_27 = arith.constant 0 : index
    %c0_28 = arith.constant 0 : index
    %48 = vector.load %arg4[%c0_27, %c0_28] : memref<128x512xbf16, #tpu.memory_space<vmem>>, vector<128x512xbf16>
    %cst_29 = arith.constant dense<0.000000e+00> : vector<8x512xf32>
    %49 = tpu.matmul %47, %48, %cst_29 {dimension_numbers = #tpu.dot_dimension_numbers<[1], [0], [0], [1], [0, 0, 1, 1], [], []>} : vector<8x128xbf16>, vector<128x512xbf16>, vector<8x512xf32> -> vector<8x512xf32>
    %50 = arith.addf %46, %49 : vector<8x512xf32>
    %51 = vector.extract_strided_slice %50 {offsets = [0, 0], sizes = [8, 384], strides = [1, 1]} : vector<8x512xf32> to vector<8x384xf32>
    %cst_30 = arith.constant 5.000000e-01 : f32
    %52 = vector.broadcast %cst_30 : f32 to vector<8x384xf32>
    %53 = arith.mulf %52, %51 : vector<8x384xf32>
    %54 = math.tanh %53 : vector<8x384xf32>
    %cst_31 = arith.constant 1.000000e+00 : f32
    %55 = vector.broadcast %cst_31 : f32 to vector<8x384xf32>
    %56 = arith.addf %54, %55 : vector<8x384xf32>
    %cst_32 = arith.constant 5.000000e-01 : f32
    %57 = vector.broadcast %cst_32 : f32 to vector<8x384xf32>
    %58 = arith.mulf %57, %56 : vector<8x384xf32>
    %59 = vector.extract_strided_slice %58 {offsets = [0, 0], sizes = [8, 128], strides = [1, 1]} : vector<8x384xf32> to vector<8x128xf32>
    %60 = vector.extract_strided_slice %58 {offsets = [0, 128], sizes = [8, 128], strides = [1, 1]} : vector<8x384xf32> to vector<8x128xf32>
    %61 = vector.extract_strided_slice %58 {offsets = [0, 256], sizes = [8, 128], strides = [1, 1]} : vector<8x384xf32> to vector<8x128xf32>
    %62 = vector.extract_strided_slice %50 {offsets = [0, 384], sizes = [8, 128], strides = [1, 1]} : vector<8x512xf32> to vector<8x128xf32>
    %63 = math.tanh %62 : vector<8x128xf32>
    %64 = arith.mulf %60, %36 : vector<8x128xf32>
    %65 = arith.mulf %59, %63 : vector<8x128xf32>
    %66 = arith.addf %64, %65 : vector<8x128xf32>
    %67 = math.tanh %66 : vector<8x128xf32>
    %68 = arith.mulf %61, %67 : vector<8x128xf32>
    %69 = arith.truncf %68 : vector<8x128xf32> to vector<8x128xbf16>
    %70 = arith.index_cast %c1_i32 : i32 to index
    %c0_33 = arith.constant 0 : index
    %c0_34 = arith.constant 0 : index
    %71 = vector.load %arg6[%70, %c0_33, %c0_34] : memref<8x8x128xbf16, #tpu.memory_space<vmem>>, vector<1x8x128xbf16>
    %72 = vector.shape_cast %71 : vector<1x8x128xbf16> to vector<8x128xbf16>
    %73 = vector.shape_cast %69 : vector<8x128xbf16> to vector<1x8x128xbf16>
    tpu.vector_store %arg6[%70, %c0_33, %c0_34], %73 {strides = array<i32>} : memref<8x8x128xbf16, #tpu.memory_space<vmem>>, vector<1x8x128xbf16>,
    %c2_i32 = arith.constant 2 : i32
    %74 = arith.index_cast %c2_i32 : i32 to index
    %c0_35 = arith.constant 0 : index
    %c0_36 = arith.constant 0 : index
    %75 = vector.load %arg9[%74, %c0_35, %c0_36] : memref<8x8x512xf32, #tpu.memory_space<vmem>>, vector<1x8x512xf32>
    %76 = vector.shape_cast %75 : vector<1x8x512xf32> to vector<8x512xf32>
    %77 = arith.truncf %68 : vector<8x128xf32> to vector<8x128xbf16>
    %c0_37 = arith.constant 0 : index
    %c0_38 = arith.constant 0 : index
    %78 = vector.load %arg4[%c0_37, %c0_38] : memref<128x512xbf16, #tpu.memory_space<vmem>>, vector<128x512xbf16>
    %cst_39 = arith.constant dense<0.000000e+00> : vector<8x512xf32>
    %79 = tpu.matmul %77, %78, %cst_39 {dimension_numbers = #tpu.dot_dimension_numbers<[1], [0], [0], [1], [0, 0, 1, 1], [], []>} : vector<8x128xbf16>, vector<128x512xbf16>, vector<8x512xf32> -> vector<8x512xf32>
    %80 = arith.addf %76, %79 : vector<8x512xf32>
    %81 = vector.extract_strided_slice %80 {offsets = [0, 0], sizes = [8, 384], strides = [1, 1]} : vector<8x512xf32> to vector<8x384xf32>
    %cst_40 = arith.constant 5.000000e-01 : f32
    %82 = vector.broadcast %cst_40 : f32 to vector<8x384xf32>
    %83 = arith.mulf %82, %81 : vector<8x384xf32>
    %84 = math.tanh %83 : vector<8x384xf32>
    %cst_41 = arith.constant 1.000000e+00 : f32
    %85 = vector.broadcast %cst_41 : f32 to vector<8x384xf32>
    %86 = arith.addf %84, %85 : vector<8x384xf32>
    %cst_42 = arith.constant 5.000000e-01 : f32
    %87 = vector.broadcast %cst_42 : f32 to vector<8x384xf32>
    %88 = arith.mulf %87, %86 : vector<8x384xf32>
    %89 = vector.extract_strided_slice %88 {offsets = [0, 0], sizes = [8, 128], strides = [1, 1]} : vector<8x384xf32> to vector<8x128xf32>
    %90 = vector.extract_strided_slice %88 {offsets = [0, 128], sizes = [8, 128], strides = [1, 1]} : vector<8x384xf32> to vector<8x128xf32>
    %91 = vector.extract_strided_slice %88 {offsets = [0, 256], sizes = [8, 128], strides = [1, 1]} : vector<8x384xf32> to vector<8x128xf32>
    %92 = vector.extract_strided_slice %80 {offsets = [0, 384], sizes = [8, 128], strides = [1, 1]} : vector<8x512xf32> to vector<8x128xf32>
    %93 = math.tanh %92 : vector<8x128xf32>
    %94 = arith.mulf %90, %66 : vector<8x128xf32>
    %95 = arith.mulf %89, %93 : vector<8x128xf32>
    %96 = arith.addf %94, %95 : vector<8x128xf32>
    %97 = math.tanh %96 : vector<8x128xf32>
    %98 = arith.mulf %91, %97 : vector<8x128xf32>
    %99 = arith.truncf %98 : vector<8x128xf32> to vector<8x128xbf16>
    %100 = arith.index_cast %c2_i32 : i32 to index
    %c0_43 = arith.constant 0 : index
    %c0_44 = arith.constant 0 : index
    %101 = vector.load %arg6[%100, %c0_43, %c0_44] : memref<8x8x128xbf16, #tpu.memory_space<vmem>>, vector<1x8x128xbf16>
    %102 = vector.shape_cast %101 : vector<1x8x128xbf16> to vector<8x128xbf16>
    %103 = vector.shape_cast %99 : vector<8x128xbf16> to vector<1x8x128xbf16>
    tpu.vector_store %arg6[%100, %c0_43, %c0_44], %103 {strides = array<i32>} : memref<8x8x128xbf16, #tpu.memory_space<vmem>>, vector<1x8x128xbf16>,
    %c3_i32 = arith.constant 3 : i32
    %104 = arith.index_cast %c3_i32 : i32 to index
    %c0_45 = arith.constant 0 : index
    %c0_46 = arith.constant 0 : index
    %105 = vector.load %arg9[%104, %c0_45, %c0_46] : memref<8x8x512xf32, #tpu.memory_space<vmem>>, vector<1x8x512xf32>
    %106 = vector.shape_cast %105 : vector<1x8x512xf32> to vector<8x512xf32>
    %107 = arith.truncf %98 : vector<8x128xf32> to vector<8x128xbf16>
    %c0_47 = arith.constant 0 : index
    %c0_48 = arith.constant 0 : index
    %108 = vector.load %arg4[%c0_47, %c0_48] : memref<128x512xbf16, #tpu.memory_space<vmem>>, vector<128x512xbf16>
    %cst_49 = arith.constant dense<0.000000e+00> : vector<8x512xf32>
    %109 = tpu.matmul %107, %108, %cst_49 {dimension_numbers = #tpu.dot_dimension_numbers<[1], [0], [0], [1], [0, 0, 1, 1], [], []>} : vector<8x128xbf16>, vector<128x512xbf16>, vector<8x512xf32> -> vector<8x512xf32>
    %110 = arith.addf %106, %109 : vector<8x512xf32>
    %111 = vector.extract_strided_slice %110 {offsets = [0, 0], sizes = [8, 384], strides = [1, 1]} : vector<8x512xf32> to vector<8x384xf32>
    %cst_50 = arith.constant 5.000000e-01 : f32
    %112 = vector.broadcast %cst_50 : f32 to vector<8x384xf32>
    %113 = arith.mulf %112, %111 : vector<8x384xf32>
    %114 = math.tanh %113 : vector<8x384xf32>
    %cst_51 = arith.constant 1.000000e+00 : f32
    %115 = vector.broadcast %cst_51 : f32 to vector<8x384xf32>
    %116 = arith.addf %114, %115 : vector<8x384xf32>
    %cst_52 = arith.constant 5.000000e-01 : f32
    %117 = vector.broadcast %cst_52 : f32 to vector<8x384xf32>
    %118 = arith.mulf %117, %116 : vector<8x384xf32>
    %119 = vector.extract_strided_slice %118 {offsets = [0, 0], sizes = [8, 128], strides = [1, 1]} : vector<8x384xf32> to vector<8x128xf32>
    %120 = vector.extract_strided_slice %118 {offsets = [0, 128], sizes = [8, 128], strides = [1, 1]} : vector<8x384xf32> to vector<8x128xf32>
    %121 = vector.extract_strided_slice %118 {offsets = [0, 256], sizes = [8, 128], strides = [1, 1]} : vector<8x384xf32> to vector<8x128xf32>
    %122 = vector.extract_strided_slice %110 {offsets = [0, 384], sizes = [8, 128], strides = [1, 1]} : vector<8x512xf32> to vector<8x128xf32>
    %123 = math.tanh %122 : vector<8x128xf32>
    %124 = arith.mulf %120, %96 : vector<8x128xf32>
    %125 = arith.mulf %119, %123 : vector<8x128xf32>
    %126 = arith.addf %124, %125 : vector<8x128xf32>
    %127 = math.tanh %126 : vector<8x128xf32>
    %128 = arith.mulf %121, %127 : vector<8x128xf32>
    %129 = arith.truncf %128 : vector<8x128xf32> to vector<8x128xbf16>
    %130 = arith.index_cast %c3_i32 : i32 to index
    %c0_53 = arith.constant 0 : index
    %c0_54 = arith.constant 0 : index
    %131 = vector.load %arg6[%130, %c0_53, %c0_54] : memref<8x8x128xbf16, #tpu.memory_space<vmem>>, vector<1x8x128xbf16>
    %132 = vector.shape_cast %131 : vector<1x8x128xbf16> to vector<8x128xbf16>
    %133 = vector.shape_cast %129 : vector<8x128xbf16> to vector<1x8x128xbf16>
    tpu.vector_store %arg6[%130, %c0_53, %c0_54], %133 {strides = array<i32>} : memref<8x8x128xbf16, #tpu.memory_space<vmem>>, vector<1x8x128xbf16>,
    %c4_i32 = arith.constant 4 : i32
    %134 = arith.index_cast %c4_i32 : i32 to index
    %c0_55 = arith.constant 0 : index
    %c0_56 = arith.constant 0 : index
    %135 = vector.load %arg9[%134, %c0_55, %c0_56] : memref<8x8x512xf32, #tpu.memory_space<vmem>>, vector<1x8x512xf32>
    %136 = vector.shape_cast %135 : vector<1x8x512xf32> to vector<8x512xf32>
    %137 = arith.truncf %128 : vector<8x128xf32> to vector<8x128xbf16>
    %c0_57 = arith.constant 0 : index
    %c0_58 = arith.constant 0 : index
    %138 = vector.load %arg4[%c0_57, %c0_58] : memref<128x512xbf16, #tpu.memory_space<vmem>>, vector<128x512xbf16>
    %cst_59 = arith.constant dense<0.000000e+00> : vector<8x512xf32>
    %139 = tpu.matmul %137, %138, %cst_59 {dimension_numbers = #tpu.dot_dimension_numbers<[1], [0], [0], [1], [0, 0, 1, 1], [], []>} : vector<8x128xbf16>, vector<128x512xbf16>, vector<8x512xf32> -> vector<8x512xf32>
    %140 = arith.addf %136, %139 : vector<8x512xf32>
    %141 = vector.extract_strided_slice %140 {offsets = [0, 0], sizes = [8, 384], strides = [1, 1]} : vector<8x512xf32> to vector<8x384xf32>
    %cst_60 = arith.constant 5.000000e-01 : f32
    %142 = vector.broadcast %cst_60 : f32 to vector<8x384xf32>
    %143 = arith.mulf %142, %141 : vector<8x384xf32>
    %144 = math.tanh %143 : vector<8x384xf32>
    %cst_61 = arith.constant 1.000000e+00 : f32
    %145 = vector.broadcast %cst_61 : f32 to vector<8x384xf32>
    %146 = arith.addf %144, %145 : vector<8x384xf32>
    %cst_62 = arith.constant 5.000000e-01 : f32
    %147 = vector.broadcast %cst_62 : f32 to vector<8x384xf32>
    %148 = arith.mulf %147, %146 : vector<8x384xf32>
    %149 = vector.extract_strided_slice %148 {offsets = [0, 0], sizes = [8, 128], strides = [1, 1]} : vector<8x384xf32> to vector<8x128xf32>
    %150 = vector.extract_strided_slice %148 {offsets = [0, 128], sizes = [8, 128], strides = [1, 1]} : vector<8x384xf32> to vector<8x128xf32>
    %151 = vector.extract_strided_slice %148 {offsets = [0, 256], sizes = [8, 128], strides = [1, 1]} : vector<8x384xf32> to vector<8x128xf32>
    %152 = vector.extract_strided_slice %140 {offsets = [0, 384], sizes = [8, 128], strides = [1, 1]} : vector<8x512xf32> to vector<8x128xf32>
    %153 = math.tanh %152 : vector<8x128xf32>
    %154 = arith.mulf %150, %126 : vector<8x128xf32>
    %155 = arith.mulf %149, %153 : vector<8x128xf32>
    %156 = arith.addf %154, %155 : vector<8x128xf32>
    %157 = math.tanh %156 : vector<8x128xf32>
    %158 = arith.mulf %151, %157 : vector<8x128xf32>
    %159 = arith.truncf %158 : vector<8x128xf32> to vector<8x128xbf16>
    %160 = arith.index_cast %c4_i32 : i32 to index
    %c0_63 = arith.constant 0 : index
    %c0_64 = arith.constant 0 : index
    %161 = vector.load %arg6[%160, %c0_63, %c0_64] : memref<8x8x128xbf16, #tpu.memory_space<vmem>>, vector<1x8x128xbf16>
    %162 = vector.shape_cast %161 : vector<1x8x128xbf16> to vector<8x128xbf16>
    %163 = vector.shape_cast %159 : vector<8x128xbf16> to vector<1x8x128xbf16>
    tpu.vector_store %arg6[%160, %c0_63, %c0_64], %163 {strides = array<i32>} : memref<8x8x128xbf16, #tpu.memory_space<vmem>>, vector<1x8x128xbf16>,
    %c5_i32 = arith.constant 5 : i32
    %164 = arith.index_cast %c5_i32 : i32 to index
    %c0_65 = arith.constant 0 : index
    %c0_66 = arith.constant 0 : index
    %165 = vector.load %arg9[%164, %c0_65, %c0_66] : memref<8x8x512xf32, #tpu.memory_space<vmem>>, vector<1x8x512xf32>
    %166 = vector.shape_cast %165 : vector<1x8x512xf32> to vector<8x512xf32>
    %167 = arith.truncf %158 : vector<8x128xf32> to vector<8x128xbf16>
    %c0_67 = arith.constant 0 : index
    %c0_68 = arith.constant 0 : index
    %168 = vector.load %arg4[%c0_67, %c0_68] : memref<128x512xbf16, #tpu.memory_space<vmem>>, vector<128x512xbf16>
    %cst_69 = arith.constant dense<0.000000e+00> : vector<8x512xf32>
    %169 = tpu.matmul %167, %168, %cst_69 {dimension_numbers = #tpu.dot_dimension_numbers<[1], [0], [0], [1], [0, 0, 1, 1], [], []>} : vector<8x128xbf16>, vector<128x512xbf16>, vector<8x512xf32> -> vector<8x512xf32>
    %170 = arith.addf %166, %169 : vector<8x512xf32>
    %171 = vector.extract_strided_slice %170 {offsets = [0, 0], sizes = [8, 384], strides = [1, 1]} : vector<8x512xf32> to vector<8x384xf32>
    %cst_70 = arith.constant 5.000000e-01 : f32
    %172 = vector.broadcast %cst_70 : f32 to vector<8x384xf32>
    %173 = arith.mulf %172, %171 : vector<8x384xf32>
    %174 = math.tanh %173 : vector<8x384xf32>
    %cst_71 = arith.constant 1.000000e+00 : f32
    %175 = vector.broadcast %cst_71 : f32 to vector<8x384xf32>
    %176 = arith.addf %174, %175 : vector<8x384xf32>
    %cst_72 = arith.constant 5.000000e-01 : f32
    %177 = vector.broadcast %cst_72 : f32 to vector<8x384xf32>
    %178 = arith.mulf %177, %176 : vector<8x384xf32>
    %179 = vector.extract_strided_slice %178 {offsets = [0, 0], sizes = [8, 128], strides = [1, 1]} : vector<8x384xf32> to vector<8x128xf32>
    %180 = vector.extract_strided_slice %178 {offsets = [0, 128], sizes = [8, 128], strides = [1, 1]} : vector<8x384xf32> to vector<8x128xf32>
    %181 = vector.extract_strided_slice %178 {offsets = [0, 256], sizes = [8, 128], strides = [1, 1]} : vector<8x384xf32> to vector<8x128xf32>
    %182 = vector.extract_strided_slice %170 {offsets = [0, 384], sizes = [8, 128], strides = [1, 1]} : vector<8x512xf32> to vector<8x128xf32>
    %183 = math.tanh %182 : vector<8x128xf32>
    %184 = arith.mulf %180, %156 : vector<8x128xf32>
    %185 = arith.mulf %179, %183 : vector<8x128xf32>
    %186 = arith.addf %184, %185 : vector<8x128xf32>
    %187 = math.tanh %186 : vector<8x128xf32>
    %188 = arith.mulf %181, %187 : vector<8x128xf32>
    %189 = arith.truncf %188 : vector<8x128xf32> to vector<8x128xbf16>
    %190 = arith.index_cast %c5_i32 : i32 to index
    %c0_73 = arith.constant 0 : index
    %c0_74 = arith.constant 0 : index
    %191 = vector.load %arg6[%190, %c0_73, %c0_74] : memref<8x8x128xbf16, #tpu.memory_space<vmem>>, vector<1x8x128xbf16>
    %192 = vector.shape_cast %191 : vector<1x8x128xbf16> to vector<8x128xbf16>
    %193 = vector.shape_cast %189 : vector<8x128xbf16> to vector<1x8x128xbf16>
    tpu.vector_store %arg6[%190, %c0_73, %c0_74], %193 {strides = array<i32>} : memref<8x8x128xbf16, #tpu.memory_space<vmem>>, vector<1x8x128xbf16>,
    %c6_i32 = arith.constant 6 : i32
    %194 = arith.index_cast %c6_i32 : i32 to index
    %c0_75 = arith.constant 0 : index
    %c0_76 = arith.constant 0 : index
    %195 = vector.load %arg9[%194, %c0_75, %c0_76] : memref<8x8x512xf32, #tpu.memory_space<vmem>>, vector<1x8x512xf32>
    %196 = vector.shape_cast %195 : vector<1x8x512xf32> to vector<8x512xf32>
    %197 = arith.truncf %188 : vector<8x128xf32> to vector<8x128xbf16>
    %c0_77 = arith.constant 0 : index
    %c0_78 = arith.constant 0 : index
    %198 = vector.load %arg4[%c0_77, %c0_78] : memref<128x512xbf16, #tpu.memory_space<vmem>>, vector<128x512xbf16>
    %cst_79 = arith.constant dense<0.000000e+00> : vector<8x512xf32>
    %199 = tpu.matmul %197, %198, %cst_79 {dimension_numbers = #tpu.dot_dimension_numbers<[1], [0], [0], [1], [0, 0, 1, 1], [], []>} : vector<8x128xbf16>, vector<128x512xbf16>, vector<8x512xf32> -> vector<8x512xf32>
    %200 = arith.addf %196, %199 : vector<8x512xf32>
    %201 = vector.extract_strided_slice %200 {offsets = [0, 0], sizes = [8, 384], strides = [1, 1]} : vector<8x512xf32> to vector<8x384xf32>
    %cst_80 = arith.constant 5.000000e-01 : f32
    %202 = vector.broadcast %cst_80 : f32 to vector<8x384xf32>
    %203 = arith.mulf %202, %201 : vector<8x384xf32>
    %204 = math.tanh %203 : vector<8x384xf32>
    %cst_81 = arith.constant 1.000000e+00 : f32
    %205 = vector.broadcast %cst_81 : f32 to vector<8x384xf32>
    %206 = arith.addf %204, %205 : vector<8x384xf32>
    %cst_82 = arith.constant 5.000000e-01 : f32
    %207 = vector.broadcast %cst_82 : f32 to vector<8x384xf32>
    %208 = arith.mulf %207, %206 : vector<8x384xf32>
    %209 = vector.extract_strided_slice %208 {offsets = [0, 0], sizes = [8, 128], strides = [1, 1]} : vector<8x384xf32> to vector<8x128xf32>
    %210 = vector.extract_strided_slice %208 {offsets = [0, 128], sizes = [8, 128], strides = [1, 1]} : vector<8x384xf32> to vector<8x128xf32>
    %211 = vector.extract_strided_slice %208 {offsets = [0, 256], sizes = [8, 128], strides = [1, 1]} : vector<8x384xf32> to vector<8x128xf32>
    %212 = vector.extract_strided_slice %200 {offsets = [0, 384], sizes = [8, 128], strides = [1, 1]} : vector<8x512xf32> to vector<8x128xf32>
    %213 = math.tanh %212 : vector<8x128xf32>
    %214 = arith.mulf %210, %186 : vector<8x128xf32>
    %215 = arith.mulf %209, %213 : vector<8x128xf32>
    %216 = arith.addf %214, %215 : vector<8x128xf32>
    %217 = math.tanh %216 : vector<8x128xf32>
    %218 = arith.mulf %211, %217 : vector<8x128xf32>
    %219 = arith.truncf %218 : vector<8x128xf32> to vector<8x128xbf16>
    %220 = arith.index_cast %c6_i32 : i32 to index
    %c0_83 = arith.constant 0 : index
    %c0_84 = arith.constant 0 : index
    %221 = vector.load %arg6[%220, %c0_83, %c0_84] : memref<8x8x128xbf16, #tpu.memory_space<vmem>>, vector<1x8x128xbf16>
    %222 = vector.shape_cast %221 : vector<1x8x128xbf16> to vector<8x128xbf16>
    %223 = vector.shape_cast %219 : vector<8x128xbf16> to vector<1x8x128xbf16>
    tpu.vector_store %arg6[%220, %c0_83, %c0_84], %223 {strides = array<i32>} : memref<8x8x128xbf16, #tpu.memory_space<vmem>>, vector<1x8x128xbf16>,
    %c7_i32 = arith.constant 7 : i32
    %224 = arith.index_cast %c7_i32 : i32 to index
    %c0_85 = arith.constant 0 : index
    %c0_86 = arith.constant 0 : index
    %225 = vector.load %arg9[%224, %c0_85, %c0_86] : memref<8x8x512xf32, #tpu.memory_space<vmem>>, vector<1x8x512xf32>
    %226 = vector.shape_cast %225 : vector<1x8x512xf32> to vector<8x512xf32>
    %227 = arith.truncf %218 : vector<8x128xf32> to vector<8x128xbf16>
    %c0_87 = arith.constant 0 : index
    %c0_88 = arith.constant 0 : index
    %228 = vector.load %arg4[%c0_87, %c0_88] : memref<128x512xbf16, #tpu.memory_space<vmem>>, vector<128x512xbf16>
    %cst_89 = arith.constant dense<0.000000e+00> : vector<8x512xf32>
    %229 = tpu.matmul %227, %228, %cst_89 {dimension_numbers = #tpu.dot_dimension_numbers<[1], [0], [0], [1], [0, 0, 1, 1], [], []>} : vector<8x128xbf16>, vector<128x512xbf16>, vector<8x512xf32> -> vector<8x512xf32>
    %230 = arith.addf %226, %229 : vector<8x512xf32>
    %231 = vector.extract_strided_slice %230 {offsets = [0, 0], sizes = [8, 384], strides = [1, 1]} : vector<8x512xf32> to vector<8x384xf32>
    %cst_90 = arith.constant 5.000000e-01 : f32
    %232 = vector.broadcast %cst_90 : f32 to vector<8x384xf32>
    %233 = arith.mulf %232, %231 : vector<8x384xf32>
    %234 = math.tanh %233 : vector<8x384xf32>
    %cst_91 = arith.constant 1.000000e+00 : f32
    %235 = vector.broadcast %cst_91 : f32 to vector<8x384xf32>
    %236 = arith.addf %234, %235 : vector<8x384xf32>
    %cst_92 = arith.constant 5.000000e-01 : f32
    %237 = vector.broadcast %cst_92 : f32 to vector<8x384xf32>
    %238 = arith.mulf %237, %236 : vector<8x384xf32>
    %239 = vector.extract_strided_slice %238 {offsets = [0, 0], sizes = [8, 128], strides = [1, 1]} : vector<8x384xf32> to vector<8x128xf32>
    %240 = vector.extract_strided_slice %238 {offsets = [0, 128], sizes = [8, 128], strides = [1, 1]} : vector<8x384xf32> to vector<8x128xf32>
    %241 = vector.extract_strided_slice %238 {offsets = [0, 256], sizes = [8, 128], strides = [1, 1]} : vector<8x384xf32> to vector<8x128xf32>
    %242 = vector.extract_strided_slice %230 {offsets = [0, 384], sizes = [8, 128], strides = [1, 1]} : vector<8x512xf32> to vector<8x128xf32>
    %243 = math.tanh %242 : vector<8x128xf32>
    %244 = arith.mulf %240, %216 : vector<8x128xf32>
    %245 = arith.mulf %239, %243 : vector<8x128xf32>
    %246 = arith.addf %244, %245 : vector<8x128xf32>
    %247 = math.tanh %246 : vector<8x128xf32>
    %248 = arith.mulf %241, %247 : vector<8x128xf32>
    %249 = arith.truncf %248 : vector<8x128xf32> to vector<8x128xbf16>
    %250 = arith.index_cast %c7_i32 : i32 to index
    %c0_93 = arith.constant 0 : index
    %c0_94 = arith.constant 0 : index
    %251 = vector.load %arg6[%250, %c0_93, %c0_94] : memref<8x8x128xbf16, #tpu.memory_space<vmem>>, vector<1x8x128xbf16>
    %252 = vector.shape_cast %251 : vector<1x8x128xbf16> to vector<8x128xbf16>
    %253 = vector.shape_cast %249 : vector<8x128xbf16> to vector<1x8x128xbf16>
    tpu.vector_store %arg6[%250, %c0_93, %c0_94], %253 {strides = array<i32>} : memref<8x8x128xbf16, #tpu.memory_space<vmem>>, vector<1x8x128xbf16>,
    %c8_i32 = arith.constant 8 : i32
    %c0_95 = arith.constant 0 : index
    %c0_96 = arith.constant 0 : index
    %254 = vector.load %arg7[%c0_95, %c0_96] : memref<8x128xf32, #tpu.memory_space<vmem>>, vector<8x128xf32>
    tpu.vector_store %arg7[%c0_95, %c0_96], %248 {strides = array<i32>} : memref<8x128xf32, #tpu.memory_space<vmem>>, vector<8x128xf32>,
    %c0_97 = arith.constant 0 : index
    %c0_98 = arith.constant 0 : index
    %255 = vector.load %arg8[%c0_97, %c0_98] : memref<8x128xf32, #tpu.memory_space<vmem>>, vector<8x128xf32>
    tpu.vector_store %arg8[%c0_97, %c0_98], %246 {strides = array<i32>} : memref<8x128xf32, #tpu.memory_space<vmem>>, vector<8x128xf32>,
    return
  }
  func.func @transform_0(%arg0: i32, %arg1: i32) -> (i32, i32, i32) {
    %c0_i32 = arith.constant 0 : i32
    %c0_i32_0 = arith.constant 0 : i32
    return %arg1, %arg0, %c0_i32 : i32, i32, i32
  }
  func.func @transform_1(%arg0: i32, %arg1: i32) -> (i32, i32) {
    %c0_i32 = arith.constant 0 : i32
    %c0_i32_0 = arith.constant 0 : i32
    %c0_i32_1 = arith.constant 0 : i32
    return %c0_i32, %c0_i32_0 : i32, i32
  }
  func.func @transform_2(%arg0: i32, %arg1: i32) -> (i32, i32) {
    %c0_i32 = arith.constant 0 : i32
    %c0_i32_0 = arith.constant 0 : i32
    %c0_i32_1 = arith.constant 0 : i32
    return %c0_i32, %c0_i32_0 : i32, i32
  }
  func.func @transform_3(%arg0: i32, %arg1: i32) -> (i32, i32) {
    %c0_i32 = arith.constant 0 : i32
    %c0_i32_0 = arith.constant 0 : i32
    %c0_i32_1 = arith.constant 0 : i32
    return %c0_i32, %c0_i32_0 : i32, i32
  }
  func.func @transform_4(%arg0: i32, %arg1: i32) -> (i32, i32, i32) {
    %c0_i32 = arith.constant 0 : i32
    %c0_i32_0 = arith.constant 0 : i32
    return %arg1, %arg0, %c0_i32 : i32, i32, i32
  }
}

</mosaic_0001>

<llo_original>
// kernel: tpu_custom_call.1
$region0: #{tpu_custom_call.1}
  #allocation0 [shape = 'u32[]', space=smem, size = 0x4, offset = 0x4, fixed_abs, tag = 'smem constant byte address 0x4 - core index']
  #allocation1 [shape = 'u32[72,128]{1,0:T(1,128)}', space=vmem, size = 0x9000, scoped, tag = 'internal scratch']
  #allocation2 [shape = 'f32[8,128]{1,0:T(8,128)}', space=vmem, size = 0x1000, scoped, tag = 'scratch operand']
  #allocation3 [shape = 'f32[8,128]{1,0:T(8,128)}', space=vmem, size = 0x1000, scoped, tag = 'scratch operand']
  #allocation4 [shape = 'f32[8,8,512]{2,1,0:T(8,128)}', space=vmem, size = 0x20000, scoped, tag = 'scratch operand']
  %s0 = inlined_call_operand.hbm [shape: bf16[16,8,128], index: 0, kind: input, shape index: {}]
  %s1 = inlined_call_operand.hbm [shape: bf16[128,512], index: 1, kind: input, shape index: {}]
  %s2 = inlined_call_operand.hbm [shape: bf16[128,512], index: 2, kind: input, shape index: {}]
  %s3 = inlined_call_operand.hbm [shape: f32[1,512], index: 3, kind: input, shape index: {}]
  %s4 = inlined_call_operand.hbm [shape: bf16[16,8,128], index: 4, kind: output, shape index: {}]
  %s5 = sld [smem:[#allocation0]]
  $region69: #{tpu_custom_call.1} parent=0
    _
  %s7 = ssub.s32 1, %s5
  %s8 = scalar_select 0, %s7, %s5
  $region1: #{tpu_custom_call.1} parent=0
    #allocation5 [shape = 'u8[32768]{0}', space=vmem, size = 0x8000, scoped, tag = 'input window, operand 0']
    #allocation6 [shape = 's32[2]{0}', space=sflag, size = 0x8, scoped, tag = 'scoped memory for tpu_custom_call.1']
    #allocation7 [shape = 's32[2]{0}', space=sflag, size = 0x8, scoped, tag = 'scoped memory for tpu_custom_call.1']
    #allocation8 [shape = 'u8[131072]{0}', space=vmem, size = 0x20000, scoped, tag = 'input window, operand 1, single buffered']
    #allocation9 [shape = 's32[1]{0}', space=sflag, size = 0x4, scoped, tag = 'scoped memory for tpu_custom_call.1']
    #allocation10 [shape = 'u8[131072]{0}', space=vmem, size = 0x20000, scoped, tag = 'input window, operand 2, single buffered']
    #allocation11 [shape = 'u8[2048]{0}', space=vmem, size = 0x800, scoped, tag = 'input window, operand 3, single buffered']
    #allocation12 [shape = 's32[1]{0}', space=sflag, size = 0x4, scoped, tag = 'scoped memory for tpu_custom_call.1']
    #allocation13 [shape = 'u8[32768]{0}', space=vmem, size = 0x8000, scoped, tag = 'output window, operand 0']
    %9 = vsyncpa [#allocation6], 0
    %s10 = scalar_lea.sflag [#allocation6], 1
    %11 = vsyncpa %s10, 0
    %12 = vsyncpa [#allocation9], 0
    %13 = vsyncpa [#allocation12], 0
    %14 = vsyncpa [#allocation7], 0
    %s15 = scalar_lea.sflag [#allocation7], 1
    %16 = vsyncpa %s15, 0
    loop: start=0, step=1, limit=4
    $region2: #{tpu_custom_call.1} parent=1 // loop_pre_header
      _
    $region3: #{tpu_custom_call.1} parent=1 // loop_header
      %s18 = sphi 0, %s22
      %p19 = scmp.ge.s32.totalorder %s18, 4
      %s25 = sphi 0, %s37
      %s26 = sphi 0, %s33
      %s27 = sphi 0, %s25
      %s28 = sphi 0, %s26
      %s29 = sphi 0, %s27
      %s30 = sphi 0, %s28
      %s42 = sphi 0, %s44
      %s45 = sphi 0, %s42
      %s46 = sphi 0, %s45
      %s62 = sphi 0, %s46
      %s66 = sphi 0, %s66
      %s68 = sphi 0, %s66
      %s69 = sphi 0, %s68
      %s83 = sphi 0, %s69
      %s87 = sphi 0, %s87
      %s89 = sphi 0, %s87
      %s90 = sphi 0, %s89
      %s104 = sphi 0, %s90
      %s108 = sphi 0, %s108
      %s110 = sphi 0, %s108
      %s111 = sphi 0, %s110
      %s125 = sphi 0, %s111
      %s133 = sphi 0, %s135
      %s136 = sphi 0, %s133
      %s137 = sphi 0, %s136
      %s153 = sphi 0, %s137
    $region4: #{tpu_custom_call.1} parent=1 // loop_header_branch
      %21 = sbr.rel (%p19) target = $region8
    $region5: #{tpu_custom_call.1} parent=1 // loop_body
      %s23 = ssub.s32 %s18, 1
      %s24 = ssub.s32 %s18, 2
      %s31 = sadd.s32 1, %s26
      %p32 = scmp.ge.s32.totalorder %s31, 2
      %s33 = scalar_select %p32, 0, %s31
      %s34 = sadd.s32 1, %s25
      %s35 = scalar_select %p32, %s34, %s25
      %p36 = scmp.ge.s32.totalorder %s35, 1
      %s37 = scalar_select %p36, 0, %s35
      %s38 = ssub.s32 %s26, %s33
      %s39 = ssub.s32 %s25, %s37
      %s40 = sor.u32 %s38, %s39
      %p41 = scmp.eq.s32.totalorder %s40, 0
      %s43 = sadd.s32 %s42, 1
      %s44 = scalar_select %p41, %s42, %s43
      %p47 = pneg %p41
      %p48 = scmp.eq.s32.totalorder %s18, 1
      %p49 = por %p47, %p48
      %p50 = scmp.ne.s32.totalorder %s42, %s45
      %p51 = scmp.eq.s32.totalorder %s18, 0
      %p52 = por %p50, %p51
      %p53 = scmp.ne.s32.totalorder %s42, %s45
      %p54 = scmp.eq.s32.totalorder %s23, 1
      %p55 = por %p53, %p54
      %p56 = scmp.ne.s32.totalorder %s45, %s46
      %p57 = scmp.eq.s32.totalorder %s23, 0
      %p58 = por %p56, %p57
      %p59 = scmp.ne.s32.totalorder %s45, %s46
      %p60 = scmp.eq.s32.totalorder %s24, 1
      %p61 = por %p59, %p60
      %p63 = scmp.ne.s32.totalorder %s46, %s62
      %p64 = scmp.eq.s32.totalorder %s24, 0
      %p65 = por %p63, %p64
      %s67 = sadd.s32 %s66, 1
      %p70 = scmp.eq.s32.totalorder %s18, 1
      %p71 = scmp.ne.s32.totalorder %s66, %s68
      %p72 = scmp.eq.s32.totalorder %s18, 0
      %p73 = por %p71, %p72
      %p74 = scmp.ne.s32.totalorder %s66, %s68
      %p75 = scmp.eq.s32.totalorder %s23, 1
      %p76 = por %p74, %p75
      %p77 = scmp.ne.s32.totalorder %s68, %s69
      %p78 = scmp.eq.s32.totalorder %s23, 0
      %p79 = por %p77, %p78
      %p80 = scmp.ne.s32.totalorder %s68, %s69
      %p81 = scmp.eq.s32.totalorder %s24, 1
      %p82 = por %p80, %p81
      %p84 = scmp.ne.s32.totalorder %s69, %s83
      %p85 = scmp.eq.s32.totalorder %s24, 0
      %p86 = por %p84, %p85
      %s88 = sadd.s32 %s87, 1
      %p91 = scmp.eq.s32.totalorder %s18, 1
      %p92 = scmp.ne.s32.totalorder %s87, %s89
      %p93 = scmp.eq.s32.totalorder %s18, 0
      %p94 = por %p92, %p93
      %p95 = scmp.ne.s32.totalorder %s87, %s89
      %p96 = scmp.eq.s32.totalorder %s23, 1
      %p97 = por %p95, %p96
      %p98 = scmp.ne.s32.totalorder %s89, %s90
      %p99 = scmp.eq.s32.totalorder %s23, 0
      %p100 = por %p98, %p99
      %p101 = scmp.ne.s32.totalorder %s89, %s90
      %p102 = scmp.eq.s32.totalorder %s24, 1
      %p103 = por %p101, %p102
      %p105 = scmp.ne.s32.totalorder %s90, %s104
      %p106 = scmp.eq.s32.totalorder %s24, 0
      %p107 = por %p105, %p106
      %s109 = sadd.s32 %s108, 1
      %p112 = scmp.eq.s32.totalorder %s18, 1
      %p113 = scmp.ne.s32.totalorder %s108, %s110
      %p114 = scmp.eq.s32.totalorder %s18, 0
      %p115 = por %p113, %p114
      %p116 = scmp.ne.s32.totalorder %s108, %s110
      %p117 = scmp.eq.s32.totalorder %s23, 1
      %p118 = por %p116, %p117
      %p119 = scmp.ne.s32.totalorder %s110, %s111
      %p120 = scmp.eq.s32.totalorder %s23, 0
      %p121 = por %p119, %p120
      %p122 = scmp.ne.s32.totalorder %s110, %s111
      %p123 = scmp.eq.s32.totalorder %s24, 1
      %p124 = por %p122, %p123
      %p126 = scmp.ne.s32.totalorder %s111, %s125
      %p127 = scmp.eq.s32.totalorder %s24, 0
      %p128 = por %p126, %p127
      %s129 = ssub.s32 %s26, %s33
      %s130 = ssub.s32 %s25, %s37
      %s131 = sor.u32 %s129, %s130
      %p132 = scmp.eq.s32.totalorder %s131, 0
      %s134 = sadd.s32 %s133, 1
      %s135 = scalar_select %p132, %s133, %s134
      %p138 = pneg %p132
      %p139 = scmp.eq.s32.totalorder %s18, 1
      %p140 = por %p138, %p139
      %p141 = scmp.ne.s32.totalorder %s133, %s136
      %p142 = scmp.eq.s32.totalorder %s18, 0
      %p143 = por %p141, %p142
      %p144 = scmp.ne.s32.totalorder %s133, %s136
      %p145 = scmp.eq.s32.totalorder %s23, 1
      %p146 = por %p144, %p145
      %p147 = scmp.ne.s32.totalorder %s136, %s137
      %p148 = scmp.eq.s32.totalorder %s23, 0
      %p149 = por %p147, %p148
      %p150 = scmp.ne.s32.totalorder %s136, %s137
      %p151 = scmp.eq.s32.totalorder %s24, 1
      %p152 = por %p150, %p151
      %p154 = scmp.ne.s32.totalorder %s137, %s153
      %p155 = scmp.eq.s32.totalorder %s24, 0
      %p156 = por %p154, %p155
      %p157 = scmp.le.s32.totalorder 1, %s18
      %p158 = scmp.lt.s32.totalorder %s18, 3
      %p159 = pnand %p157, %p158
      %p160 = pneg %p159
      // Predicated region
      $region9: #{tpu_custom_call.1} parent=5 // pred_check
        _
      $region10: #{tpu_custom_call.1} parent=5 // pred_check_branch
        %162 = sbr.rel (%p159) target = $region12
      $region11: #{tpu_custom_call.1} parent=5 // pred_region
        %s163 = ssub.s32 %s18, 1
        // Predicated region
        $region13: #{tpu_custom_call.1} parent=11 // pred_check
          %p164 = pneg %p79
        $region14: #{tpu_custom_call.1} parent=11 // pred_check_branch
          %166 = sbr.rel (%p164) target = $region16
        $region15: #{tpu_custom_call.1} parent=11 // pred_region
          %168 = vsyncadd [#allocation9], 0
          %s169 = sshll.u32 %s1, 4
          %s170 = int_to_ptr.hbm [resolvable:$true] %s169
          %s171 = sshll.u32 [#allocation8], 4
          %s172 = int_to_ptr.vmem [resolvable:$true] %s171
          %177 = dma.hbm_to_vmem [thread:$0]  %s170, 4096, %s172, [#allocation9], 256, 256, 16
        $region16: #{tpu_custom_call.1} parent=11 // pred_fallthru
          _
        // Predicated region
        $region17: #{tpu_custom_call.1} parent=11 // pred_check
          %p178 = pneg %p100
        $region18: #{tpu_custom_call.1} parent=11 // pred_check_branch
          %180 = sbr.rel (%p178) target = $region20
        $region19: #{tpu_custom_call.1} parent=11 // pred_region
          %182 = vsyncadd [#allocation9], 0
          %s183 = sshll.u32 %s2, 4
          %s184 = int_to_ptr.hbm [resolvable:$true] %s183
          %s185 = sshll.u32 [#allocation10], 4
          %s186 = int_to_ptr.vmem [resolvable:$true] %s185
          %191 = dma.hbm_to_vmem [thread:$0]  %s184, 4096, %s186, [#allocation9], 256, 256, 16
        $region20: #{tpu_custom_call.1} parent=11 // pred_fallthru
          _
        // Predicated region
        $region21: #{tpu_custom_call.1} parent=11 // pred_check
          %p192 = pneg %p121
        $region22: #{tpu_custom_call.1} parent=11 // pred_check_branch
          %194 = sbr.rel (%p192) target = $region24
        $region23: #{tpu_custom_call.1} parent=11 // pred_region
          %196 = vsyncadd [#allocation12], 0
          %s198 = sshll.u32 %s3, 4
          %s199 = int_to_ptr.hbm [resolvable:$true] %s198
          %s200 = sshll.u32 [#allocation11], 4
          %s201 = int_to_ptr.vmem [resolvable:$true] %s200
          %203 = dma.hbm_to_vmem [thread:$0]  %s199, 64, %s201, [#allocation12]
        $region24: #{tpu_custom_call.1} parent=11 // pred_fallthru
          _
      $region12: #{tpu_custom_call.1} parent=5 // pred_fallthru
        _
      %p204 = scmp.lt.s32.totalorder %s18, 2
      // Predicated region
      $region25: #{tpu_custom_call.1} parent=5 // pred_check
        %p205 = pneg %p204
      $region26: #{tpu_custom_call.1} parent=5 // pred_check_branch
        %207 = sbr.rel (%p205) target = $region28
      $region27: #{tpu_custom_call.1} parent=5 // pred_region
        // Predicated region
        $region29: #{tpu_custom_call.1} parent=27 // pred_check
          %p208 = pneg %p52
        $region30: #{tpu_custom_call.1} parent=27 // pred_check_branch
          %210 = sbr.rel (%p208) target = $region32
        $region31: #{tpu_custom_call.1} parent=27 // pred_region
          %s211 = sand.u32 %s42, 1
          %s212 = scalar_lea.sflag [#allocation6], %s211
          %s213 = sand.u32 %s42, 1
          %s214 = smul.addr %s213, 32
          %s215 = scalar_lea.vmem [#allocation5], %s214
          %s216 = smul.u32 8, %s26
          %218 = vsyncadd %s212, 0
          %s219 = sadd.s32 %s25, %s216
          %s220 = smul.addr %s219, 4
          %s221 = scalar_lea.hbm %s0, %s220
          %s222 = sshll.u32 %s221, 4
          %s223 = int_to_ptr.hbm [resolvable:$true] %s222
          %s224 = sshll.u32 %s215, 4
          %s225 = int_to_ptr.vmem [resolvable:$true] %s224
          %230 = dma.hbm_to_vmem [thread:$0]  %s223, 512, %s225, %s212, 64, 64, 4
        $region32: #{tpu_custom_call.1} parent=27 // pred_fallthru
          _
      $region28: #{tpu_custom_call.1} parent=5 // pred_fallthru
        _
      %p231 = scmp.le.s32.totalorder 1, %s18
      %p232 = scmp.lt.s32.totalorder %s18, 3
      %p233 = pnand %p231, %p232
      %p234 = pneg %p233
      // Predicated region
      $region33: #{tpu_custom_call.1} parent=5 // pred_check
        _
      $region34: #{tpu_custom_call.1} parent=5 // pred_check_branch
        %236 = sbr.rel (%p233) target = $region36
      $region35: #{tpu_custom_call.1} parent=5 // pred_region
        %s237 = ssub.s32 %s18, 1
        %s238 = sand.u32 %s45, 1
        %s239 = scalar_lea.sflag [#allocation6], %s238
        %s240 = sand.u32 %s45, 1
        %s241 = smul.addr %s240, 32
        %s242 = scalar_lea.vmem [#allocation5], %s241
        // Predicated region
        $region37: #{tpu_custom_call.1} parent=35 // pred_check
          %p243 = pneg %p58
        $region38: #{tpu_custom_call.1} parent=35 // pred_check_branch
          %245 = sbr.rel (%p243) target = $region40
        $region39: #{tpu_custom_call.1} parent=35 // pred_region
          %247 = dma.done %s239, 512
        $region40: #{tpu_custom_call.1} parent=35 // pred_fallthru
          _
        // Predicated region
        $region41: #{tpu_custom_call.1} parent=35 // pred_check
          %p248 = pneg %p79
        $region42: #{tpu_custom_call.1} parent=35 // pred_check_branch
          %250 = sbr.rel (%p248) target = $region44
        $region43: #{tpu_custom_call.1} parent=35 // pred_region
          %252 = dma.done [#allocation9], 4096
        $region44: #{tpu_custom_call.1} parent=35 // pred_fallthru
          _
        // Predicated region
        $region45: #{tpu_custom_call.1} parent=35 // pred_check
          %p253 = pneg %p100
        $region46: #{tpu_custom_call.1} parent=35 // pred_check_branch
          %255 = sbr.rel (%p253) target = $region48
        $region47: #{tpu_custom_call.1} parent=35 // pred_region
          %257 = dma.done [#allocation9], 4096
        $region48: #{tpu_custom_call.1} parent=35 // pred_fallthru
          _
        // Predicated region
        $region49: #{tpu_custom_call.1} parent=35 // pred_check
          %p258 = pneg %p121
        $region50: #{tpu_custom_call.1} parent=35 // pred_check_branch
          %260 = sbr.rel (%p258) target = $region52
        $region51: #{tpu_custom_call.1} parent=35 // pred_region
          %262 = dma.done [#allocation12], 64
        $region52: #{tpu_custom_call.1} parent=35 // pred_fallthru
          _
        %s263 = sand.u32 %s45, 1
        %s264 = scalar_lea.sflag [#allocation6], %s263
        %s265 = sand.u32 %s45, 1
        %s266 = smul.addr %s265, 32
        %s267 = scalar_lea.vmem [#allocation5], %s266
        %p268 = pneg %p58
        %p269 = pneg %p55
        %p270 = pneg %p79
        %p271 = pneg %p76
        %p272 = pneg %p100
        %p273 = pneg %p97
        %p274 = pneg %p121
        %p275 = pneg %p118
        %p276 = pneg %p149
        %p277 = pneg %p146
        %s278 = sand.u32 %s136, 1
        %s279 = scalar_lea.sflag [#allocation7], %s278
        %s280 = sand.u32 %s136, 1
        %s281 = smul.addr %s280, 32
        %s282 = scalar_lea.vmem [#allocation13], %s281
        %s283 = smul.u32 8, %s28
        %s284 = smul.u32 8, %s28
        %p285 = scmp.eq.s32.totalorder %s28, 0
        // Predicated region
        $region53: #{tpu_custom_call.1} parent=35 // pred_check
          %p286 = pneg %p285
        $region54: #{tpu_custom_call.1} parent=35 // pred_check_branch
          %288 = sbr.rel (%p286) target = $region56
        $region55: #{tpu_custom_call.1} parent=35 // pred_region
          %289 = vst [vmem:[#allocation2] sm:$0xff] 0.0
          %290 = vst [vmem:[#allocation3] sm:$0xff] 0.0
        $region56: #{tpu_custom_call.1} parent=35 // pred_fallthru
          _
        %v291 = vld [vmem:[%s242] sm:$0xf]
        %v292 = vld [vmem:[%s242 + $0x4] sm:$0xf]
        %v293 = vld [vmem:[%s242 + $0x8] sm:$0xf]
        %v294 = vld [vmem:[%s242 + $0xc] sm:$0xf]
        %v295 = vld [vmem:[%s242 + $0x10] sm:$0xf]
        %v296 = vld [vmem:[%s242 + $0x14] sm:$0xf]
        %v297 = vld [vmem:[%s242 + $0x18] sm:$0xf]
        %v298 = vld [vmem:[%s242 + $0x1c] sm:$0xf]
        %v299 = vld [vmem:[#allocation8] sm:$0xff]
        %v300 = vld [vmem:[#allocation8 + $0x8] sm:$0xff]
        %v301 = vld [vmem:[#allocation8 + $0x10] sm:$0xff]
        %v302 = vld [vmem:[#allocation8 + $0x18] sm:$0xff]
        %v303 = vld [vmem:[#allocation8 + $0x20] sm:$0xff]
        %v304 = vld [vmem:[#allocation8 + $0x28] sm:$0xff]
        %v305 = vld [vmem:[#allocation8 + $0x30] sm:$0xff]
        %v306 = vld [vmem:[#allocation8 + $0x38] sm:$0xff]
        %v307 = vld [vmem:[#allocation8 + $0x40] sm:$0xff]
        %v308 = vld [vmem:[#allocation8 + $0x48] sm:$0xff]
        %v309 = vld [vmem:[#allocation8 + $0x50] sm:$0xff]
        %v310 = vld [vmem:[#allocation8 + $0x58] sm:$0xff]
        %v311 = vld [vmem:[#allocation8 + $0x60] sm:$0xff]
        %v312 = vld [vmem:[#allocation8 + $0x68] sm:$0xff]
        %v313 = vld [vmem:[#allocation8 + $0x70] sm:$0xff]
        %v314 = vld [vmem:[#allocation8 + $0x78] sm:$0xff]
        %v315 = vld [vmem:[#allocation8 + $0x80] sm:$0xff]
        %v316 = vld [vmem:[#allocation8 + $0x88] sm:$0xff]
        %v317 = vld [vmem:[#allocation8 + $0x90] sm:$0xff]
        %v318 = vld [vmem:[#allocation8 + $0x98] sm:$0xff]
        %v319 = vld [vmem:[#allocation8 + $0xa0] sm:$0xff]
        %v320 = vld [vmem:[#allocation8 + $0xa8] sm:$0xff]
        %v321 = vld [vmem:[#allocation8 + $0xb0] sm:$0xff]
        %v322 = vld [vmem:[#allocation8 + $0xb8] sm:$0xff]
        %v323 = vld [vmem:[#allocation8 + $0xc0] sm:$0xff]
        %v324 = vld [vmem:[#allocation8 + $0xc8] sm:$0xff]
        %v325 = vld [vmem:[#allocation8 + $0xd0] sm:$0xff]
        %v326 = vld [vmem:[#allocation8 + $0xd8] sm:$0xff]
        %v327 = vld [vmem:[#allocation8 + $0xe0] sm:$0xff]
        %v328 = vld [vmem:[#allocation8 + $0xe8] sm:$0xff]
        %v329 = vld [vmem:[#allocation8 + $0xf0] sm:$0xff]
        %v330 = vld [vmem:[#allocation8 + $0xf8] sm:$0xff]
        %v331 = vld [vmem:[#allocation11] sm:$0xf]
        %v333 = vperm.slane %v331, 0
        %v334 = vperm.slane %v331, 1
        %v335 = vperm.slane %v331, 2
        %v336 = vperm.slane %v331, 3
        %v349 = vunpack.c.l.b16 %v291
        %v350 = vunpack.c.l.b16 %v292
        %v351 = vunpack.c.l.b16 %v293
        %v352 = vunpack.c.l.b16 %v294
        %v353 = vunpack.c.l.b16 %v295
        %v354 = vunpack.c.l.b16 %v296
        %v355 = vunpack.c.l.b16 %v297
        %v356 = vunpack.c.l.b16 %v298
        %v357 = vpack.c.b16 %v350, %v349
        %v358 = vpack.c.b16 %v352, %v351
        %v359 = vpack.c.b16 %v354, %v353
        %v360 = vpack.c.b16 %v356, %v355
        %v397 = vunpack.c.l.b16 %v299
        %v398 = vunpack.c.h.b16 %v299
        %v399 = vunpack.c.l.b16 %v300
        %v400 = vunpack.c.h.b16 %v300
        %v401 = vunpack.c.l.b16 %v301
        %v402 = vunpack.c.h.b16 %v301
        %v403 = vunpack.c.l.b16 %v302
        %v404 = vunpack.c.h.b16 %v302
        %v405 = vunpack.c.l.b16 %v303
        %v406 = vunpack.c.h.b16 %v303
        %v407 = vunpack.c.l.b16 %v304
        %v408 = vunpack.c.h.b16 %v304
        %v409 = vunpack.c.l.b16 %v305
        %v410 = vunpack.c.h.b16 %v305
        %v411 = vunpack.c.l.b16 %v306
        %v412 = vunpack.c.h.b16 %v306
        %v413 = vunpack.c.l.b16 %v307
        %v414 = vunpack.c.h.b16 %v307
        %v415 = vunpack.c.l.b16 %v308
        %v416 = vunpack.c.h.b16 %v308
        %v417 = vunpack.c.l.b16 %v309
        %v418 = vunpack.c.h.b16 %v309
        %v419 = vunpack.c.l.b16 %v310
        %v420 = vunpack.c.h.b16 %v310
        %v421 = vunpack.c.l.b16 %v311
        %v422 = vunpack.c.h.b16 %v311
        %v423 = vunpack.c.l.b16 %v312
        %v424 = vunpack.c.h.b16 %v312
        %v425 = vunpack.c.l.b16 %v313
        %v426 = vunpack.c.h.b16 %v313
        %v427 = vunpack.c.l.b16 %v314
        %v428 = vunpack.c.h.b16 %v314
        %v429 = vunpack.c.l.b16 %v315
        %v430 = vunpack.c.h.b16 %v315
        %v431 = vunpack.c.l.b16 %v316
        %v432 = vunpack.c.h.b16 %v316
        %v433 = vunpack.c.l.b16 %v317
        %v434 = vunpack.c.h.b16 %v317
        %v435 = vunpack.c.l.b16 %v318
        %v436 = vunpack.c.h.b16 %v318
        %v437 = vunpack.c.l.b16 %v319
        %v438 = vunpack.c.h.b16 %v319
        %v439 = vunpack.c.l.b16 %v320
        %v440 = vunpack.c.h.b16 %v320
        %v441 = vunpack.c.l.b16 %v321
        %v442 = vunpack.c.h.b16 %v321
        %v443 = vunpack.c.l.b16 %v322
        %v444 = vunpack.c.h.b16 %v322
        %v445 = vunpack.c.l.b16 %v323
        %v446 = vunpack.c.h.b16 %v323
        %v447 = vunpack.c.l.b16 %v324
        %v448 = vunpack.c.h.b16 %v324
        %v449 = vunpack.c.l.b16 %v325
        %v450 = vunpack.c.h.b16 %v325
        %v451 = vunpack.c.l.b16 %v326
        %v452 = vunpack.c.h.b16 %v326
        %v453 = vunpack.c.l.b16 %v327
        %v454 = vunpack.c.h.b16 %v327
        %v455 = vunpack.c.l.b16 %v328
        %v456 = vunpack.c.h.b16 %v328
        %v457 = vunpack.c.l.b16 %v329
        %v458 = vunpack.c.h.b16 %v329
        %v459 = vunpack.c.l.b16 %v330
        %v460 = vunpack.c.h.b16 %v330
        %v461 = vpack.c.b16 %v401, %v397
        %v462 = vpack.c.b16 %v402, %v398
        %v463 = vpack.c.b16 %v403, %v399
        %v464 = vpack.c.b16 %v404, %v400
        %v465 = vpack.c.b16 %v409, %v405
        %v466 = vpack.c.b16 %v410, %v406
        %v467 = vpack.c.b16 %v411, %v407
        %v468 = vpack.c.b16 %v412, %v408
        %v469 = vpack.c.b16 %v417, %v413
        %v470 = vpack.c.b16 %v418, %v414
        %v471 = vpack.c.b16 %v419, %v415
        %v472 = vpack.c.b16 %v420, %v416
        %v473 = vpack.c.b16 %v425, %v421
        %v474 = vpack.c.b16 %v426, %v422
        %v475 = vpack.c.b16 %v427, %v423
        %v476 = vpack.c.b16 %v428, %v424
        %v477 = vpack.c.b16 %v433, %v429
        %v478 = vpack.c.b16 %v434, %v430
        %v479 = vpack.c.b16 %v435, %v431
        %v480 = vpack.c.b16 %v436, %v432
        %v481 = vpack.c.b16 %v441, %v437
        %v482 = vpack.c.b16 %v442, %v438
        %v483 = vpack.c.b16 %v443, %v439
        %v484 = vpack.c.b16 %v444, %v440
        %v485 = vpack.c.b16 %v449, %v445
        %v486 = vpack.c.b16 %v450, %v446
        %v487 = vpack.c.b16 %v451, %v447
        %v488 = vpack.c.b16 %v452, %v448
        %v489 = vpack.c.b16 %v457, %v453
        %v490 = vpack.c.b16 %v458, %v454
        %v491 = vpack.c.b16 %v459, %v455
        %v492 = vpack.c.b16 %v460, %v456
        %525 = vmatpush.bf16.msra.mxu0 %v489
        %526 = vmatpush.bf16.msra.mxu0 %v485
        %527 = vmatpush.bf16.msra.mxu0 %v481
        %528 = vmatpush.bf16.msra.mxu0 %v477
        %529 = vmatpush.bf16.msra.mxu0 %v473
        %530 = vmatpush.bf16.msra.mxu0 %v469
        %531 = vmatpush.bf16.msra.mxu0 %v465
        %532 = vmatpush.bf16.msra.mxu0 %v461
        %533 = vmatmul.bf16.gmra.mxu0 %v357
        %v534 = vpop.f32.mrf.mxu0
        %v535 = vadd.f32 %v333, %v534
        %v536 = vpop.f32.mrf.mxu0
        %v537 = vadd.f32 %v333, %v536
        %538 = vmatmul.bf16.gmra.mxu0 %v358
        %v539 = vpop.f32.mrf.mxu0
        %v540 = vadd.f32 %v333, %v539
        %v541 = vpop.f32.mrf.mxu0
        %v542 = vadd.f32 %v333, %v541
        %543 = vmatmul.bf16.gmra.mxu0 %v359
        %v544 = vpop.f32.mrf.mxu0
        %v545 = vadd.f32 %v333, %v544
        %v546 = vpop.f32.mrf.mxu0
        %v547 = vadd.f32 %v333, %v546
        %548 = vmatmul.bf16.gmra.mxu0 %v360
        %v549 = vpop.f32.mrf.mxu0
        %v550 = vadd.f32 %v333, %v549
        %v551 = vpop.f32.mrf.mxu0
        %v552 = vadd.f32 %v333, %v551
        %553 = vdwg.mxu0
        %554 = vmatpush.bf16.msra.mxu0 %v490
        %555 = vmatpush.bf16.msra.mxu0 %v486
        %556 = vmatpush.bf16.msra.mxu0 %v482
        %557 = vmatpush.bf16.msra.mxu0 %v478
        %558 = vmatpush.bf16.msra.mxu0 %v474
        %559 = vmatpush.bf16.msra.mxu0 %v470
        %560 = vmatpush.bf16.msra.mxu0 %v466
        %561 = vmatpush.bf16.msra.mxu0 %v462
        %562 = vmatmul.bf16.gmra.mxu0 %v357
        %v563 = vpop.f32.mrf.mxu0
        %v564 = vadd.f32 %v334, %v563
        %v565 = vpop.f32.mrf.mxu0
        %v566 = vadd.f32 %v334, %v565
        %567 = vmatmul.bf16.gmra.mxu0 %v358
        %v568 = vpop.f32.mrf.mxu0
        %v569 = vadd.f32 %v334, %v568
        %v570 = vpop.f32.mrf.mxu0
        %v571 = vadd.f32 %v334, %v570
        %572 = vmatmul.bf16.gmra.mxu0 %v359
        %v573 = vpop.f32.mrf.mxu0
        %v574 = vadd.f32 %v334, %v573
        %v575 = vpop.f32.mrf.mxu0
        %v576 = vadd.f32 %v334, %v575
        %577 = vmatmul.bf16.gmra.mxu0 %v360
        %v578 = vpop.f32.mrf.mxu0
        %v579 = vadd.f32 %v334, %v578
        %v580 = vpop.f32.mrf.mxu0
        %v581 = vadd.f32 %v334, %v580
        %582 = vdwg.mxu0
        %583 = vmatpush.bf16.msra.mxu0 %v491
        %584 = vmatpush.bf16.msra.mxu0 %v487
        %585 = vmatpush.bf16.msra.mxu0 %v483
        %586 = vmatpush.bf16.msra.mxu0 %v479
        %587 = vmatpush.bf16.msra.mxu0 %v475
        %588 = vmatpush.bf16.msra.mxu0 %v471
        %589 = vmatpush.bf16.msra.mxu0 %v467
        %590 = vmatpush.bf16.msra.mxu0 %v463
        %591 = vmatmul.bf16.gmra.mxu0 %v357
        %v592 = vpop.f32.mrf.mxu0
        %v593 = vadd.f32 %v335, %v592
        %v594 = vpop.f32.mrf.mxu0
        %v595 = vadd.f32 %v335, %v594
        %596 = vmatmul.bf16.gmra.mxu0 %v358
        %v597 = vpop.f32.mrf.mxu0
        %v598 = vadd.f32 %v335, %v597
        %v599 = vpop.f32.mrf.mxu0
        %v600 = vadd.f32 %v335, %v599
        %601 = vmatmul.bf16.gmra.mxu0 %v359
        %v602 = vpop.f32.mrf.mxu0
        %v603 = vadd.f32 %v335, %v602
        %v604 = vpop.f32.mrf.mxu0
        %v605 = vadd.f32 %v335, %v604
        %606 = vmatmul.bf16.gmra.mxu0 %v360
        %v607 = vpop.f32.mrf.mxu0
        %v608 = vadd.f32 %v335, %v607
        %v609 = vpop.f32.mrf.mxu0
        %v610 = vadd.f32 %v335, %v609
        %611 = vdwg.mxu0
        %612 = vmatpush.bf16.msra.mxu0 %v492
        %613 = vmatpush.bf16.msra.mxu0 %v488
        %614 = vmatpush.bf16.msra.mxu0 %v484
        %615 = vmatpush.bf16.msra.mxu0 %v480
        %616 = vmatpush.bf16.msra.mxu0 %v476
        %617 = vmatpush.bf16.msra.mxu0 %v472
        %618 = vmatpush.bf16.msra.mxu0 %v468
        %619 = vmatpush.bf16.msra.mxu0 %v464
        %620 = vmatmul.bf16.gmra.mxu0 %v357
        %v621 = vpop.f32.mrf.mxu0
        %v622 = vadd.f32 %v336, %v621
        %v623 = vpop.f32.mrf.mxu0
        %v624 = vadd.f32 %v336, %v623
        %625 = vmatmul.bf16.gmra.mxu0 %v358
        %v626 = vpop.f32.mrf.mxu0
        %v627 = vadd.f32 %v336, %v626
        %v628 = vpop.f32.mrf.mxu0
        %v629 = vadd.f32 %v336, %v628
        %630 = vmatmul.bf16.gmra.mxu0 %v359
        %v631 = vpop.f32.mrf.mxu0
        %v632 = vadd.f32 %v336, %v631
        %v633 = vpop.f32.mrf.mxu0
        %v634 = vadd.f32 %v336, %v633
        %635 = vmatmul.bf16.gmra.mxu0 %v360
        %v636 = vpop.f32.mrf.mxu0
        %v637 = vadd.f32 %v336, %v636
        %v638 = vpop.f32.mrf.mxu0
        %v639 = vadd.f32 %v336, %v638
        %640 = vdwg.mxu0
        %641 = vst [vmem:[#allocation4] sm:$0xff] %v535
        %642 = vst [vmem:[#allocation4 + $0x8] sm:$0xff] %v564
        %643 = vst [vmem:[#allocation4 + $0x10] sm:$0xff] %v593
        %644 = vst [vmem:[#allocation4 + $0x18] sm:$0xff] %v622
        %645 = vst [vmem:[#allocation4 + $0x20] sm:$0xff] %v537
        %646 = vst [vmem:[#allocation4 + $0x28] sm:$0xff] %v566
        %647 = vst [vmem:[#allocation4 + $0x30] sm:$0xff] %v595
        %648 = vst [vmem:[#allocation4 + $0x38] sm:$0xff] %v624
        %649 = vst [vmem:[#allocation4 + $0x40] sm:$0xff] %v540
        %650 = vst [vmem:[#allocation4 + $0x48] sm:$0xff] %v569
        %651 = vst [vmem:[#allocation4 + $0x50] sm:$0xff] %v598
        %652 = vst [vmem:[#allocation4 + $0x58] sm:$0xff] %v627
        %653 = vst [vmem:[#allocation4 + $0x60] sm:$0xff] %v542
        %654 = vst [vmem:[#allocation4 + $0x68] sm:$0xff] %v571
        %655 = vst [vmem:[#allocation4 + $0x70] sm:$0xff] %v600
        %656 = vst [vmem:[#allocation4 + $0x78] sm:$0xff] %v629
        %657 = vst [vmem:[#allocation4 + $0x80] sm:$0xff] %v545
        %658 = vst [vmem:[#allocation4 + $0x88] sm:$0xff] %v574
        %659 = vst [vmem:[#allocation4 + $0x90] sm:$0xff] %v603
        %660 = vst [vmem:[#allocation4 + $0x98] sm:$0xff] %v632
        %661 = vst [vmem:[#allocation4 + $0xa0] sm:$0xff] %v547
        %662 = vst [vmem:[#allocation4 + $0xa8] sm:$0xff] %v576
        %663 = vst [vmem:[#allocation4 + $0xb0] sm:$0xff] %v605
        %664 = vst [vmem:[#allocation4 + $0xb8] sm:$0xff] %v634
        %665 = vst [vmem:[#allocation4 + $0xc0] sm:$0xff] %v550
        %666 = vst [vmem:[#allocation4 + $0xc8] sm:$0xff] %v579
        %667 = vst [vmem:[#allocation4 + $0xd0] sm:$0xff] %v608
        %668 = vst [vmem:[#allocation4 + $0xd8] sm:$0xff] %v637
        %669 = vst [vmem:[#allocation4 + $0xe0] sm:$0xff] %v552
        %670 = vst [vmem:[#allocation4 + $0xe8] sm:$0xff] %v581
        %671 = vst [vmem:[#allocation4 + $0xf0] sm:$0xff] %v610
        %672 = vst [vmem:[#allocation4 + $0xf8] sm:$0xff] %v639
        %v673 = vld [vmem:[#allocation2] sm:$0xff]
        %v674 = vld [vmem:[#allocation3] sm:$0xff]
        %v675 = vld [vmem:[#allocation4] sm:$0xff]
        %v676 = vld [vmem:[#allocation4 + $0x8] sm:$0xff]
        %v677 = vld [vmem:[#allocation4 + $0x10] sm:$0xff]
        %v678 = vld [vmem:[#allocation4 + $0x18] sm:$0xff]
        %v679 = vpack.c.bf16 %v673, %v673
        %v680 = vld [vmem:[#allocation10] sm:$0xff]
        %v681 = vld [vmem:[#allocation10 + $0x8] sm:$0xff]
        %v682 = vld [vmem:[#allocation10 + $0x10] sm:$0xff]
        %v683 = vld [vmem:[#allocation10 + $0x18] sm:$0xff]
        %v684 = vld [vmem:[#allocation10 + $0x20] sm:$0xff]
        %v685 = vld [vmem:[#allocation10 + $0x28] sm:$0xff]
        %v686 = vld [vmem:[#allocation10 + $0x30] sm:$0xff]
        %v687 = vld [vmem:[#allocation10 + $0x38] sm:$0xff]
        %v688 = vld [vmem:[#allocation10 + $0x40] sm:$0xff]
        %v689 = vld [vmem:[#allocation10 + $0x48] sm:$0xff]
        %v690 = vld [vmem:[#allocation10 + $0x50] sm:$0xff]
        %v691 = vld [vmem:[#allocation10 + $0x58] sm:$0xff]
        %v692 = vld [vmem:[#allocation10 + $0x60] sm:$0xff]
        %v693 = vld [vmem:[#allocation10 + $0x68] sm:$0xff]
        %v694 = vld [vmem:[#allocation10 + $0x70] sm:$0xff]
        %v695 = vld [vmem:[#allocation10 + $0x78] sm:$0xff]
        %v696 = vld [vmem:[#allocation10 + $0x80] sm:$0xff]
        %v697 = vld [vmem:[#allocation10 + $0x88] sm:$0xff]
        %v698 = vld [vmem:[#allocation10 + $0x90] sm:$0xff]
        %v699 = vld [vmem:[#allocation10 + $0x98] sm:$0xff]
        %v700 = vld [vmem:[#allocation10 + $0xa0] sm:$0xff]
        %v701 = vld [vmem:[#allocation10 + $0xa8] sm:$0xff]
        %v702 = vld [vmem:[#allocation10 + $0xb0] sm:$0xff]
        %v703 = vld [vmem:[#allocation10 + $0xb8] sm:$0xff]
        %v704 = vld [vmem:[#allocation10 + $0xc0] sm:$0xff]
        %v705 = vld [vmem:[#allocation10 + $0xc8] sm:$0xff]
        %v706 = vld [vmem:[#allocation10 + $0xd0] sm:$0xff]
        %v707 = vld [vmem:[#allocation10 + $0xd8] sm:$0xff]
        %v708 = vld [vmem:[#allocation10 + $0xe0] sm:$0xff]
        %v709 = vld [vmem:[#allocation10 + $0xe8] sm:$0xff]
        %v710 = vld [vmem:[#allocation10 + $0xf0] sm:$0xff]
        %v711 = vld [vmem:[#allocation10 + $0xf8] sm:$0xff]
        %v744 = vunpack.c.l.b16 %v680
        %v745 = vunpack.c.h.b16 %v680
        %v746 = vunpack.c.l.b16 %v681
        %v747 = vunpack.c.h.b16 %v681
        %v748 = vunpack.c.l.b16 %v682
        %v749 = vunpack.c.h.b16 %v682
        %v750 = vunpack.c.l.b16 %v683
        %v751 = vunpack.c.h.b16 %v683
        %v752 = vunpack.c.l.b16 %v684
        %v753 = vunpack.c.h.b16 %v684
        %v754 = vunpack.c.l.b16 %v685
        %v755 = vunpack.c.h.b16 %v685
        %v756 = vunpack.c.l.b16 %v686
        %v757 = vunpack.c.h.b16 %v686
        %v758 = vunpack.c.l.b16 %v687
        %v759 = vunpack.c.h.b16 %v687
        %v760 = vunpack.c.l.b16 %v688
        %v761 = vunpack.c.h.b16 %v688
        %v762 = vunpack.c.l.b16 %v689
        %v763 = vunpack.c.h.b16 %v689
        %v764 = vunpack.c.l.b16 %v690
        %v765 = vunpack.c.h.b16 %v690
        %v766 = vunpack.c.l.b16 %v691
        %v767 = vunpack.c.h.b16 %v691
        %v768 = vunpack.c.l.b16 %v692
        %v769 = vunpack.c.h.b16 %v692
        %v770 = vunpack.c.l.b16 %v693
        %v771 = vunpack.c.h.b16 %v693
        %v772 = vunpack.c.l.b16 %v694
        %v773 = vunpack.c.h.b16 %v694
        %v774 = vunpack.c.l.b16 %v695
        %v775 = vunpack.c.h.b16 %v695
        %v776 = vunpack.c.l.b16 %v696
        %v777 = vunpack.c.h.b16 %v696
        %v778 = vunpack.c.l.b16 %v697
        %v779 = vunpack.c.h.b16 %v697
        %v780 = vunpack.c.l.b16 %v698
        %v781 = vunpack.c.h.b16 %v698
        %v782 = vunpack.c.l.b16 %v699
        %v783 = vunpack.c.h.b16 %v699
        %v784 = vunpack.c.l.b16 %v700
        %v785 = vunpack.c.h.b16 %v700
        %v786 = vunpack.c.l.b16 %v701
        %v787 = vunpack.c.h.b16 %v701
        %v788 = vunpack.c.l.b16 %v702
        %v789 = vunpack.c.h.b16 %v702
        %v790 = vunpack.c.l.b16 %v703
        %v791 = vunpack.c.h.b16 %v703
        %v792 = vunpack.c.l.b16 %v704
        %v793 = vunpack.c.h.b16 %v704
        %v794 = vunpack.c.l.b16 %v705
        %v795 = vunpack.c.h.b16 %v705
        %v796 = vunpack.c.l.b16 %v706
        %v797 = vunpack.c.h.b16 %v706
        %v798 = vunpack.c.l.b16 %v707
        %v799 = vunpack.c.h.b16 %v707
        %v800 = vunpack.c.l.b16 %v708
        %v801 = vunpack.c.h.b16 %v708
        %v802 = vunpack.c.l.b16 %v709
        %v803 = vunpack.c.h.b16 %v709
        %v804 = vunpack.c.l.b16 %v710
        %v805 = vunpack.c.h.b16 %v710
        %v806 = vunpack.c.l.b16 %v711
        %v807 = vunpack.c.h.b16 %v711
        %v808 = vpack.c.b16 %v748, %v744
        %v809 = vpack.c.b16 %v749, %v745
        %v810 = vpack.c.b16 %v750, %v746
        %v811 = vpack.c.b16 %v751, %v747
        %v812 = vpack.c.b16 %v756, %v752
        %v813 = vpack.c.b16 %v757, %v753
        %v814 = vpack.c.b16 %v758, %v754
        %v815 = vpack.c.b16 %v759, %v755
        %v816 = vpack.c.b16 %v764, %v760
        %v817 = vpack.c.b16 %v765, %v761
        %v818 = vpack.c.b16 %v766, %v762
        %v819 = vpack.c.b16 %v767, %v763
        %v820 = vpack.c.b16 %v772, %v768
        %v821 = vpack.c.b16 %v773, %v769
        %v822 = vpack.c.b16 %v774, %v770
        %v823 = vpack.c.b16 %v775, %v771
        %v824 = vpack.c.b16 %v780, %v776
        %v825 = vpack.c.b16 %v781, %v777
        %v826 = vpack.c.b16 %v782, %v778
        %v827 = vpack.c.b16 %v783, %v779
        %v828 = vpack.c.b16 %v788, %v784
        %v829 = vpack.c.b16 %v789, %v785
        %v830 = vpack.c.b16 %v790, %v786
        %v831 = vpack.c.b16 %v791, %v787
        %v832 = vpack.c.b16 %v796, %v792
        %v833 = vpack.c.b16 %v797, %v793
        %v834 = vpack.c.b16 %v798, %v794
        %v835 = vpack.c.b16 %v799, %v795
        %v836 = vpack.c.b16 %v804, %v800
        %v837 = vpack.c.b16 %v805, %v801
        %v838 = vpack.c.b16 %v806, %v802
        %v839 = vpack.c.b16 %v807, %v803
        %872 = vmatpush.bf16.msra.mxu0 %v836
        %873 = vmatpush.bf16.msra.mxu0 %v832
        %874 = vmatpush.bf16.msra.mxu0 %v828
        %875 = vmatpush.bf16.msra.mxu0 %v824
        %876 = vmatpush.bf16.msra.mxu0 %v820
        %877 = vmatpush.bf16.msra.mxu0 %v816
        %878 = vmatpush.bf16.msra.mxu0 %v812
        %879 = vmatpush.bf16.msra.mxu0 %v808
        %880 = vmatmul.bf16.gmra.mxu0 %v679
        %v881 = vpop.f32.mrf.mxu0
        %v882 = vadd.f32 0.0, %v881
        %v883 = vpop.f32.mrf.mxu0
        %884 = vdwg.mxu0
        %885 = vmatpush.bf16.msra.mxu0 %v837
        %886 = vmatpush.bf16.msra.mxu0 %v833
        %887 = vmatpush.bf16.msra.mxu0 %v829
        %888 = vmatpush.bf16.msra.mxu0 %v825
        %889 = vmatpush.bf16.msra.mxu0 %v821
        %890 = vmatpush.bf16.msra.mxu0 %v817
        %891 = vmatpush.bf16.msra.mxu0 %v813
        %892 = vmatpush.bf16.msra.mxu0 %v809
        %893 = vmatmul.bf16.gmra.mxu0 %v679
        %v894 = vpop.f32.mrf.mxu0
        %v895 = vadd.f32 0.0, %v894
        %v896 = vpop.f32.mrf.mxu0
        %897 = vdwg.mxu0
        %898 = vmatpush.bf16.msra.mxu0 %v838
        %899 = vmatpush.bf16.msra.mxu0 %v834
        %900 = vmatpush.bf16.msra.mxu0 %v830
        %901 = vmatpush.bf16.msra.mxu0 %v826
        %902 = vmatpush.bf16.msra.mxu0 %v822
        %903 = vmatpush.bf16.msra.mxu0 %v818
        %904 = vmatpush.bf16.msra.mxu0 %v814
        %905 = vmatpush.bf16.msra.mxu0 %v810
        %906 = vmatmul.bf16.gmra.mxu0 %v679
        %v907 = vpop.f32.mrf.mxu0
        %v908 = vadd.f32 0.0, %v907
        %v909 = vpop.f32.mrf.mxu0
        %910 = vdwg.mxu0
        %911 = vmatpush.bf16.msra.mxu0 %v839
        %912 = vmatpush.bf16.msra.mxu0 %v835
        %913 = vmatpush.bf16.msra.mxu0 %v831
        %914 = vmatpush.bf16.msra.mxu0 %v827
        %915 = vmatpush.bf16.msra.mxu0 %v823
        %916 = vmatpush.bf16.msra.mxu0 %v819
        %917 = vmatpush.bf16.msra.mxu0 %v815
        %918 = vmatpush.bf16.msra.mxu0 %v811
        %919 = vmatmul.bf16.gmra.mxu0 %v679
        %v920 = vpop.f32.mrf.mxu0
        %v921 = vadd.f32 0.0, %v920
        %v922 = vpop.f32.mrf.mxu0
        %923 = vdwg.mxu0
        %v924 = vadd.f32 %v675, %v882
        %v925 = vadd.f32 %v676, %v895
        %v926 = vadd.f32 %v677, %v908
        %v927 = vadd.f32 %v678, %v921
        %v928 = vmul.f32 %v924, 0.5
        %v929 = vmul.f32 %v925, 0.5
        %v930 = vmul.f32 %v926, 0.5
        %v931 = vtanh.pop %v928
        %v932 = vtanh.pop %v929
        %v933 = vtanh.pop %v930
        %v934 = vadd.f32 %v931, 1.0
        %v935 = vadd.f32 %v932, 1.0
        %v936 = vadd.f32 %v933, 1.0
        %v937 = vmul.f32 %v934, 0.5
        %v938 = vmul.f32 %v935, 0.5
        %v939 = vmul.f32 %v936, 0.5
        %v940 = vtanh.pop %v927
        %v941 = vmul.f32 %v938, %v674
        %v942 = vmul.f32 %v937, %v940
        %v943 = vadd.f32 %v941, %v942
        %v944 = vtanh.pop %v943
        %v945 = vmul.f32 %v939, %v944
        %v946 = vpack.c.bf16 %v945, %v945
        %947 = vst [vmem:[%s282] sm:$0xf] %v946
        %s948 = scalar_lea.vmem [#allocation4], 32
        %v949 = vld [vmem:[%s948] sm:$0xff]
        %v950 = vld [vmem:[%s948 + $0x8] sm:$0xff]
        %v951 = vld [vmem:[%s948 + $0x10] sm:$0xff]
        %v952 = vld [vmem:[%s948 + $0x18] sm:$0xff]
        %v953 = vld [vmem:[#allocation10] sm:$0xff]
        %v954 = vld [vmem:[#allocation10 + $0x8] sm:$0xff]
        %v955 = vld [vmem:[#allocation10 + $0x10] sm:$0xff]
        %v956 = vld [vmem:[#allocation10 + $0x18] sm:$0xff]
        %v957 = vld [vmem:[#allocation10 + $0x20] sm:$0xff]
        %v958 = vld [vmem:[#allocation10 + $0x28] sm:$0xff]
        %v959 = vld [vmem:[#allocation10 + $0x30] sm:$0xff]
        %v960 = vld [vmem:[#allocation10 + $0x38] sm:$0xff]
        %v961 = vld [vmem:[#allocation10 + $0x40] sm:$0xff]
        %v962 = vld [vmem:[#allocation10 + $0x48] sm:$0xff]
        %v963 = vld [vmem:[#allocation10 + $0x50] sm:$0xff]
        %v964 = vld [vmem:[#allocation10 + $0x58] sm:$0xff]
        %v965 = vld [vmem:[#allocation10 + $0x60] sm:$0xff]
        %v966 = vld [vmem:[#allocation10 + $0x68] sm:$0xff]
        %v967 = vld [vmem:[#allocation10 + $0x70] sm:$0xff]
        %v968 = vld [vmem:[#allocation10 + $0x78] sm:$0xff]
        %v969 = vld [vmem:[#allocation10 + $0x80] sm:$0xff]
        %v970 = vld [vmem:[#allocation10 + $0x88] sm:$0xff]
        %v971 = vld [vmem:[#allocation10 + $0x90] sm:$0xff]
        %v972 = vld [vmem:[#allocation10 + $0x98] sm:$0xff]
        %v973 = vld [vmem:[#allocation10 + $0xa0] sm:$0xff]
        %v974 = vld [vmem:[#allocation10 + $0xa8] sm:$0xff]
        %v975 = vld [vmem:[#allocation10 + $0xb0] sm:$0xff]
        %v976 = vld [vmem:[#allocation10 + $0xb8] sm:$0xff]
        %v977 = vld [vmem:[#allocation10 + $0xc0] sm:$0xff]
        %v978 = vld [vmem:[#allocation10 + $0xc8] sm:$0xff]
        %v979 = vld [vmem:[#allocation10 + $0xd0] sm:$0xff]
        %v980 = vld [vmem:[#allocation10 + $0xd8] sm:$0xff]
        %v981 = vld [vmem:[#allocation10 + $0xe0] sm:$0xff]
        %v982 = vld [vmem:[#allocation10 + $0xe8] sm:$0xff]
        %v983 = vld [vmem:[#allocation10 + $0xf0] sm:$0xff]
        %v984 = vld [vmem:[#allocation10 + $0xf8] sm:$0xff]
        %v1017 = vunpack.c.l.b16 %v953
        %v1018 = vunpack.c.h.b16 %v953
        %v1019 = vunpack.c.l.b16 %v954
        %v1020 = vunpack.c.h.b16 %v954
        %v1021 = vunpack.c.l.b16 %v955
        %v1022 = vunpack.c.h.b16 %v955
        %v1023 = vunpack.c.l.b16 %v956
        %v1024 = vunpack.c.h.b16 %v956
        %v1025 = vunpack.c.l.b16 %v957
        %v1026 = vunpack.c.h.b16 %v957
        %v1027 = vunpack.c.l.b16 %v958
        %v1028 = vunpack.c.h.b16 %v958
        %v1029 = vunpack.c.l.b16 %v959
        %v1030 = vunpack.c.h.b16 %v959
        %v1031 = vunpack.c.l.b16 %v960
        %v1032 = vunpack.c.h.b16 %v960
        %v1033 = vunpack.c.l.b16 %v961
        %v1034 = vunpack.c.h.b16 %v961
        %v1035 = vunpack.c.l.b16 %v962
        %v1036 = vunpack.c.h.b16 %v962
        %v1037 = vunpack.c.l.b16 %v963
        %v1038 = vunpack.c.h.b16 %v963
        %v1039 = vunpack.c.l.b16 %v964
        %v1040 = vunpack.c.h.b16 %v964
        %v1041 = vunpack.c.l.b16 %v965
        %v1042 = vunpack.c.h.b16 %v965
        %v1043 = vunpack.c.l.b16 %v966
        %v1044 = vunpack.c.h.b16 %v966
        %v1045 = vunpack.c.l.b16 %v967
        %v1046 = vunpack.c.h.b16 %v967
        %v1047 = vunpack.c.l.b16 %v968
        %v1048 = vunpack.c.h.b16 %v968
        %v1049 = vunpack.c.l.b16 %v969
        %v1050 = vunpack.c.h.b16 %v969
        %v1051 = vunpack.c.l.b16 %v970
        %v1052 = vunpack.c.h.b16 %v970
        %v1053 = vunpack.c.l.b16 %v971
        %v1054 = vunpack.c.h.b16 %v971
        %v1055 = vunpack.c.l.b16 %v972
        %v1056 = vunpack.c.h.b16 %v972
        %v1057 = vunpack.c.l.b16 %v973
        %v1058 = vunpack.c.h.b16 %v973
        %v1059 = vunpack.c.l.b16 %v974
        %v1060 = vunpack.c.h.b16 %v974
        %v1061 = vunpack.c.l.b16 %v975
        %v1062 = vunpack.c.h.b16 %v975
        %v1063 = vunpack.c.l.b16 %v976
        %v1064 = vunpack.c.h.b16 %v976
        %v1065 = vunpack.c.l.b16 %v977
        %v1066 = vunpack.c.h.b16 %v977
        %v1067 = vunpack.c.l.b16 %v978
        %v1068 = vunpack.c.h.b16 %v978
        %v1069 = vunpack.c.l.b16 %v979
        %v1070 = vunpack.c.h.b16 %v979
        %v1071 = vunpack.c.l.b16 %v980
        %v1072 = vunpack.c.h.b16 %v980
        %v1073 = vunpack.c.l.b16 %v981
        %v1074 = vunpack.c.h.b16 %v981
        %v1075 = vunpack.c.l.b16 %v982
        %v1076 = vunpack.c.h.b16 %v982
        %v1077 = vunpack.c.l.b16 %v983
        %v1078 = vunpack.c.h.b16 %v983
        %v1079 = vunpack.c.l.b16 %v984
        %v1080 = vunpack.c.h.b16 %v984
        %v1081 = vpack.c.b16 %v1021, %v1017
        %v1082 = vpack.c.b16 %v1022, %v1018
        %v1083 = vpack.c.b16 %v1023, %v1019
        %v1084 = vpack.c.b16 %v1024, %v1020
        %v1085 = vpack.c.b16 %v1029, %v1025
        %v1086 = vpack.c.b16 %v1030, %v1026
        %v1087 = vpack.c.b16 %v1031, %v1027
        %v1088 = vpack.c.b16 %v1032, %v1028
        %v1089 = vpack.c.b16 %v1037, %v1033
        %v1090 = vpack.c.b16 %v1038, %v1034
        %v1091 = vpack.c.b16 %v1039, %v1035
        %v1092 = vpack.c.b16 %v1040, %v1036
        %v1093 = vpack.c.b16 %v1045, %v1041
        %v1094 = vpack.c.b16 %v1046, %v1042
        %v1095 = vpack.c.b16 %v1047, %v1043
        %v1096 = vpack.c.b16 %v1048, %v1044
        %v1097 = vpack.c.b16 %v1053, %v1049
        %v1098 = vpack.c.b16 %v1054, %v1050
        %v1099 = vpack.c.b16 %v1055, %v1051
        %v1100 = vpack.c.b16 %v1056, %v1052
        %v1101 = vpack.c.b16 %v1061, %v1057
        %v1102 = vpack.c.b16 %v1062, %v1058
        %v1103 = vpack.c.b16 %v1063, %v1059
        %v1104 = vpack.c.b16 %v1064, %v1060
        %v1105 = vpack.c.b16 %v1069, %v1065
        %v1106 = vpack.c.b16 %v1070, %v1066
        %v1107 = vpack.c.b16 %v1071, %v1067
        %v1108 = vpack.c.b16 %v1072, %v1068
        %v1109 = vpack.c.b16 %v1077, %v1073
        %v1110 = vpack.c.b16 %v1078, %v1074
        %v1111 = vpack.c.b16 %v1079, %v1075
        %v1112 = vpack.c.b16 %v1080, %v1076
        %1145 = vmatpush.bf16.msra.mxu0 %v1109
        %1146 = vmatpush.bf16.msra.mxu0 %v1105
        %1147 = vmatpush.bf16.msra.mxu0 %v1101
        %1148 = vmatpush.bf16.msra.mxu0 %v1097
        %1149 = vmatpush.bf16.msra.mxu0 %v1093
        %1150 = vmatpush.bf16.msra.mxu0 %v1089
        %1151 = vmatpush.bf16.msra.mxu0 %v1085
        %1152 = vmatpush.bf16.msra.mxu0 %v1081
        %1153 = vmatmul.bf16.gmra.mxu0 %v946
        %v1154 = vpop.f32.mrf.mxu0
        %v1155 = vadd.f32 0.0, %v1154
        %v1156 = vpop.f32.mrf.mxu0
        %1157 = vdwg.mxu0
        %1158 = vmatpush.bf16.msra.mxu0 %v1110
        %1159 = vmatpush.bf16.msra.mxu0 %v1106
        %1160 = vmatpush.bf16.msra.mxu0 %v1102
        %1161 = vmatpush.bf16.msra.mxu0 %v1098
        %1162 = vmatpush.bf16.msra.mxu0 %v1094
        %1163 = vmatpush.bf16.msra.mxu0 %v1090
        %1164 = vmatpush.bf16.msra.mxu0 %v1086
        %1165 = vmatpush.bf16.msra.mxu0 %v1082
        %1166 = vmatmul.bf16.gmra.mxu0 %v946
        %v1167 = vpop.f32.mrf.mxu0
        %v1168 = vadd.f32 0.0, %v1167
        %v1169 = vpop.f32.mrf.mxu0
        %1170 = vdwg.mxu0
        %1171 = vmatpush.bf16.msra.mxu0 %v1111
        %1172 = vmatpush.bf16.msra.mxu0 %v1107
        %1173 = vmatpush.bf16.msra.mxu0 %v1103
        %1174 = vmatpush.bf16.msra.mxu0 %v1099
        %1175 = vmatpush.bf16.msra.mxu0 %v1095
        %1176 = vmatpush.bf16.msra.mxu0 %v1091
        %1177 = vmatpush.bf16.msra.mxu0 %v1087
        %1178 = vmatpush.bf16.msra.mxu0 %v1083
        %1179 = vmatmul.bf16.gmra.mxu0 %v946
        %v1180 = vpop.f32.mrf.mxu0
        %v1181 = vadd.f32 0.0, %v1180
        %v1182 = vpop.f32.mrf.mxu0
        %1183 = vdwg.mxu0
        %1184 = vmatpush.bf16.msra.mxu0 %v1112
        %1185 = vmatpush.bf16.msra.mxu0 %v1108
        %1186 = vmatpush.bf16.msra.mxu0 %v1104
        %1187 = vmatpush.bf16.msra.mxu0 %v1100
        %1188 = vmatpush.bf16.msra.mxu0 %v1096
        %1189 = vmatpush.bf16.msra.mxu0 %v1092
        %1190 = vmatpush.bf16.msra.mxu0 %v1088
        %1191 = vmatpush.bf16.msra.mxu0 %v1084
        %1192 = vmatmul.bf16.gmra.mxu0 %v946
        %v1193 = vpop.f32.mrf.mxu0
        %v1194 = vadd.f32 0.0, %v1193
        %v1195 = vpop.f32.mrf.mxu0
        %1196 = vdwg.mxu0
        %v1197 = vadd.f32 %v949, %v1155
        %v1198 = vadd.f32 %v950, %v1168
        %v1199 = vadd.f32 %v951, %v1181
        %v1200 = vadd.f32 %v952, %v1194
        %v1201 = vmul.f32 %v1197, 0.5
        %v1202 = vmul.f32 %v1198, 0.5
        %v1203 = vmul.f32 %v1199, 0.5
        %v1204 = vtanh.pop %v1201
        %v1205 = vtanh.pop %v1202
        %v1206 = vtanh.pop %v1203
        %v1207 = vadd.f32 %v1204, 1.0
        %v1208 = vadd.f32 %v1205, 1.0
        %v1209 = vadd.f32 %v1206, 1.0
        %v1210 = vmul.f32 %v1207, 0.5
        %v1211 = vmul.f32 %v1208, 0.5
        %v1212 = vmul.f32 %v1209, 0.5
        %v1213 = vtanh.pop %v1200
        %v1214 = vmul.f32 %v1211, %v943
        %v1215 = vmul.f32 %v1210, %v1213
        %v1216 = vadd.f32 %v1214, %v1215
        %v1217 = vtanh.pop %v1216
        %v1218 = vmul.f32 %v1212, %v1217
        %v1219 = vpack.c.bf16 %v1218, %v1218
        %s1220 = scalar_lea.vmem %s282, 4 [#allocation13]
        %1221 = vst [vmem:[%s1220] sm:$0xf] %v1219
        %s1222 = scalar_lea.vmem [#allocation4], 64
        %v1223 = vld [vmem:[%s1222] sm:$0xff]
        %v1224 = vld [vmem:[%s1222 + $0x8] sm:$0xff]
        %v1225 = vld [vmem:[%s1222 + $0x10] sm:$0xff]
        %v1226 = vld [vmem:[%s1222 + $0x18] sm:$0xff]
        %v1227 = vld [vmem:[#allocation10] sm:$0xff]
        %v1228 = vld [vmem:[#allocation10 + $0x8] sm:$0xff]
        %v1229 = vld [vmem:[#allocation10 + $0x10] sm:$0xff]
        %v1230 = vld [vmem:[#allocation10 + $0x18] sm:$0xff]
        %v1231 = vld [vmem:[#allocation10 + $0x20] sm:$0xff]
        %v1232 = vld [vmem:[#allocation10 + $0x28] sm:$0xff]
        %v1233 = vld [vmem:[#allocation10 + $0x30] sm:$0xff]
        %v1234 = vld [vmem:[#allocation10 + $0x38] sm:$0xff]
        %v1235 = vld [vmem:[#allocation10 + $0x40] sm:$0xff]
        %v1236 = vld [vmem:[#allocation10 + $0x48] sm:$0xff]
        %v1237 = vld [vmem:[#allocation10 + $0x50] sm:$0xff]
        %v1238 = vld [vmem:[#allocation10 + $0x58] sm:$0xff]
        %v1239 = vld [vmem:[#allocation10 + $0x60] sm:$0xff]
        %v1240 = vld [vmem:[#allocation10 + $0x68] sm:$0xff]
        %v1241 = vld [vmem:[#allocation10 + $0x70] sm:$0xff]
        %v1242 = vld [vmem:[#allocation10 + $0x78] sm:$0xff]
        %v1243 = vld [vmem:[#allocation10 + $0x80] sm:$0xff]
        %v1244 = vld [vmem:[#allocation10 + $0x88] sm:$0xff]
        %v1245 = vld [vmem:[#allocation10 + $0x90] sm:$0xff]
        %v1246 = vld [vmem:[#allocation10 + $0x98] sm:$0xff]
        %v1247 = vld [vmem:[#allocation10 + $0xa0] sm:$0xff]
        %v1248 = vld [vmem:[#allocation10 + $0xa8] sm:$0xff]
        %v1249 = vld [vmem:[#allocation10 + $0xb0] sm:$0xff]
        %v1250 = vld [vmem:[#allocation10 + $0xb8] sm:$0xff]
        %v1251 = vld [vmem:[#allocation10 + $0xc0] sm:$0xff]
        %v1252 = vld [vmem:[#allocation10 + $0xc8] sm:$0xff]
        %v1253 = vld [vmem:[#allocation10 + $0xd0] sm:$0xff]
        %v1254 = vld [vmem:[#allocation10 + $0xd8] sm:$0xff]
        %v1255 = vld [vmem:[#allocation10 + $0xe0] sm:$0xff]
        %v1256 = vld [vmem:[#allocation10 + $0xe8] sm:$0xff]
        %v1257 = vld [vmem:[#allocation10 + $0xf0] sm:$0xff]
        %v1258 = vld [vmem:[#allocation10 + $0xf8] sm:$0xff]
        %v1291 = vunpack.c.l.b16 %v1227
        %v1292 = vunpack.c.h.b16 %v1227
        %v1293 = vunpack.c.l.b16 %v1228
        %v1294 = vunpack.c.h.b16 %v1228
        %v1295 = vunpack.c.l.b16 %v1229
        %v1296 = vunpack.c.h.b16 %v1229
        %v1297 = vunpack.c.l.b16 %v1230
        %v1298 = vunpack.c.h.b16 %v1230
        %v1299 = vunpack.c.l.b16 %v1231
        %v1300 = vunpack.c.h.b16 %v1231
        %v1301 = vunpack.c.l.b16 %v1232
        %v1302 = vunpack.c.h.b16 %v1232
        %v1303 = vunpack.c.l.b16 %v1233
        %v1304 = vunpack.c.h.b16 %v1233
        %v1305 = vunpack.c.l.b16 %v1234
        %v1306 = vunpack.c.h.b16 %v1234
        %v1307 = vunpack.c.l.b16 %v1235
        %v1308 = vunpack.c.h.b16 %v1235
        %v1309 = vunpack.c.l.b16 %v1236
        %v1310 = vunpack.c.h.b16 %v1236
        %v1311 = vunpack.c.l.b16 %v1237
        %v1312 = vunpack.c.h.b16 %v1237
        %v1313 = vunpack.c.l.b16 %v1238
        %v1314 = vunpack.c.h.b16 %v1238
        %v1315 = vunpack.c.l.b16 %v1239
        %v1316 = vunpack.c.h.b16 %v1239
        %v1317 = vunpack.c.l.b16 %v1240
        %v1318 = vunpack.c.h.b16 %v1240
        %v1319 = vunpack.c.l.b16 %v1241
        %v1320 = vunpack.c.h.b16 %v1241
        %v1321 = vunpack.c.l.b16 %v1242
        %v1322 = vunpack.c.h.b16 %v1242
        %v1323 = vunpack.c.l.b16 %v1243
        %v1324 = vunpack.c.h.b16 %v1243
        %v1325 = vunpack.c.l.b16 %v1244
        %v1326 = vunpack.c.h.b16 %v1244
        %v1327 = vunpack.c.l.b16 %v1245
        %v1328 = vunpack.c.h.b16 %v1245
        %v1329 = vunpack.c.l.b16 %v1246
        %v1330 = vunpack.c.h.b16 %v1246
        %v1331 = vunpack.c.l.b16 %v1247
        %v1332 = vunpack.c.h.b16 %v1247
        %v1333 = vunpack.c.l.b16 %v1248
        %v1334 = vunpack.c.h.b16 %v1248
        %v1335 = vunpack.c.l.b16 %v1249
        %v1336 = vunpack.c.h.b16 %v1249
        %v1337 = vunpack.c.l.b16 %v1250
        %v1338 = vunpack.c.h.b16 %v1250
        %v1339 = vunpack.c.l.b16 %v1251
        %v1340 = vunpack.c.h.b16 %v1251
        %v1341 = vunpack.c.l.b16 %v1252
        %v1342 = vunpack.c.h.b16 %v1252
        %v1343 = vunpack.c.l.b16 %v1253
        %v1344 = vunpack.c.h.b16 %v1253
        %v1345 = vunpack.c.l.b16 %v1254
        %v1346 = vunpack.c.h.b16 %v1254
        %v1347 = vunpack.c.l.b16 %v1255
        %v1348 = vunpack.c.h.b16 %v1255
        %v1349 = vunpack.c.l.b16 %v1256
        %v1350 = vunpack.c.h.b16 %v1256
        %v1351 = vunpack.c.l.b16 %v1257
        %v1352 = vunpack.c.h.b16 %v1257
        %v1353 = vunpack.c.l.b16 %v1258
        %v1354 = vunpack.c.h.b16 %v1258
        %v1355 = vpack.c.b16 %v1295, %v1291
        %v1356 = vpack.c.b16 %v1296, %v1292
        %v1357 = vpack.c.b16 %v1297, %v1293
        %v1358 = vpack.c.b16 %v1298, %v1294
        %v1359 = vpack.c.b16 %v1303, %v1299
        %v1360 = vpack.c.b16 %v1304, %v1300
        %v1361 = vpack.c.b16 %v1305, %v1301
        %v1362 = vpack.c.b16 %v1306, %v1302
        %v1363 = vpack.c.b16 %v1311, %v1307
        %v1364 = vpack.c.b16 %v1312, %v1308
        %v1365 = vpack.c.b16 %v1313, %v1309
        %v1366 = vpack.c.b16 %v1314, %v1310
        %v1367 = vpack.c.b16 %v1319, %v1315
        %v1368 = vpack.c.b16 %v1320, %v1316
        %v1369 = vpack.c.b16 %v1321, %v1317
        %v1370 = vpack.c.b16 %v1322, %v1318
        %v1371 = vpack.c.b16 %v1327, %v1323
        %v1372 = vpack.c.b16 %v1328, %v1324
        %v1373 = vpack.c.b16 %v1329, %v1325
        %v1374 = vpack.c.b16 %v1330, %v1326
        %v1375 = vpack.c.b16 %v1335, %v1331
        %v1376 = vpack.c.b16 %v1336, %v1332
        %v1377 = vpack.c.b16 %v1337, %v1333
        %v1378 = vpack.c.b16 %v1338, %v1334
        %v1379 = vpack.c.b16 %v1343, %v1339
        %v1380 = vpack.c.b16 %v1344, %v1340
        %v1381 = vpack.c.b16 %v1345, %v1341
        %v1382 = vpack.c.b16 %v1346, %v1342
        %v1383 = vpack.c.b16 %v1351, %v1347
        %v1384 = vpack.c.b16 %v1352, %v1348
        %v1385 = vpack.c.b16 %v1353, %v1349
        %v1386 = vpack.c.b16 %v1354, %v1350
        %1419 = vmatpush.bf16.msra.mxu0 %v1383
        %1420 = vmatpush.bf16.msra.mxu0 %v1379
        %1421 = vmatpush.bf16.msra.mxu0 %v1375
        %1422 = vmatpush.bf16.msra.mxu0 %v1371
        %1423 = vmatpush.bf16.msra.mxu0 %v1367
        %1424 = vmatpush.bf16.msra.mxu0 %v1363
        %1425 = vmatpush.bf16.msra.mxu0 %v1359
        %1426 = vmatpush.bf16.msra.mxu0 %v1355
        %1427 = vmatmul.bf16.gmra.mxu0 %v1219
        %v1428 = vpop.f32.mrf.mxu0
        %v1429 = vadd.f32 0.0, %v1428
        %v1430 = vpop.f32.mrf.mxu0
        %1431 = vdwg.mxu0
        %1432 = vmatpush.bf16.msra.mxu0 %v1384
        %1433 = vmatpush.bf16.msra.mxu0 %v1380
        %1434 = vmatpush.bf16.msra.mxu0 %v1376
        %1435 = vmatpush.bf16.msra.mxu0 %v1372
        %1436 = vmatpush.bf16.msra.mxu0 %v1368
        %1437 = vmatpush.bf16.msra.mxu0 %v1364
        %1438 = vmatpush.bf16.msra.mxu0 %v1360
        %1439 = vmatpush.bf16.msra.mxu0 %v1356
        %1440 = vmatmul.bf16.gmra.mxu0 %v1219
        %v1441 = vpop.f32.mrf.mxu0
        %v1442 = vadd.f32 0.0, %v1441
        %v1443 = vpop.f32.mrf.mxu0
        %1444 = vdwg.mxu0
        %1445 = vmatpush.bf16.msra.mxu0 %v1385
        %1446 = vmatpush.bf16.msra.mxu0 %v1381
        %1447 = vmatpush.bf16.msra.mxu0 %v1377
        %1448 = vmatpush.bf16.msra.mxu0 %v1373
        %1449 = vmatpush.bf16.msra.mxu0 %v1369
        %1450 = vmatpush.bf16.msra.mxu0 %v1365
        %1451 = vmatpush.bf16.msra.mxu0 %v1361
        %1452 = vmatpush.bf16.msra.mxu0 %v1357
        %1453 = vmatmul.bf16.gmra.mxu0 %v1219
        %v1454 = vpop.f32.mrf.mxu0
        %v1455 = vadd.f32 0.0, %v1454
        %v1456 = vpop.f32.mrf.mxu0
        %1457 = vdwg.mxu0
        %1458 = vmatpush.bf16.msra.mxu0 %v1386
        %1459 = vmatpush.bf16.msra.mxu0 %v1382
        %1460 = vmatpush.bf16.msra.mxu0 %v1378
        %1461 = vmatpush.bf16.msra.mxu0 %v1374
        %1462 = vmatpush.bf16.msra.mxu0 %v1370
        %1463 = vmatpush.bf16.msra.mxu0 %v1366
        %1464 = vmatpush.bf16.msra.mxu0 %v1362
        %1465 = vmatpush.bf16.msra.mxu0 %v1358
        %1466 = vmatmul.bf16.gmra.mxu0 %v1219
        %v1467 = vpop.f32.mrf.mxu0
        %v1468 = vadd.f32 0.0, %v1467
        %v1469 = vpop.f32.mrf.mxu0
        %1470 = vdwg.mxu0
        %v1471 = vadd.f32 %v1223, %v1429
        %v1472 = vadd.f32 %v1224, %v1442
        %v1473 = vadd.f32 %v1225, %v1455
        %v1474 = vadd.f32 %v1226, %v1468
        %v1475 = vmul.f32 %v1471, 0.5
        %v1476 = vmul.f32 %v1472, 0.5
        %v1477 = vmul.f32 %v1473, 0.5
        %v1478 = vtanh.pop %v1475
        %v1479 = vtanh.pop %v1476
        %v1480 = vtanh.pop %v1477
        %v1481 = vadd.f32 %v1478, 1.0
        %v1482 = vadd.f32 %v1479, 1.0
        %v1483 = vadd.f32 %v1480, 1.0
        %v1484 = vmul.f32 %v1481, 0.5
        %v1485 = vmul.f32 %v1482, 0.5
        %v1486 = vmul.f32 %v1483, 0.5
        %v1487 = vtanh.pop %v1474
        %v1488 = vmul.f32 %v1485, %v1216
        %v1489 = vmul.f32 %v1484, %v1487
        %v1490 = vadd.f32 %v1488, %v1489
        %v1491 = vtanh.pop %v1490
        %v1492 = vmul.f32 %v1486, %v1491
        %v1493 = vpack.c.bf16 %v1492, %v1492
        %s1494 = scalar_lea.vmem %s282, 8 [#allocation13]
        %1495 = vst [vmem:[%s1494] sm:$0xf] %v1493
        %s1496 = scalar_lea.vmem [#allocation4], 96
        %v1497 = vld [vmem:[%s1496] sm:$0xff]
        %v1498 = vld [vmem:[%s1496 + $0x8] sm:$0xff]
        %v1499 = vld [vmem:[%s1496 + $0x10] sm:$0xff]
        %v1500 = vld [vmem:[%s1496 + $0x18] sm:$0xff]
        %v1501 = vld [vmem:[#allocation10] sm:$0xff]
        %v1502 = vld [vmem:[#allocation10 + $0x8] sm:$0xff]
        %v1503 = vld [vmem:[#allocation10 + $0x10] sm:$0xff]
        %v1504 = vld [vmem:[#allocation10 + $0x18] sm:$0xff]
        %v1505 = vld [vmem:[#allocation10 + $0x20] sm:$0xff]
        %v1506 = vld [vmem:[#allocation10 + $0x28] sm:$0xff]
        %v1507 = vld [vmem:[#allocation10 + $0x30] sm:$0xff]
        %v1508 = vld [vmem:[#allocation10 + $0x38] sm:$0xff]
        %v1509 = vld [vmem:[#allocation10 + $0x40] sm:$0xff]
        %v1510 = vld [vmem:[#allocation10 + $0x48] sm:$0xff]
        %v1511 = vld [vmem:[#allocation10 + $0x50] sm:$0xff]
        %v1512 = vld [vmem:[#allocation10 + $0x58] sm:$0xff]
        %v1513 = vld [vmem:[#allocation10 + $0x60] sm:$0xff]
        %v1514 = vld [vmem:[#allocation10 + $0x68] sm:$0xff]
        %v1515 = vld [vmem:[#allocation10 + $0x70] sm:$0xff]
        %v1516 = vld [vmem:[#allocation10 + $0x78] sm:$0xff]
        %v1517 = vld [vmem:[#allocation10 + $0x80] sm:$0xff]
        %v1518 = vld [vmem:[#allocation10 + $0x88] sm:$0xff]
        %v1519 = vld [vmem:[#allocation10 + $0x90] sm:$0xff]
        %v1520 = vld [vmem:[#allocation10 + $0x98] sm:$0xff]
        %v1521 = vld [vmem:[#allocation10 + $0xa0] sm:$0xff]
        %v1522 = vld [vmem:[#allocation10 + $0xa8] sm:$0xff]
        %v1523 = vld [vmem:[#allocation10 + $0xb0] sm:$0xff]
        %v1524 = vld [vmem:[#allocation10 + $0xb8] sm:$0xff]
        %v1525 = vld [vmem:[#allocation10 + $0xc0] sm:$0xff]
        %v1526 = vld [vmem:[#allocation10 + $0xc8] sm:$0xff]
        %v1527 = vld [vmem:[#allocation10 + $0xd0] sm:$0xff]
        %v1528 = vld [vmem:[#allocation10 + $0xd8] sm:$0xff]
        %v1529 = vld [vmem:[#allocation10 + $0xe0] sm:$0xff]
        %v1530 = vld [vmem:[#allocation10 + $0xe8] sm:$0xff]
        %v1531 = vld [vmem:[#allocation10 + $0xf0] sm:$0xff]
        %v1532 = vld [vmem:[#allocation10 + $0xf8] sm:$0xff]
        %v1565 = vunpack.c.l.b16 %v1501
        %v1566 = vunpack.c.h.b16 %v1501
        %v1567 = vunpack.c.l.b16 %v1502
        %v1568 = vunpack.c.h.b16 %v1502
        %v1569 = vunpack.c.l.b16 %v1503
        %v1570 = vunpack.c.h.b16 %v1503
        %v1571 = vunpack.c.l.b16 %v1504
        %v1572 = vunpack.c.h.b16 %v1504
        %v1573 = vunpack.c.l.b16 %v1505
        %v1574 = vunpack.c.h.b16 %v1505
        %v1575 = vunpack.c.l.b16 %v1506
        %v1576 = vunpack.c.h.b16 %v1506
        %v1577 = vunpack.c.l.b16 %v1507
        %v1578 = vunpack.c.h.b16 %v1507
        %v1579 = vunpack.c.l.b16 %v1508
        %v1580 = vunpack.c.h.b16 %v1508
        %v1581 = vunpack.c.l.b16 %v1509
        %v1582 = vunpack.c.h.b16 %v1509
        %v1583 = vunpack.c.l.b16 %v1510
        %v1584 = vunpack.c.h.b16 %v1510
        %v1585 = vunpack.c.l.b16 %v1511
        %v1586 = vunpack.c.h.b16 %v1511
        %v1587 = vunpack.c.l.b16 %v1512
        %v1588 = vunpack.c.h.b16 %v1512
        %v1589 = vunpack.c.l.b16 %v1513
        %v1590 = vunpack.c.h.b16 %v1513
        %v1591 = vunpack.c.l.b16 %v1514
        %v1592 = vunpack.c.h.b16 %v1514
        %v1593 = vunpack.c.l.b16 %v1515
        %v1594 = vunpack.c.h.b16 %v1515
        %v1595 = vunpack.c.l.b16 %v1516
        %v1596 = vunpack.c.h.b16 %v1516
        %v1597 = vunpack.c.l.b16 %v1517
        %v1598 = vunpack.c.h.b16 %v1517
        %v1599 = vunpack.c.l.b16 %v1518
        %v1600 = vunpack.c.h.b16 %v1518
        %v1601 = vunpack.c.l.b16 %v1519
        %v1602 = vunpack.c.h.b16 %v1519
        %v1603 = vunpack.c.l.b16 %v1520
        %v1604 = vunpack.c.h.b16 %v1520
        %v1605 = vunpack.c.l.b16 %v1521
        %v1606 = vunpack.c.h.b16 %v1521
        %v1607 = vunpack.c.l.b16 %v1522
        %v1608 = vunpack.c.h.b16 %v1522
        %v1609 = vunpack.c.l.b16 %v1523
        %v1610 = vunpack.c.h.b16 %v1523
        %v1611 = vunpack.c.l.b16 %v1524
        %v1612 = vunpack.c.h.b16 %v1524
        %v1613 = vunpack.c.l.b16 %v1525
        %v1614 = vunpack.c.h.b16 %v1525
        %v1615 = vunpack.c.l.b16 %v1526
        %v1616 = vunpack.c.h.b16 %v1526
        %v1617 = vunpack.c.l.b16 %v1527
        %v1618 = vunpack.c.h.b16 %v1527
        %v1619 = vunpack.c.l.b16 %v1528
        %v1620 = vunpack.c.h.b16 %v1528
        %v1621 = vunpack.c.l.b16 %v1529
        %v1622 = vunpack.c.h.b16 %v1529
        %v1623 = vunpack.c.l.b16 %v1530
        %v1624 = vunpack.c.h.b16 %v1530
        %v1625 = vunpack.c.l.b16 %v1531
        %v1626 = vunpack.c.h.b16 %v1531
        %v1627 = vunpack.c.l.b16 %v1532
        %v1628 = vunpack.c.h.b16 %v1532
        %v1629 = vpack.c.b16 %v1569, %v1565
        %v1630 = vpack.c.b16 %v1570, %v1566
        %v1631 = vpack.c.b16 %v1571, %v1567
        %v1632 = vpack.c.b16 %v1572, %v1568
        %v1633 = vpack.c.b16 %v1577, %v1573
        %v1634 = vpack.c.b16 %v1578, %v1574
        %v1635 = vpack.c.b16 %v1579, %v1575
        %v1636 = vpack.c.b16 %v1580, %v1576
        %v1637 = vpack.c.b16 %v1585, %v1581
        %v1638 = vpack.c.b16 %v1586, %v1582
        %v1639 = vpack.c.b16 %v1587, %v1583
        %v1640 = vpack.c.b16 %v1588, %v1584
        %v1641 = vpack.c.b16 %v1593, %v1589
        %v1642 = vpack.c.b16 %v1594, %v1590
        %v1643 = vpack.c.b16 %v1595, %v1591
        %v1644 = vpack.c.b16 %v1596, %v1592
        %v1645 = vpack.c.b16 %v1601, %v1597
        %v1646 = vpack.c.b16 %v1602, %v1598
        %v1647 = vpack.c.b16 %v1603, %v1599
        %v1648 = vpack.c.b16 %v1604, %v1600
        %v1649 = vpack.c.b16 %v1609, %v1605
        %v1650 = vpack.c.b16 %v1610, %v1606
        %v1651 = vpack.c.b16 %v1611, %v1607
        %v1652 = vpack.c.b16 %v1612, %v1608
        %v1653 = vpack.c.b16 %v1617, %v1613
        %v1654 = vpack.c.b16 %v1618, %v1614
        %v1655 = vpack.c.b16 %v1619, %v1615
        %v1656 = vpack.c.b16 %v1620, %v1616
        %v1657 = vpack.c.b16 %v1625, %v1621
        %v1658 = vpack.c.b16 %v1626, %v1622
        %v1659 = vpack.c.b16 %v1627, %v1623
        %v1660 = vpack.c.b16 %v1628, %v1624
        %1693 = vmatpush.bf16.msra.mxu0 %v1657
        %1694 = vmatpush.bf16.msra.mxu0 %v1653
        %1695 = vmatpush.bf16.msra.mxu0 %v1649
        %1696 = vmatpush.bf16.msra.mxu0 %v1645
        %1697 = vmatpush.bf16.msra.mxu0 %v1641
        %1698 = vmatpush.bf16.msra.mxu0 %v1637
        %1699 = vmatpush.bf16.msra.mxu0 %v1633
        %1700 = vmatpush.bf16.msra.mxu0 %v1629
        %1701 = vmatmul.bf16.gmra.mxu0 %v1493
        %v1702 = vpop.f32.mrf.mxu0
        %v1703 = vadd.f32 0.0, %v1702
        %v1704 = vpop.f32.mrf.mxu0
        %1705 = vdwg.mxu0
        %1706 = vmatpush.bf16.msra.mxu0 %v1658
        %1707 = vmatpush.bf16.msra.mxu0 %v1654
        %1708 = vmatpush.bf16.msra.mxu0 %v1650
        %1709 = vmatpush.bf16.msra.mxu0 %v1646
        %1710 = vmatpush.bf16.msra.mxu0 %v1642
        %1711 = vmatpush.bf16.msra.mxu0 %v1638
        %1712 = vmatpush.bf16.msra.mxu0 %v1634
        %1713 = vmatpush.bf16.msra.mxu0 %v1630
        %1714 = vmatmul.bf16.gmra.mxu0 %v1493
        %v1715 = vpop.f32.mrf.mxu0
        %v1716 = vadd.f32 0.0, %v1715
        %v1717 = vpop.f32.mrf.mxu0
        %1718 = vdwg.mxu0
        %1719 = vmatpush.bf16.msra.mxu0 %v1659
        %1720 = vmatpush.bf16.msra.mxu0 %v1655
        %1721 = vmatpush.bf16.msra.mxu0 %v1651
        %1722 = vmatpush.bf16.msra.mxu0 %v1647
        %1723 = vmatpush.bf16.msra.mxu0 %v1643
        %1724 = vmatpush.bf16.msra.mxu0 %v1639
        %1725 = vmatpush.bf16.msra.mxu0 %v1635
        %1726 = vmatpush.bf16.msra.mxu0 %v1631
        %1727 = vmatmul.bf16.gmra.mxu0 %v1493
        %v1728 = vpop.f32.mrf.mxu0
        %v1729 = vadd.f32 0.0, %v1728
        %v1730 = vpop.f32.mrf.mxu0
        %1731 = vdwg.mxu0
        %1732 = vmatpush.bf16.msra.mxu0 %v1660
        %1733 = vmatpush.bf16.msra.mxu0 %v1656
        %1734 = vmatpush.bf16.msra.mxu0 %v1652
        %1735 = vmatpush.bf16.msra.mxu0 %v1648
        %1736 = vmatpush.bf16.msra.mxu0 %v1644
        %1737 = vmatpush.bf16.msra.mxu0 %v1640
        %1738 = vmatpush.bf16.msra.mxu0 %v1636
        %1739 = vmatpush.bf16.msra.mxu0 %v1632
        %1740 = vmatmul.bf16.gmra.mxu0 %v1493
        %v1741 = vpop.f32.mrf.mxu0
        %v1742 = vadd.f32 0.0, %v1741
        %v1743 = vpop.f32.mrf.mxu0
        %1744 = vdwg.mxu0
        %v1745 = vadd.f32 %v1497, %v1703
        %v1746 = vadd.f32 %v1498, %v1716
        %v1747 = vadd.f32 %v1499, %v1729
        %v1748 = vadd.f32 %v1500, %v1742
        %v1749 = vmul.f32 %v1745, 0.5
        %v1750 = vmul.f32 %v1746, 0.5
        %v1751 = vmul.f32 %v1747, 0.5
        %v1752 = vtanh.pop %v1749
        %v1753 = vtanh.pop %v1750
        %v1754 = vtanh.pop %v1751
        %v1755 = vadd.f32 %v1752, 1.0
        %v1756 = vadd.f32 %v1753, 1.0
        %v1757 = vadd.f32 %v1754, 1.0
        %v1758 = vmul.f32 %v1755, 0.5
        %v1759 = vmul.f32 %v1756, 0.5
        %v1760 = vmul.f32 %v1757, 0.5
        %v1761 = vtanh.pop %v1748
        %v1762 = vmul.f32 %v1759, %v1490
        %v1763 = vmul.f32 %v1758, %v1761
        %v1764 = vadd.f32 %v1762, %v1763
        %v1765 = vtanh.pop %v1764
        %v1766 = vmul.f32 %v1760, %v1765
        %v1767 = vpack.c.bf16 %v1766, %v1766
        %s1768 = scalar_lea.vmem %s282, 12 [#allocation13]
        %1769 = vst [vmem:[%s1768] sm:$0xf] %v1767
        %s1770 = scalar_lea.vmem [#allocation4], 128
        %v1771 = vld [vmem:[%s1770] sm:$0xff]
        %v1772 = vld [vmem:[%s1770 + $0x8] sm:$0xff]
        %v1773 = vld [vmem:[%s1770 + $0x10] sm:$0xff]
        %v1774 = vld [vmem:[%s1770 + $0x18] sm:$0xff]
        %v1775 = vld [vmem:[#allocation10] sm:$0xff]
        %v1776 = vld [vmem:[#allocation10 + $0x8] sm:$0xff]
        %v1777 = vld [vmem:[#allocation10 + $0x10] sm:$0xff]
        %v1778 = vld [vmem:[#allocation10 + $0x18] sm:$0xff]
        %v1779 = vld [vmem:[#allocation10 + $0x20] sm:$0xff]
        %v1780 = vld [vmem:[#allocation10 + $0x28] sm:$0xff]
        %v1781 = vld [vmem:[#allocation10 + $0x30] sm:$0xff]
        %v1782 = vld [vmem:[#allocation10 + $0x38] sm:$0xff]
        %v1783 = vld [vmem:[#allocation10 + $0x40] sm:$0xff]
        %v1784 = vld [vmem:[#allocation10 + $0x48] sm:$0xff]
        %v1785 = vld [vmem:[#allocation10 + $0x50] sm:$0xff]
        %v1786 = vld [vmem:[#allocation10 + $0x58] sm:$0xff]
        %v1787 = vld [vmem:[#allocation10 + $0x60] sm:$0xff]
        %v1788 = vld [vmem:[#allocation10 + $0x68] sm:$0xff]
        %v1789 = vld [vmem:[#allocation10 + $0x70] sm:$0xff]
        %v1790 = vld [vmem:[#allocation10 + $0x78] sm:$0xff]
        %v1791 = vld [vmem:[#allocation10 + $0x80] sm:$0xff]
        %v1792 = vld [vmem:[#allocation10 + $0x88] sm:$0xff]
        %v1793 = vld [vmem:[#allocation10 + $0x90] sm:$0xff]
        %v1794 = vld [vmem:[#allocation10 + $0x98] sm:$0xff]
        %v1795 = vld [vmem:[#allocation10 + $0xa0] sm:$0xff]
        %v1796 = vld [vmem:[#allocation10 + $0xa8] sm:$0xff]
        %v1797 = vld [vmem:[#allocation10 + $0xb0] sm:$0xff]
        %v1798 = vld [vmem:[#allocation10 + $0xb8] sm:$0xff]
        %v1799 = vld [vmem:[#allocation10 + $0xc0] sm:$0xff]
        %v1800 = vld [vmem:[#allocation10 + $0xc8] sm:$0xff]
        %v1801 = vld [vmem:[#allocation10 + $0xd0] sm:$0xff]
        %v1802 = vld [vmem:[#allocation10 + $0xd8] sm:$0xff]
        %v1803 = vld [vmem:[#allocation10 + $0xe0] sm:$0xff]
        %v1804 = vld [vmem:[#allocation10 + $0xe8] sm:$0xff]
        %v1805 = vld [vmem:[#allocation10 + $0xf0] sm:$0xff]
        %v1806 = vld [vmem:[#allocation10 + $0xf8] sm:$0xff]
        %v1839 = vunpack.c.l.b16 %v1775
        %v1840 = vunpack.c.h.b16 %v1775
        %v1841 = vunpack.c.l.b16 %v1776
        %v1842 = vunpack.c.h.b16 %v1776
        %v1843 = vunpack.c.l.b16 %v1777
        %v1844 = vunpack.c.h.b16 %v1777
        %v1845 = vunpack.c.l.b16 %v1778
        %v1846 = vunpack.c.h.b16 %v1778
        %v1847 = vunpack.c.l.b16 %v1779
        %v1848 = vunpack.c.h.b16 %v1779
        %v1849 = vunpack.c.l.b16 %v1780
        %v1850 = vunpack.c.h.b16 %v1780
        %v1851 = vunpack.c.l.b16 %v1781
        %v1852 = vunpack.c.h.b16 %v1781
        %v1853 = vunpack.c.l.b16 %v1782
        %v1854 = vunpack.c.h.b16 %v1782
        %v1855 = vunpack.c.l.b16 %v1783
        %v1856 = vunpack.c.h.b16 %v1783
        %v1857 = vunpack.c.l.b16 %v1784
        %v1858 = vunpack.c.h.b16 %v1784
        %v1859 = vunpack.c.l.b16 %v1785
        %v1860 = vunpack.c.h.b16 %v1785
        %v1861 = vunpack.c.l.b16 %v1786
        %v1862 = vunpack.c.h.b16 %v1786
        %v1863 = vunpack.c.l.b16 %v1787
        %v1864 = vunpack.c.h.b16 %v1787
        %v1865 = vunpack.c.l.b16 %v1788
        %v1866 = vunpack.c.h.b16 %v1788
        %v1867 = vunpack.c.l.b16 %v1789
        %v1868 = vunpack.c.h.b16 %v1789
        %v1869 = vunpack.c.l.b16 %v1790
        %v1870 = vunpack.c.h.b16 %v1790
        %v1871 = vunpack.c.l.b16 %v1791
        %v1872 = vunpack.c.h.b16 %v1791
        %v1873 = vunpack.c.l.b16 %v1792
        %v1874 = vunpack.c.h.b16 %v1792
        %v1875 = vunpack.c.l.b16 %v1793
        %v1876 = vunpack.c.h.b16 %v1793
        %v1877 = vunpack.c.l.b16 %v1794
        %v1878 = vunpack.c.h.b16 %v1794
        %v1879 = vunpack.c.l.b16 %v1795
        %v1880 = vunpack.c.h.b16 %v1795
        %v1881 = vunpack.c.l.b16 %v1796
        %v1882 = vunpack.c.h.b16 %v1796
        %v1883 = vunpack.c.l.b16 %v1797
        %v1884 = vunpack.c.h.b16 %v1797
        %v1885 = vunpack.c.l.b16 %v1798
        %v1886 = vunpack.c.h.b16 %v1798
        %v1887 = vunpack.c.l.b16 %v1799
        %v1888 = vunpack.c.h.b16 %v1799
        %v1889 = vunpack.c.l.b16 %v1800
        %v1890 = vunpack.c.h.b16 %v1800
        %v1891 = vunpack.c.l.b16 %v1801
        %v1892 = vunpack.c.h.b16 %v1801
        %v1893 = vunpack.c.l.b16 %v1802
        %v1894 = vunpack.c.h.b16 %v1802
        %v1895 = vunpack.c.l.b16 %v1803
        %v1896 = vunpack.c.h.b16 %v1803
        %v1897 = vunpack.c.l.b16 %v1804
        %v1898 = vunpack.c.h.b16 %v1804
        %v1899 = vunpack.c.l.b16 %v1805
        %v1900 = vunpack.c.h.b16 %v1805
        %v1901 = vunpack.c.l.b16 %v1806
        %v1902 = vunpack.c.h.b16 %v1806
        %v1903 = vpack.c.b16 %v1843, %v1839
        %v1904 = vpack.c.b16 %v1844, %v1840
        %v1905 = vpack.c.b16 %v1845, %v1841
        %v1906 = vpack.c.b16 %v1846, %v1842
        %v1907 = vpack.c.b16 %v1851, %v1847
        %v1908 = vpack.c.b16 %v1852, %v1848
        %v1909 = vpack.c.b16 %v1853, %v1849
        %v1910 = vpack.c.b16 %v1854, %v1850
        %v1911 = vpack.c.b16 %v1859, %v1855
        %v1912 = vpack.c.b16 %v1860, %v1856
        %v1913 = vpack.c.b16 %v1861, %v1857
        %v1914 = vpack.c.b16 %v1862, %v1858
        %v1915 = vpack.c.b16 %v1867, %v1863
        %v1916 = vpack.c.b16 %v1868, %v1864
        %v1917 = vpack.c.b16 %v1869, %v1865
        %v1918 = vpack.c.b16 %v1870, %v1866
        %v1919 = vpack.c.b16 %v1875, %v1871
        %v1920 = vpack.c.b16 %v1876, %v1872
        %v1921 = vpack.c.b16 %v1877, %v1873
        %v1922 = vpack.c.b16 %v1878, %v1874
        %v1923 = vpack.c.b16 %v1883, %v1879
        %v1924 = vpack.c.b16 %v1884, %v1880
        %v1925 = vpack.c.b16 %v1885, %v1881
        %v1926 = vpack.c.b16 %v1886, %v1882
        %v1927 = vpack.c.b16 %v1891, %v1887
        %v1928 = vpack.c.b16 %v1892, %v1888
        %v1929 = vpack.c.b16 %v1893, %v1889
        %v1930 = vpack.c.b16 %v1894, %v1890
        %v1931 = vpack.c.b16 %v1899, %v1895
        %v1932 = vpack.c.b16 %v1900, %v1896
        %v1933 = vpack.c.b16 %v1901, %v1897
        %v1934 = vpack.c.b16 %v1902, %v1898
        %1967 = vmatpush.bf16.msra.mxu0 %v1931
        %1968 = vmatpush.bf16.msra.mxu0 %v1927
        %1969 = vmatpush.bf16.msra.mxu0 %v1923
        %1970 = vmatpush.bf16.msra.mxu0 %v1919
        %1971 = vmatpush.bf16.msra.mxu0 %v1915
        %1972 = vmatpush.bf16.msra.mxu0 %v1911
        %1973 = vmatpush.bf16.msra.mxu0 %v1907
        %1974 = vmatpush.bf16.msra.mxu0 %v1903
        %1975 = vmatmul.bf16.gmra.mxu0 %v1767
        %v1976 = vpop.f32.mrf.mxu0
        %v1977 = vadd.f32 0.0, %v1976
        %v1978 = vpop.f32.mrf.mxu0
        %1979 = vdwg.mxu0
        %1980 = vmatpush.bf16.msra.mxu0 %v1932
        %1981 = vmatpush.bf16.msra.mxu0 %v1928
        %1982 = vmatpush.bf16.msra.mxu0 %v1924
        %1983 = vmatpush.bf16.msra.mxu0 %v1920
        %1984 = vmatpush.bf16.msra.mxu0 %v1916
        %1985 = vmatpush.bf16.msra.mxu0 %v1912
        %1986 = vmatpush.bf16.msra.mxu0 %v1908
        %1987 = vmatpush.bf16.msra.mxu0 %v1904
        %1988 = vmatmul.bf16.gmra.mxu0 %v1767
        %v1989 = vpop.f32.mrf.mxu0
        %v1990 = vadd.f32 0.0, %v1989
        %v1991 = vpop.f32.mrf.mxu0
        %1992 = vdwg.mxu0
        %1993 = vmatpush.bf16.msra.mxu0 %v1933
        %1994 = vmatpush.bf16.msra.mxu0 %v1929
        %1995 = vmatpush.bf16.msra.mxu0 %v1925
        %1996 = vmatpush.bf16.msra.mxu0 %v1921
        %1997 = vmatpush.bf16.msra.mxu0 %v1917
        %1998 = vmatpush.bf16.msra.mxu0 %v1913
        %1999 = vmatpush.bf16.msra.mxu0 %v1909
        %2000 = vmatpush.bf16.msra.mxu0 %v1905
        %2001 = vmatmul.bf16.gmra.mxu0 %v1767
        %v2002 = vpop.f32.mrf.mxu0
        %v2003 = vadd.f32 0.0, %v2002
        %v2004 = vpop.f32.mrf.mxu0
        %2005 = vdwg.mxu0
        %2006 = vmatpush.bf16.msra.mxu0 %v1934
        %2007 = vmatpush.bf16.msra.mxu0 %v1930
        %2008 = vmatpush.bf16.msra.mxu0 %v1926
        %2009 = vmatpush.bf16.msra.mxu0 %v1922
        %2010 = vmatpush.bf16.msra.mxu0 %v1918
        %2011 = vmatpush.bf16.msra.mxu0 %v1914
        %2012 = vmatpush.bf16.msra.mxu0 %v1910
        %2013 = vmatpush.bf16.msra.mxu0 %v1906
        %2014 = vmatmul.bf16.gmra.mxu0 %v1767
        %v2015 = vpop.f32.mrf.mxu0
        %v2016 = vadd.f32 0.0, %v2015
        %v2017 = vpop.f32.mrf.mxu0
        %2018 = vdwg.mxu0
        %v2019 = vadd.f32 %v1771, %v1977
        %v2020 = vadd.f32 %v1772, %v1990
        %v2021 = vadd.f32 %v1773, %v2003
        %v2022 = vadd.f32 %v1774, %v2016
        %v2023 = vmul.f32 %v2019, 0.5
        %v2024 = vmul.f32 %v2020, 0.5
        %v2025 = vmul.f32 %v2021, 0.5
        %v2026 = vtanh.pop %v2023
        %v2027 = vtanh.pop %v2024
        %v2028 = vtanh.pop %v2025
        %v2029 = vadd.f32 %v2026, 1.0
        %v2030 = vadd.f32 %v2027, 1.0
        %v2031 = vadd.f32 %v2028, 1.0
        %v2032 = vmul.f32 %v2029, 0.5
        %v2033 = vmul.f32 %v2030, 0.5
        %v2034 = vmul.f32 %v2031, 0.5
        %v2035 = vtanh.pop %v2022
        %v2036 = vmul.f32 %v2033, %v1764
        %v2037 = vmul.f32 %v2032, %v2035
        %v2038 = vadd.f32 %v2036, %v2037
        %v2039 = vtanh.pop %v2038
        %v2040 = vmul.f32 %v2034, %v2039
        %v2041 = vpack.c.bf16 %v2040, %v2040
        %s2042 = scalar_lea.vmem %s282, 16 [#allocation13]
        %2043 = vst [vmem:[%s2042] sm:$0xf] %v2041
        %s2044 = scalar_lea.vmem [#allocation4], 160
        %v2045 = vld [vmem:[%s2044] sm:$0xff]
        %v2046 = vld [vmem:[%s2044 + $0x8] sm:$0xff]
        %v2047 = vld [vmem:[%s2044 + $0x10] sm:$0xff]
        %v2048 = vld [vmem:[%s2044 + $0x18] sm:$0xff]
        %v2049 = vld [vmem:[#allocation10] sm:$0xff]
        %v2050 = vld [vmem:[#allocation10 + $0x8] sm:$0xff]
        %v2051 = vld [vmem:[#allocation10 + $0x10] sm:$0xff]
        %v2052 = vld [vmem:[#allocation10 + $0x18] sm:$0xff]
        %v2053 = vld [vmem:[#allocation10 + $0x20] sm:$0xff]
        %v2054 = vld [vmem:[#allocation10 + $0x28] sm:$0xff]
        %v2055 = vld [vmem:[#allocation10 + $0x30] sm:$0xff]
        %v2056 = vld [vmem:[#allocation10 + $0x38] sm:$0xff]
        %v2057 = vld [vmem:[#allocation10 + $0x40] sm:$0xff]
        %v2058 = vld [vmem:[#allocation10 + $0x48] sm:$0xff]
        %v2059 = vld [vmem:[#allocation10 + $0x50] sm:$0xff]
        %v2060 = vld [vmem:[#allocation10 + $0x58] sm:$0xff]
        %v2061 = vld [vmem:[#allocation10 + $0x60] sm:$0xff]
        %v2062 = vld [vmem:[#allocation10 + $0x68] sm:$0xff]
        %v2063 = vld [vmem:[#allocation10 + $0x70] sm:$0xff]
        %v2064 = vld [vmem:[#allocation10 + $0x78] sm:$0xff]
        %v2065 = vld [vmem:[#allocation10 + $0x80] sm:$0xff]
        %v2066 = vld [vmem:[#allocation10 + $0x88] sm:$0xff]
        %v2067 = vld [vmem:[#allocation10 + $0x90] sm:$0xff]
        %v2068 = vld [vmem:[#allocation10 + $0x98] sm:$0xff]
        %v2069 = vld [vmem:[#allocation10 + $0xa0] sm:$0xff]
        %v2070 = vld [vmem:[#allocation10 + $0xa8] sm:$0xff]
        %v2071 = vld [vmem:[#allocation10 + $0xb0] sm:$0xff]
        %v2072 = vld [vmem:[#allocation10 + $0xb8] sm:$0xff]
        %v2073 = vld [vmem:[#allocation10 + $0xc0] sm:$0xff]
        %v2074 = vld [vmem:[#allocation10 + $0xc8] sm:$0xff]
        %v2075 = vld [vmem:[#allocation10 + $0xd0] sm:$0xff]
        %v2076 = vld [vmem:[#allocation10 + $0xd8] sm:$0xff]
        %v2077 = vld [vmem:[#allocation10 + $0xe0] sm:$0xff]
        %v2078 = vld [vmem:[#allocation10 + $0xe8] sm:$0xff]
        %v2079 = vld [vmem:[#allocation10 + $0xf0] sm:$0xff]
        %v2080 = vld [vmem:[#allocation10 + $0xf8] sm:$0xff]
        %v2113 = vunpack.c.l.b16 %v2049
        %v2114 = vunpack.c.h.b16 %v2049
        %v2115 = vunpack.c.l.b16 %v2050
        %v2116 = vunpack.c.h.b16 %v2050
        %v2117 = vunpack.c.l.b16 %v2051
        %v2118 = vunpack.c.h.b16 %v2051
        %v2119 = vunpack.c.l.b16 %v2052
        %v2120 = vunpack.c.h.b16 %v2052
        %v2121 = vunpack.c.l.b16 %v2053
        %v2122 = vunpack.c.h.b16 %v2053
        %v2123 = vunpack.c.l.b16 %v2054
        %v2124 = vunpack.c.h.b16 %v2054
        %v2125 = vunpack.c.l.b16 %v2055
        %v2126 = vunpack.c.h.b16 %v2055
        %v2127 = vunpack.c.l.b16 %v2056
        %v2128 = vunpack.c.h.b16 %v2056
        %v2129 = vunpack.c.l.b16 %v2057
        %v2130 = vunpack.c.h.b16 %v2057
        %v2131 = vunpack.c.l.b16 %v2058
        %v2132 = vunpack.c.h.b16 %v2058
        %v2133 = vunpack.c.l.b16 %v2059
        %v2134 = vunpack.c.h.b16 %v2059
        %v2135 = vunpack.c.l.b16 %v2060
        %v2136 = vunpack.c.h.b16 %v2060
        %v2137 = vunpack.c.l.b16 %v2061
        %v2138 = vunpack.c.h.b16 %v2061
        %v2139 = vunpack.c.l.b16 %v2062
        %v2140 = vunpack.c.h.b16 %v2062
        %v2141 = vunpack.c.l.b16 %v2063
        %v2142 = vunpack.c.h.b16 %v2063
        %v2143 = vunpack.c.l.b16 %v2064
        %v2144 = vunpack.c.h.b16 %v2064
        %v2145 = vunpack.c.l.b16 %v2065
        %v2146 = vunpack.c.h.b16 %v2065
        %v2147 = vunpack.c.l.b16 %v2066
        %v2148 = vunpack.c.h.b16 %v2066
        %v2149 = vunpack.c.l.b16 %v2067
        %v2150 = vunpack.c.h.b16 %v2067
        %v2151 = vunpack.c.l.b16 %v2068
        %v2152 = vunpack.c.h.b16 %v2068
        %v2153 = vunpack.c.l.b16 %v2069
        %v2154 = vunpack.c.h.b16 %v2069
        %v2155 = vunpack.c.l.b16 %v2070
        %v2156 = vunpack.c.h.b16 %v2070
        %v2157 = vunpack.c.l.b16 %v2071
        %v2158 = vunpack.c.h.b16 %v2071
        %v2159 = vunpack.c.l.b16 %v2072
        %v2160 = vunpack.c.h.b16 %v2072
        %v2161 = vunpack.c.l.b16 %v2073
        %v2162 = vunpack.c.h.b16 %v2073
        %v2163 = vunpack.c.l.b16 %v2074
        %v2164 = vunpack.c.h.b16 %v2074
        %v2165 = vunpack.c.l.b16 %v2075
        %v2166 = vunpack.c.h.b16 %v2075
        %v2167 = vunpack.c.l.b16 %v2076
        %v2168 = vunpack.c.h.b16 %v2076
        %v2169 = vunpack.c.l.b16 %v2077
        %v2170 = vunpack.c.h.b16 %v2077
        %v2171 = vunpack.c.l.b16 %v2078
        %v2172 = vunpack.c.h.b16 %v2078
        %v2173 = vunpack.c.l.b16 %v2079
        %v2174 = vunpack.c.h.b16 %v2079
        %v2175 = vunpack.c.l.b16 %v2080
        %v2176 = vunpack.c.h.b16 %v2080
        %v2177 = vpack.c.b16 %v2117, %v2113
        %v2178 = vpack.c.b16 %v2118, %v2114
        %v2179 = vpack.c.b16 %v2119, %v2115
        %v2180 = vpack.c.b16 %v2120, %v2116
        %v2181 = vpack.c.b16 %v2125, %v2121
        %v2182 = vpack.c.b16 %v2126, %v2122
        %v2183 = vpack.c.b16 %v2127, %v2123
        %v2184 = vpack.c.b16 %v2128, %v2124
        %v2185 = vpack.c.b16 %v2133, %v2129
        %v2186 = vpack.c.b16 %v2134, %v2130
        %v2187 = vpack.c.b16 %v2135, %v2131
        %v2188 = vpack.c.b16 %v2136, %v2132
        %v2189 = vpack.c.b16 %v2141, %v2137
        %v2190 = vpack.c.b16 %v2142, %v2138
        %v2191 = vpack.c.b16 %v2143, %v2139
        %v2192 = vpack.c.b16 %v2144, %v2140
        %v2193 = vpack.c.b16 %v2149, %v2145
        %v2194 = vpack.c.b16 %v2150, %v2146
        %v2195 = vpack.c.b16 %v2151, %v2147
        %v2196 = vpack.c.b16 %v2152, %v2148
        %v2197 = vpack.c.b16 %v2157, %v2153
        %v2198 = vpack.c.b16 %v2158, %v2154
        %v2199 = vpack.c.b16 %v2159, %v2155
        %v2200 = vpack.c.b16 %v2160, %v2156
        %v2201 = vpack.c.b16 %v2165, %v2161
        %v2202 = vpack.c.b16 %v2166, %v2162
        %v2203 = vpack.c.b16 %v2167, %v2163
        %v2204 = vpack.c.b16 %v2168, %v2164
        %v2205 = vpack.c.b16 %v2173, %v2169
        %v2206 = vpack.c.b16 %v2174, %v2170
        %v2207 = vpack.c.b16 %v2175, %v2171
        %v2208 = vpack.c.b16 %v2176, %v2172
        %2241 = vmatpush.bf16.msra.mxu0 %v2205
        %2242 = vmatpush.bf16.msra.mxu0 %v2201
        %2243 = vmatpush.bf16.msra.mxu0 %v2197
        %2244 = vmatpush.bf16.msra.mxu0 %v2193
        %2245 = vmatpush.bf16.msra.mxu0 %v2189
        %2246 = vmatpush.bf16.msra.mxu0 %v2185
        %2247 = vmatpush.bf16.msra.mxu0 %v2181
        %2248 = vmatpush.bf16.msra.mxu0 %v2177
        %2249 = vmatmul.bf16.gmra.mxu0 %v2041
        %v2250 = vpop.f32.mrf.mxu0
        %v2251 = vadd.f32 0.0, %v2250
        %v2252 = vpop.f32.mrf.mxu0
        %2253 = vdwg.mxu0
        %2254 = vmatpush.bf16.msra.mxu0 %v2206
        %2255 = vmatpush.bf16.msra.mxu0 %v2202
        %2256 = vmatpush.bf16.msra.mxu0 %v2198
        %2257 = vmatpush.bf16.msra.mxu0 %v2194
        %2258 = vmatpush.bf16.msra.mxu0 %v2190
        %2259 = vmatpush.bf16.msra.mxu0 %v2186
        %2260 = vmatpush.bf16.msra.mxu0 %v2182
        %2261 = vmatpush.bf16.msra.mxu0 %v2178
        %2262 = vmatmul.bf16.gmra.mxu0 %v2041
        %v2263 = vpop.f32.mrf.mxu0
        %v2264 = vadd.f32 0.0, %v2263
        %v2265 = vpop.f32.mrf.mxu0
        %2266 = vdwg.mxu0
        %2267 = vmatpush.bf16.msra.mxu0 %v2207
        %2268 = vmatpush.bf16.msra.mxu0 %v2203
        %2269 = vmatpush.bf16.msra.mxu0 %v2199
        %2270 = vmatpush.bf16.msra.mxu0 %v2195
        %2271 = vmatpush.bf16.msra.mxu0 %v2191
        %2272 = vmatpush.bf16.msra.mxu0 %v2187
        %2273 = vmatpush.bf16.msra.mxu0 %v2183
        %2274 = vmatpush.bf16.msra.mxu0 %v2179
        %2275 = vmatmul.bf16.gmra.mxu0 %v2041
        %v2276 = vpop.f32.mrf.mxu0
        %v2277 = vadd.f32 0.0, %v2276
        %v2278 = vpop.f32.mrf.mxu0
        %2279 = vdwg.mxu0
        %2280 = vmatpush.bf16.msra.mxu0 %v2208
        %2281 = vmatpush.bf16.msra.mxu0 %v2204
        %2282 = vmatpush.bf16.msra.mxu0 %v2200
        %2283 = vmatpush.bf16.msra.mxu0 %v2196
        %2284 = vmatpush.bf16.msra.mxu0 %v2192
        %2285 = vmatpush.bf16.msra.mxu0 %v2188
        %2286 = vmatpush.bf16.msra.mxu0 %v2184
        %2287 = vmatpush.bf16.msra.mxu0 %v2180
        %2288 = vmatmul.bf16.gmra.mxu0 %v2041
        %v2289 = vpop.f32.mrf.mxu0
        %v2290 = vadd.f32 0.0, %v2289
        %v2291 = vpop.f32.mrf.mxu0
        %2292 = vdwg.mxu0
        %v2293 = vadd.f32 %v2045, %v2251
        %v2294 = vadd.f32 %v2046, %v2264
        %v2295 = vadd.f32 %v2047, %v2277
        %v2296 = vadd.f32 %v2048, %v2290
        %v2297 = vmul.f32 %v2293, 0.5
        %v2298 = vmul.f32 %v2294, 0.5
        %v2299 = vmul.f32 %v2295, 0.5
        %v2300 = vtanh.pop %v2297
        %v2301 = vtanh.pop %v2298
        %v2302 = vtanh.pop %v2299
        %v2303 = vadd.f32 %v2300, 1.0
        %v2304 = vadd.f32 %v2301, 1.0
        %v2305 = vadd.f32 %v2302, 1.0
        %v2306 = vmul.f32 %v2303, 0.5
        %v2307 = vmul.f32 %v2304, 0.5
        %v2308 = vmul.f32 %v2305, 0.5
        %v2309 = vtanh.pop %v2296
        %v2310 = vmul.f32 %v2307, %v2038
        %v2311 = vmul.f32 %v2306, %v2309
        %v2312 = vadd.f32 %v2310, %v2311
        %v2313 = vtanh.pop %v2312
        %v2314 = vmul.f32 %v2308, %v2313
        %v2315 = vpack.c.bf16 %v2314, %v2314
        %s2316 = scalar_lea.vmem %s282, 20 [#allocation13]
        %2317 = vst [vmem:[%s2316] sm:$0xf] %v2315
        %s2318 = scalar_lea.vmem [#allocation4], 192
        %v2319 = vld [vmem:[%s2318] sm:$0xff]
        %v2320 = vld [vmem:[%s2318 + $0x8] sm:$0xff]
        %v2321 = vld [vmem:[%s2318 + $0x10] sm:$0xff]
        %v2322 = vld [vmem:[%s2318 + $0x18] sm:$0xff]
        %v2323 = vld [vmem:[#allocation10] sm:$0xff]
        %v2324 = vld [vmem:[#allocation10 + $0x8] sm:$0xff]
        %v2325 = vld [vmem:[#allocation10 + $0x10] sm:$0xff]
        %v2326 = vld [vmem:[#allocation10 + $0x18] sm:$0xff]
        %v2327 = vld [vmem:[#allocation10 + $0x20] sm:$0xff]
        %v2328 = vld [vmem:[#allocation10 + $0x28] sm:$0xff]
        %v2329 = vld [vmem:[#allocation10 + $0x30] sm:$0xff]
        %v2330 = vld [vmem:[#allocation10 + $0x38] sm:$0xff]
        %v2331 = vld [vmem:[#allocation10 + $0x40] sm:$0xff]
        %v2332 = vld [vmem:[#allocation10 + $0x48] sm:$0xff]
        %v2333 = vld [vmem:[#allocation10 + $0x50] sm:$0xff]
        %v2334 = vld [vmem:[#allocation10 + $0x58] sm:$0xff]
        %v2335 = vld [vmem:[#allocation10 + $0x60] sm:$0xff]
        %v2336 = vld [vmem:[#allocation10 + $0x68] sm:$0xff]
        %v2337 = vld [vmem:[#allocation10 + $0x70] sm:$0xff]
        %v2338 = vld [vmem:[#allocation10 + $0x78] sm:$0xff]
        %v2339 = vld [vmem:[#allocation10 + $0x80] sm:$0xff]
        %v2340 = vld [vmem:[#allocation10 + $0x88] sm:$0xff]
        %v2341 = vld [vmem:[#allocation10 + $0x90] sm:$0xff]
        %v2342 = vld [vmem:[#allocation10 + $0x98] sm:$0xff]
        %v2343 = vld [vmem:[#allocation10 + $0xa0] sm:$0xff]
        %v2344 = vld [vmem:[#allocation10 + $0xa8] sm:$0xff]
        %v2345 = vld [vmem:[#allocation10 + $0xb0] sm:$0xff]
        %v2346 = vld [vmem:[#allocation10 + $0xb8] sm:$0xff]
        %v2347 = vld [vmem:[#allocation10 + $0xc0] sm:$0xff]
        %v2348 = vld [vmem:[#allocation10 + $0xc8] sm:$0xff]
        %v2349 = vld [vmem:[#allocation10 + $0xd0] sm:$0xff]
        %v2350 = vld [vmem:[#allocation10 + $0xd8] sm:$0xff]
        %v2351 = vld [vmem:[#allocation10 + $0xe0] sm:$0xff]
        %v2352 = vld [vmem:[#allocation10 + $0xe8] sm:$0xff]
        %v2353 = vld [vmem:[#allocation10 + $0xf0] sm:$0xff]
        %v2354 = vld [vmem:[#allocation10 + $0xf8] sm:$0xff]
        %v2387 = vunpack.c.l.b16 %v2323
        %v2388 = vunpack.c.h.b16 %v2323
        %v2389 = vunpack.c.l.b16 %v2324
        %v2390 = vunpack.c.h.b16 %v2324
        %v2391 = vunpack.c.l.b16 %v2325
        %v2392 = vunpack.c.h.b16 %v2325
        %v2393 = vunpack.c.l.b16 %v2326
        %v2394 = vunpack.c.h.b16 %v2326
        %v2395 = vunpack.c.l.b16 %v2327
        %v2396 = vunpack.c.h.b16 %v2327
        %v2397 = vunpack.c.l.b16 %v2328
        %v2398 = vunpack.c.h.b16 %v2328
        %v2399 = vunpack.c.l.b16 %v2329
        %v2400 = vunpack.c.h.b16 %v2329
        %v2401 = vunpack.c.l.b16 %v2330
        %v2402 = vunpack.c.h.b16 %v2330
        %v2403 = vunpack.c.l.b16 %v2331
        %v2404 = vunpack.c.h.b16 %v2331
        %v2405 = vunpack.c.l.b16 %v2332
        %v2406 = vunpack.c.h.b16 %v2332
        %v2407 = vunpack.c.l.b16 %v2333
        %v2408 = vunpack.c.h.b16 %v2333
        %v2409 = vunpack.c.l.b16 %v2334
        %v2410 = vunpack.c.h.b16 %v2334
        %v2411 = vunpack.c.l.b16 %v2335
        %v2412 = vunpack.c.h.b16 %v2335
        %v2413 = vunpack.c.l.b16 %v2336
        %v2414 = vunpack.c.h.b16 %v2336
        %v2415 = vunpack.c.l.b16 %v2337
        %v2416 = vunpack.c.h.b16 %v2337
        %v2417 = vunpack.c.l.b16 %v2338
        %v2418 = vunpack.c.h.b16 %v2338
        %v2419 = vunpack.c.l.b16 %v2339
        %v2420 = vunpack.c.h.b16 %v2339
        %v2421 = vunpack.c.l.b16 %v2340
        %v2422 = vunpack.c.h.b16 %v2340
        %v2423 = vunpack.c.l.b16 %v2341
        %v2424 = vunpack.c.h.b16 %v2341
        %v2425 = vunpack.c.l.b16 %v2342
        %v2426 = vunpack.c.h.b16 %v2342
        %v2427 = vunpack.c.l.b16 %v2343
        %v2428 = vunpack.c.h.b16 %v2343
        %v2429 = vunpack.c.l.b16 %v2344
        %v2430 = vunpack.c.h.b16 %v2344
        %v2431 = vunpack.c.l.b16 %v2345
        %v2432 = vunpack.c.h.b16 %v2345
        %v2433 = vunpack.c.l.b16 %v2346
        %v2434 = vunpack.c.h.b16 %v2346
        %v2435 = vunpack.c.l.b16 %v2347
        %v2436 = vunpack.c.h.b16 %v2347
        %v2437 = vunpack.c.l.b16 %v2348
        %v2438 = vunpack.c.h.b16 %v2348
        %v2439 = vunpack.c.l.b16 %v2349
        %v2440 = vunpack.c.h.b16 %v2349
        %v2441 = vunpack.c.l.b16 %v2350
        %v2442 = vunpack.c.h.b16 %v2350
        %v2443 = vunpack.c.l.b16 %v2351
        %v2444 = vunpack.c.h.b16 %v2351
        %v2445 = vunpack.c.l.b16 %v2352
        %v2446 = vunpack.c.h.b16 %v2352
        %v2447 = vunpack.c.l.b16 %v2353
        %v2448 = vunpack.c.h.b16 %v2353
        %v2449 = vunpack.c.l.b16 %v2354
        %v2450 = vunpack.c.h.b16 %v2354
        %v2451 = vpack.c.b16 %v2391, %v2387
        %v2452 = vpack.c.b16 %v2392, %v2388
        %v2453 = vpack.c.b16 %v2393, %v2389
        %v2454 = vpack.c.b16 %v2394, %v2390
        %v2455 = vpack.c.b16 %v2399, %v2395
        %v2456 = vpack.c.b16 %v2400, %v2396
        %v2457 = vpack.c.b16 %v2401, %v2397
        %v2458 = vpack.c.b16 %v2402, %v2398
        %v2459 = vpack.c.b16 %v2407, %v2403
        %v2460 = vpack.c.b16 %v2408, %v2404
        %v2461 = vpack.c.b16 %v2409, %v2405
        %v2462 = vpack.c.b16 %v2410, %v2406
        %v2463 = vpack.c.b16 %v2415, %v2411
        %v2464 = vpack.c.b16 %v2416, %v2412
        %v2465 = vpack.c.b16 %v2417, %v2413
        %v2466 = vpack.c.b16 %v2418, %v2414
        %v2467 = vpack.c.b16 %v2423, %v2419
        %v2468 = vpack.c.b16 %v2424, %v2420
        %v2469 = vpack.c.b16 %v2425, %v2421
        %v2470 = vpack.c.b16 %v2426, %v2422
        %v2471 = vpack.c.b16 %v2431, %v2427
        %v2472 = vpack.c.b16 %v2432, %v2428
        %v2473 = vpack.c.b16 %v2433, %v2429
        %v2474 = vpack.c.b16 %v2434, %v2430
        %v2475 = vpack.c.b16 %v2439, %v2435
        %v2476 = vpack.c.b16 %v2440, %v2436
        %v2477 = vpack.c.b16 %v2441, %v2437
        %v2478 = vpack.c.b16 %v2442, %v2438
        %v2479 = vpack.c.b16 %v2447, %v2443
        %v2480 = vpack.c.b16 %v2448, %v2444
        %v2481 = vpack.c.b16 %v2449, %v2445
        %v2482 = vpack.c.b16 %v2450, %v2446
        %2515 = vmatpush.bf16.msra.mxu0 %v2479
        %2516 = vmatpush.bf16.msra.mxu0 %v2475
        %2517 = vmatpush.bf16.msra.mxu0 %v2471
        %2518 = vmatpush.bf16.msra.mxu0 %v2467
        %2519 = vmatpush.bf16.msra.mxu0 %v2463
        %2520 = vmatpush.bf16.msra.mxu0 %v2459
        %2521 = vmatpush.bf16.msra.mxu0 %v2455
        %2522 = vmatpush.bf16.msra.mxu0 %v2451
        %2523 = vmatmul.bf16.gmra.mxu0 %v2315
        %v2524 = vpop.f32.mrf.mxu0
        %v2525 = vadd.f32 0.0, %v2524
        %v2526 = vpop.f32.mrf.mxu0
        %2527 = vdwg.mxu0
        %2528 = vmatpush.bf16.msra.mxu0 %v2480
        %2529 = vmatpush.bf16.msra.mxu0 %v2476
        %2530 = vmatpush.bf16.msra.mxu0 %v2472
        %2531 = vmatpush.bf16.msra.mxu0 %v2468
        %2532 = vmatpush.bf16.msra.mxu0 %v2464
        %2533 = vmatpush.bf16.msra.mxu0 %v2460
        %2534 = vmatpush.bf16.msra.mxu0 %v2456
        %2535 = vmatpush.bf16.msra.mxu0 %v2452
        %2536 = vmatmul.bf16.gmra.mxu0 %v2315
        %v2537 = vpop.f32.mrf.mxu0
        %v2538 = vadd.f32 0.0, %v2537
        %v2539 = vpop.f32.mrf.mxu0
        %2540 = vdwg.mxu0
        %2541 = vmatpush.bf16.msra.mxu0 %v2481
        %2542 = vmatpush.bf16.msra.mxu0 %v2477
        %2543 = vmatpush.bf16.msra.mxu0 %v2473
        %2544 = vmatpush.bf16.msra.mxu0 %v2469
        %2545 = vmatpush.bf16.msra.mxu0 %v2465
        %2546 = vmatpush.bf16.msra.mxu0 %v2461
        %2547 = vmatpush.bf16.msra.mxu0 %v2457
        %2548 = vmatpush.bf16.msra.mxu0 %v2453
        %2549 = vmatmul.bf16.gmra.mxu0 %v2315
        %v2550 = vpop.f32.mrf.mxu0
        %v2551 = vadd.f32 0.0, %v2550
        %v2552 = vpop.f32.mrf.mxu0
        %2553 = vdwg.mxu0
        %2554 = vmatpush.bf16.msra.mxu0 %v2482
        %2555 = vmatpush.bf16.msra.mxu0 %v2478
        %2556 = vmatpush.bf16.msra.mxu0 %v2474
        %2557 = vmatpush.bf16.msra.mxu0 %v2470
        %2558 = vmatpush.bf16.msra.mxu0 %v2466
        %2559 = vmatpush.bf16.msra.mxu0 %v2462
        %2560 = vmatpush.bf16.msra.mxu0 %v2458
        %2561 = vmatpush.bf16.msra.mxu0 %v2454
        %2562 = vmatmul.bf16.gmra.mxu0 %v2315
        %v2563 = vpop.f32.mrf.mxu0
        %v2564 = vadd.f32 0.0, %v2563
        %v2565 = vpop.f32.mrf.mxu0
        %2566 = vdwg.mxu0
        %v2567 = vadd.f32 %v2319, %v2525
        %v2568 = vadd.f32 %v2320, %v2538
        %v2569 = vadd.f32 %v2321, %v2551
        %v2570 = vadd.f32 %v2322, %v2564
        %v2571 = vmul.f32 %v2567, 0.5
        %v2572 = vmul.f32 %v2568, 0.5
        %v2573 = vmul.f32 %v2569, 0.5
        %v2574 = vtanh.pop %v2571
        %v2575 = vtanh.pop %v2572
        %v2576 = vtanh.pop %v2573
        %v2577 = vadd.f32 %v2574, 1.0
        %v2578 = vadd.f32 %v2575, 1.0
        %v2579 = vadd.f32 %v2576, 1.0
        %v2580 = vmul.f32 %v2577, 0.5
        %v2581 = vmul.f32 %v2578, 0.5
        %v2582 = vmul.f32 %v2579, 0.5
        %v2583 = vtanh.pop %v2570
        %v2584 = vmul.f32 %v2581, %v2312
        %v2585 = vmul.f32 %v2580, %v2583
        %v2586 = vadd.f32 %v2584, %v2585
        %v2587 = vtanh.pop %v2586
        %v2588 = vmul.f32 %v2582, %v2587
        %v2589 = vpack.c.bf16 %v2588, %v2588
        %s2590 = scalar_lea.vmem %s282, 24 [#allocation13]
        %2591 = vst [vmem:[%s2590] sm:$0xf] %v2589
        %s2592 = scalar_lea.vmem [#allocation4], 224
        %v2593 = vld [vmem:[%s2592] sm:$0xff]
        %v2594 = vld [vmem:[%s2592 + $0x8] sm:$0xff]
        %v2595 = vld [vmem:[%s2592 + $0x10] sm:$0xff]
        %v2596 = vld [vmem:[%s2592 + $0x18] sm:$0xff]
        %v2597 = vld [vmem:[#allocation10] sm:$0xff]
        %v2598 = vld [vmem:[#allocation10 + $0x8] sm:$0xff]
        %v2599 = vld [vmem:[#allocation10 + $0x10] sm:$0xff]
        %v2600 = vld [vmem:[#allocation10 + $0x18] sm:$0xff]
        %v2601 = vld [vmem:[#allocation10 + $0x20] sm:$0xff]
        %v2602 = vld [vmem:[#allocation10 + $0x28] sm:$0xff]
        %v2603 = vld [vmem:[#allocation10 + $0x30] sm:$0xff]
        %v2604 = vld [vmem:[#allocation10 + $0x38] sm:$0xff]
        %v2605 = vld [vmem:[#allocation10 + $0x40] sm:$0xff]
        %v2606 = vld [vmem:[#allocation10 + $0x48] sm:$0xff]
        %v2607 = vld [vmem:[#allocation10 + $0x50] sm:$0xff]
        %v2608 = vld [vmem:[#allocation10 + $0x58] sm:$0xff]
        %v2609 = vld [vmem:[#allocation10 + $0x60] sm:$0xff]
        %v2610 = vld [vmem:[#allocation10 + $0x68] sm:$0xff]
        %v2611 = vld [vmem:[#allocation10 + $0x70] sm:$0xff]
        %v2612 = vld [vmem:[#allocation10 + $0x78] sm:$0xff]
        %v2613 = vld [vmem:[#allocation10 + $0x80] sm:$0xff]
        %v2614 = vld [vmem:[#allocation10 + $0x88] sm:$0xff]
        %v2615 = vld [vmem:[#allocation10 + $0x90] sm:$0xff]
        %v2616 = vld [vmem:[#allocation10 + $0x98] sm:$0xff]
        %v2617 = vld [vmem:[#allocation10 + $0xa0] sm:$0xff]
        %v2618 = vld [vmem:[#allocation10 + $0xa8] sm:$0xff]
        %v2619 = vld [vmem:[#allocation10 + $0xb0] sm:$0xff]
        %v2620 = vld [vmem:[#allocation10 + $0xb8] sm:$0xff]
        %v2621 = vld [vmem:[#allocation10 + $0xc0] sm:$0xff]
        %v2622 = vld [vmem:[#allocation10 + $0xc8] sm:$0xff]
        %v2623 = vld [vmem:[#allocation10 + $0xd0] sm:$0xff]
        %v2624 = vld [vmem:[#allocation10 + $0xd8] sm:$0xff]
        %v2625 = vld [vmem:[#allocation10 + $0xe0] sm:$0xff]
        %v2626 = vld [vmem:[#allocation10 + $0xe8] sm:$0xff]
        %v2627 = vld [vmem:[#allocation10 + $0xf0] sm:$0xff]
        %v2628 = vld [vmem:[#allocation10 + $0xf8] sm:$0xff]
        %v2661 = vunpack.c.l.b16 %v2597
        %v2662 = vunpack.c.h.b16 %v2597
        %v2663 = vunpack.c.l.b16 %v2598
        %v2664 = vunpack.c.h.b16 %v2598
        %v2665 = vunpack.c.l.b16 %v2599
        %v2666 = vunpack.c.h.b16 %v2599
        %v2667 = vunpack.c.l.b16 %v2600
        %v2668 = vunpack.c.h.b16 %v2600
        %v2669 = vunpack.c.l.b16 %v2601
        %v2670 = vunpack.c.h.b16 %v2601
        %v2671 = vunpack.c.l.b16 %v2602
        %v2672 = vunpack.c.h.b16 %v2602
        %v2673 = vunpack.c.l.b16 %v2603
        %v2674 = vunpack.c.h.b16 %v2603
        %v2675 = vunpack.c.l.b16 %v2604
        %v2676 = vunpack.c.h.b16 %v2604
        %v2677 = vunpack.c.l.b16 %v2605
        %v2678 = vunpack.c.h.b16 %v2605
        %v2679 = vunpack.c.l.b16 %v2606
        %v2680 = vunpack.c.h.b16 %v2606
        %v2681 = vunpack.c.l.b16 %v2607
        %v2682 = vunpack.c.h.b16 %v2607
        %v2683 = vunpack.c.l.b16 %v2608
        %v2684 = vunpack.c.h.b16 %v2608
        %v2685 = vunpack.c.l.b16 %v2609
        %v2686 = vunpack.c.h.b16 %v2609
        %v2687 = vunpack.c.l.b16 %v2610
        %v2688 = vunpack.c.h.b16 %v2610
        %v2689 = vunpack.c.l.b16 %v2611
        %v2690 = vunpack.c.h.b16 %v2611
        %v2691 = vunpack.c.l.b16 %v2612
        %v2692 = vunpack.c.h.b16 %v2612
        %v2693 = vunpack.c.l.b16 %v2613
        %v2694 = vunpack.c.h.b16 %v2613
        %v2695 = vunpack.c.l.b16 %v2614
        %v2696 = vunpack.c.h.b16 %v2614
        %v2697 = vunpack.c.l.b16 %v2615
        %v2698 = vunpack.c.h.b16 %v2615
        %v2699 = vunpack.c.l.b16 %v2616
        %v2700 = vunpack.c.h.b16 %v2616
        %v2701 = vunpack.c.l.b16 %v2617
        %v2702 = vunpack.c.h.b16 %v2617
        %v2703 = vunpack.c.l.b16 %v2618
        %v2704 = vunpack.c.h.b16 %v2618
        %v2705 = vunpack.c.l.b16 %v2619
        %v2706 = vunpack.c.h.b16 %v2619
        %v2707 = vunpack.c.l.b16 %v2620
        %v2708 = vunpack.c.h.b16 %v2620
        %v2709 = vunpack.c.l.b16 %v2621
        %v2710 = vunpack.c.h.b16 %v2621
        %v2711 = vunpack.c.l.b16 %v2622
        %v2712 = vunpack.c.h.b16 %v2622
        %v2713 = vunpack.c.l.b16 %v2623
        %v2714 = vunpack.c.h.b16 %v2623
        %v2715 = vunpack.c.l.b16 %v2624
        %v2716 = vunpack.c.h.b16 %v2624
        %v2717 = vunpack.c.l.b16 %v2625
        %v2718 = vunpack.c.h.b16 %v2625
        %v2719 = vunpack.c.l.b16 %v2626
        %v2720 = vunpack.c.h.b16 %v2626
        %v2721 = vunpack.c.l.b16 %v2627
        %v2722 = vunpack.c.h.b16 %v2627
        %v2723 = vunpack.c.l.b16 %v2628
        %v2724 = vunpack.c.h.b16 %v2628
        %v2725 = vpack.c.b16 %v2665, %v2661
        %v2726 = vpack.c.b16 %v2666, %v2662
        %v2727 = vpack.c.b16 %v2667, %v2663
        %v2728 = vpack.c.b16 %v2668, %v2664
        %v2729 = vpack.c.b16 %v2673, %v2669
        %v2730 = vpack.c.b16 %v2674, %v2670
        %v2731 = vpack.c.b16 %v2675, %v2671
        %v2732 = vpack.c.b16 %v2676, %v2672
        %v2733 = vpack.c.b16 %v2681, %v2677
        %v2734 = vpack.c.b16 %v2682, %v2678
        %v2735 = vpack.c.b16 %v2683, %v2679
        %v2736 = vpack.c.b16 %v2684, %v2680
        %v2737 = vpack.c.b16 %v2689, %v2685
        %v2738 = vpack.c.b16 %v2690, %v2686
        %v2739 = vpack.c.b16 %v2691, %v2687
        %v2740 = vpack.c.b16 %v2692, %v2688
        %v2741 = vpack.c.b16 %v2697, %v2693
        %v2742 = vpack.c.b16 %v2698, %v2694
        %v2743 = vpack.c.b16 %v2699, %v2695
        %v2744 = vpack.c.b16 %v2700, %v2696
        %v2745 = vpack.c.b16 %v2705, %v2701
        %v2746 = vpack.c.b16 %v2706, %v2702
        %v2747 = vpack.c.b16 %v2707, %v2703
        %v2748 = vpack.c.b16 %v2708, %v2704
        %v2749 = vpack.c.b16 %v2713, %v2709
        %v2750 = vpack.c.b16 %v2714, %v2710
        %v2751 = vpack.c.b16 %v2715, %v2711
        %v2752 = vpack.c.b16 %v2716, %v2712
        %v2753 = vpack.c.b16 %v2721, %v2717
        %v2754 = vpack.c.b16 %v2722, %v2718
        %v2755 = vpack.c.b16 %v2723, %v2719
        %v2756 = vpack.c.b16 %v2724, %v2720
        %2789 = vmatpush.bf16.msra.mxu0 %v2753
        %2790 = vmatpush.bf16.msra.mxu0 %v2749
        %2791 = vmatpush.bf16.msra.mxu0 %v2745
        %2792 = vmatpush.bf16.msra.mxu0 %v2741
        %2793 = vmatpush.bf16.msra.mxu0 %v2737
        %2794 = vmatpush.bf16.msra.mxu0 %v2733
        %2795 = vmatpush.bf16.msra.mxu0 %v2729
        %2796 = vmatpush.bf16.msra.mxu0 %v2725
        %2797 = vmatmul.bf16.gmra.mxu0 %v2589
        %v2798 = vpop.f32.mrf.mxu0
        %v2799 = vadd.f32 0.0, %v2798
        %v2800 = vpop.f32.mrf.mxu0
        %2801 = vdwg.mxu0
        %2802 = vmatpush.bf16.msra.mxu0 %v2754
        %2803 = vmatpush.bf16.msra.mxu0 %v2750
        %2804 = vmatpush.bf16.msra.mxu0 %v2746
        %2805 = vmatpush.bf16.msra.mxu0 %v2742
        %2806 = vmatpush.bf16.msra.mxu0 %v2738
        %2807 = vmatpush.bf16.msra.mxu0 %v2734
        %2808 = vmatpush.bf16.msra.mxu0 %v2730
        %2809 = vmatpush.bf16.msra.mxu0 %v2726
        %2810 = vmatmul.bf16.gmra.mxu0 %v2589
        %v2811 = vpop.f32.mrf.mxu0
        %v2812 = vadd.f32 0.0, %v2811
        %v2813 = vpop.f32.mrf.mxu0
        %2814 = vdwg.mxu0
        %2815 = vmatpush.bf16.msra.mxu0 %v2755
        %2816 = vmatpush.bf16.msra.mxu0 %v2751
        %2817 = vmatpush.bf16.msra.mxu0 %v2747
        %2818 = vmatpush.bf16.msra.mxu0 %v2743
        %2819 = vmatpush.bf16.msra.mxu0 %v2739
        %2820 = vmatpush.bf16.msra.mxu0 %v2735
        %2821 = vmatpush.bf16.msra.mxu0 %v2731
        %2822 = vmatpush.bf16.msra.mxu0 %v2727
        %2823 = vmatmul.bf16.gmra.mxu0 %v2589
        %v2824 = vpop.f32.mrf.mxu0
        %v2825 = vadd.f32 0.0, %v2824
        %v2826 = vpop.f32.mrf.mxu0
        %2827 = vdwg.mxu0
        %2828 = vmatpush.bf16.msra.mxu0 %v2756
        %2829 = vmatpush.bf16.msra.mxu0 %v2752
        %2830 = vmatpush.bf16.msra.mxu0 %v2748
        %2831 = vmatpush.bf16.msra.mxu0 %v2744
        %2832 = vmatpush.bf16.msra.mxu0 %v2740
        %2833 = vmatpush.bf16.msra.mxu0 %v2736
        %2834 = vmatpush.bf16.msra.mxu0 %v2732
        %2835 = vmatpush.bf16.msra.mxu0 %v2728
        %2836 = vmatmul.bf16.gmra.mxu0 %v2589
        %v2837 = vpop.f32.mrf.mxu0
        %v2838 = vadd.f32 0.0, %v2837
        %v2839 = vpop.f32.mrf.mxu0
        %2840 = vdwg.mxu0
        %v2841 = vadd.f32 %v2593, %v2799
        %v2842 = vadd.f32 %v2594, %v2812
        %v2843 = vadd.f32 %v2595, %v2825
        %v2844 = vadd.f32 %v2596, %v2838
        %v2845 = vmul.f32 %v2841, 0.5
        %v2846 = vmul.f32 %v2842, 0.5
        %v2847 = vmul.f32 %v2843, 0.5
        %v2848 = vtanh.pop %v2845
        %v2849 = vtanh.pop %v2846
        %v2850 = vtanh.pop %v2847
        %v2851 = vadd.f32 %v2848, 1.0
        %v2852 = vadd.f32 %v2849, 1.0
        %v2853 = vadd.f32 %v2850, 1.0
        %v2854 = vmul.f32 %v2851, 0.5
        %v2855 = vmul.f32 %v2852, 0.5
        %v2856 = vmul.f32 %v2853, 0.5
        %v2857 = vtanh.pop %v2844
        %v2858 = vmul.f32 %v2855, %v2586
        %v2859 = vmul.f32 %v2854, %v2857
        %v2860 = vadd.f32 %v2858, %v2859
        %v2861 = vtanh.pop %v2860
        %v2862 = vmul.f32 %v2856, %v2861
        %v2863 = vpack.c.bf16 %v2862, %v2862
        %s2864 = scalar_lea.vmem %s282, 28 [#allocation13]
        %2865 = vst [vmem:[%s2864] sm:$0xf] %v2863
        %2866 = vst [vmem:[#allocation2] sm:$0xff] %v2862
        %2867 = vst [vmem:[#allocation3] sm:$0xff] %v2860
        %s2868 = sand.u32 %s136, 1
        %s2869 = scalar_lea.sflag [#allocation7], %s2868
        %s2870 = sand.u32 %s136, 1
        %s2871 = smul.addr %s2870, 32
        %s2872 = scalar_lea.vmem [#allocation13], %s2871
        // Predicated region
        $region57: #{tpu_custom_call.1} parent=35 // pred_check
          %p2873 = pneg %p146
        $region58: #{tpu_custom_call.1} parent=35 // pred_check_branch
          %2875 = sbr.rel (%p2873) target = $region60
        $region59: #{tpu_custom_call.1} parent=35 // pred_region
          %s2876 = smul.u32 8, %s28
          %2878 = vsyncadd %s2869, 0
          %s2879 = sadd.s32 %s27, %s2876
          %s2880 = smul.addr %s2879, 4
          %s2881 = scalar_lea.hbm %s4, %s2880
          %s2882 = sshll.u32 %s2872, 4
          %s2883 = int_to_ptr.vmem [resolvable:$true] %s2882
          %s2884 = sshll.u32 %s2881, 4
          %s2885 = int_to_ptr.hbm [resolvable:$true] %s2884
          %2890 = dma.vmem_to_hbm [thread:$0]  %s2883, 512, %s2885, %s2869, 64, 64, 4
        $region60: #{tpu_custom_call.1} parent=35 // pred_fallthru
          _
      $region36: #{tpu_custom_call.1} parent=5 // pred_fallthru
        _
      %p2891 = scmp.le.s32.totalorder 2, %s18
      // Predicated region
      $region61: #{tpu_custom_call.1} parent=5 // pred_check
        %p2892 = pneg %p2891
      $region62: #{tpu_custom_call.1} parent=5 // pred_check_branch
        %2894 = sbr.rel (%p2892) target = $region64
      $region63: #{tpu_custom_call.1} parent=5 // pred_region
        %s2895 = ssub.s32 %s18, 2
        // Predicated region
        $region65: #{tpu_custom_call.1} parent=63 // pred_check
          %p2896 = pneg %p152
        $region66: #{tpu_custom_call.1} parent=63 // pred_check_branch
          %2898 = sbr.rel (%p2896) target = $region68
        $region67: #{tpu_custom_call.1} parent=63 // pred_region
          %s2899 = sand.u32 %s137, 1
          %s2900 = scalar_lea.sflag [#allocation7], %s2899
          %s2901 = sand.u32 %s137, 1
          %s2902 = smul.addr %s2901, 32
          %s2903 = scalar_lea.vmem [#allocation13], %s2902
          %2905 = dma.done %s2900, 512
        $region68: #{tpu_custom_call.1} parent=63 // pred_fallthru
          _
      $region64: #{tpu_custom_call.1} parent=5 // pred_fallthru
        _
    $region6: #{tpu_custom_call.1} parent=1 // loop_footer
      %s22 = sadd.s32 1, %s18
    $region7: #{tpu_custom_call.1} parent=1 // loop_footer_branch
      %17 = sbr.rel target = $region3
    $region8: #{tpu_custom_call.1} parent=1 // loop_exit
      _
    %2906 = vsyncpa [#allocation6], 1
    %s2907 = scalar_lea.sflag [#allocation6], 1
    %2908 = vsyncpa %s2907, 1
    %2909 = vsyncpa [#allocation9], 1
    %2910 = vsyncpa [#allocation12], 1
    %2911 = vsyncpa [#allocation7], 1
    %s2912 = scalar_lea.sflag [#allocation7], 1
    %2913 = vsyncpa %s2912, 1

</llo_original>
